<compile_context>
chip_gen: v5e
topology: v5e:2x2
jax: 0.10.0
libtpu: 0.0.40
codegen_flags: <defaults>
</compile_context>

<pallas_src>
import functools

import jax
import jax.numpy as jnp
from jax.experimental import pallas as pl
from jax.experimental.pallas import tpu as pltpu

LEAKY = 0.1       # model activation slope (HyperGATConv.act, HGNN mlp)
GAT_LEAKY = 0.2   # GATv2 internal attention leaky-relu slope (PyG default)
LANE = 128
SUB = 8


def _rup(x, m):
    return ((x + m - 1) // m) * m


def _full_spec(shape):
    return pl.BlockSpec(shape, lambda *_: (0,) * len(shape))


# ----------------------------------------------------------------------------
# Fused HyperGATConv kernel (one pallas_call per layer)
# ----------------------------------------------------------------------------
def _conv_kernel(pn_col_ref, pn_row_ref, pe_col_ref, pe_row_ref,
                 node_ref, pin_ref, eattr_ref,
                 wl_n_ref, wl_p_ref, bl_ref, wr_ref, br_ref, att_ref, gbias_ref,
                 swl_ref, swr_n_ref, swr_p_ref, sb_ref,
                 node_out_ref, pin_out_ref,
                 *, n_self, p_chunk, att_slope, act_slope):
    f32, bf16 = jnp.float32, jnp.bfloat16
    P = pin_ref.shape[0]
    N = node_ref.shape[0]
    E = eattr_ref.shape[0]

    pn_col = pn_col_ref[...]          # [P,1] int32 (node index per pin, -1 = pad)
    pn_row = pn_row_ref[...]          # [1,P]
    pe_col = pe_col_ref[...]          # [P,1] int32 (hyperedge index per pin)
    pe_row = pe_row_ref[...]          # [1,P]

    # ---- V2P: gather node feats to pins (in-kernel one-hot -> MXU matmul) ----
    a_pn = (pn_col == jax.lax.broadcasted_iota(jnp.int32, (P, N), 1))
    a_pn = a_pn.astype(f32).astype(bf16)                                   # [P,N]
    node_pin = jnp.dot(a_pn, node_ref[...].astype(bf16),
                       preferred_element_type=f32)                         # [P,Fn]
    np_b = node_pin.astype(bf16)
    pi_b = pin_ref[...].astype(bf16)

    # ---- GATv2 lin_l / lin_r (concat @ W split into block matmuls) ----
    x_l = (jnp.dot(np_b, wl_n_ref[...], preferred_element_type=f32)
           + jnp.dot(pi_b, wl_p_ref[...], preferred_element_type=f32)
           + bl_ref[...])                                                  # [P,H]
    x_r = (jnp.dot(eattr_ref[...].astype(bf16), wr_ref[...],
                   preferred_element_type=f32)
           + br_ref[...])                                                  # [E,H]

    # ---- attention scores, chunked over pins to bound the [E,tp,H] live set ----
    att = att_ref[...]                                                     # [1,H]
    chunks = []
    for s in range(0, P, p_chunk):
        e_ = min(s + p_chunk, P)
        h = x_l[s:e_][None, :, :] + x_r[:, None, :]                        # [E,tp,H]
        h = jnp.where(h > 0, h, att_slope * h)                             # GATv2 lrelu(0.2)
        chunks.append(jnp.sum(h * att[None, :, :], axis=-1))               # [E,tp]
    scores = chunks[0] if len(chunks) == 1 else jnp.concatenate(chunks, axis=-1)

    # ---- masked segment softmax over pins, per hyperedge ----
    iota_e = jax.lax.broadcasted_iota(jnp.int32, (E, P), 0)
    iota_p = jax.lax.broadcasted_iota(jnp.int32, (E, P), 1)
    mask = (pe_row == iota_e) | ((iota_p == iota_e) & (iota_p < n_self))
    scores = jnp.where(mask, scores, jnp.float32(-1e30))
    m = jnp.max(scores, axis=-1, keepdims=True)
    num = jnp.exp(scores - m) * mask.astype(f32)
    denom = jnp.sum(num, axis=-1, keepdims=True)
    # guard empty hyperedges: alpha = 0 -> output = bias (matches PyG empty sum)
    alpha = num * pl.reciprocal(jnp.maximum(denom, jnp.float32(1e-30)), approx=True)

    edge_feat = (jnp.dot(alpha.astype(bf16), x_l.astype(bf16),
                         preferred_element_type=f32)
                 + gbias_ref[...])                                         # [E,H]
    edge_feat = jnp.where(edge_feat > 0, edge_feat, act_slope * edge_feat)

    # ---- SAGE: hyperedges -> pins (mean over single neighbor == one-hot gather) ----
    g_pe = (pe_col == jax.lax.broadcasted_iota(jnp.int32, (P, E), 1))
    g_pe = g_pe.astype(f32).astype(bf16)                                   # [P,E]
    agg = jnp.dot(g_pe, edge_feat.astype(bf16), preferred_element_type=f32)
    pin_new = (jnp.dot(agg.astype(bf16), swl_ref[...], preferred_element_type=f32)
               + jnp.dot(np_b, swr_n_ref[...], preferred_element_type=f32)
               + jnp.dot(pi_b, swr_p_ref[...], preferred_element_type=f32)
               + sb_ref[...])
    pin_new = jnp.where(pin_new > 0, pin_new, act_slope * pin_new)         # [P,H]
    pin_out_ref[...] = pin_new.astype(pin_out_ref.dtype)

    # ---- P2V: scatter_mean pins -> nodes (normalized one-hot matmul) ----
    s_np = (pn_row == jax.lax.broadcasted_iota(jnp.int32, (N, P), 0)).astype(f32)
    cnt = jnp.sum(s_np, axis=-1, keepdims=True)
    s_np = (s_np / jnp.maximum(cnt, 1.0)).astype(bf16)                     # [N,P]
    node_out_ref[...] = jnp.dot(s_np, pin_new.astype(bf16),
                                preferred_element_type=f32).astype(node_out_ref.dtype)


def hypergat_conv(pp, node_feat, pin_feat, edge_attr,
                  pn_col, pn_row, pe_col, pe_row, n_self):
    N = node_feat.shape[0]
    P = pin_feat.shape[0]
    H = pp["bl"].shape[1]
    args = (pn_col, pn_row, pe_col, pe_row, node_feat, pin_feat, edge_attr,
            pp["wl_n"], pp["wl_p"], pp["bl"], pp["wr"], pp["br"],
            pp["att"], pp["gbias"], pp["swl"], pp["swr_n"], pp["swr_p"], pp["sb"])
    kernel = functools.partial(_conv_kernel, n_self=n_self, p_chunk=LANE,
                               att_slope=GAT_LEAKY, act_slope=LEAKY)
    return pl.pallas_call(
        kernel,
        out_shape=(jax.ShapeDtypeStruct((N, H), jnp.float32),
                   jax.ShapeDtypeStruct((P, H), jnp.float32)),
        grid=(1,),
        in_specs=[_full_spec(a.shape) for a in args],
        out_specs=(_full_spec((N, H)), _full_spec((P, H))),
        compiler_params=pltpu.CompilerParams(dimension_semantics=("arbitrary",)),
    )(*args)


# ----------------------------------------------------------------------------
# Fused readout kernel: global_mean_pool (macro + all) + 3-layer MLP
# ----------------------------------------------------------------------------
def _readout_kernel(x_ref, pm_ref, pa_ref,
                    w1a_ref, w1b_ref, b1_ref, w2_ref, b2_ref, w3_ref, b3_ref,
                    o_ref, *, slope):
    f32, bf16 = jnp.float32, jnp.bfloat16
    x = x_ref[...].astype(bf16)
    g_macro = jnp.dot(pm_ref[...], x, preferred_element_type=f32)          # [G,H]
    g_all = jnp.dot(pa_ref[...], x, preferred_element_type=f32)            # [G,H]
    h = (jnp.dot(g_macro.astype(bf16), w1a_ref[...], preferred_element_type=f32)
         + jnp.dot(g_all.astype(bf16), w1b_ref[...], preferred_element_type=f32)
         + b1_ref[...])
    h = jnp.where(h > 0, h, slope * h)
    h = jnp.dot(h.astype(bf16), w2_ref[...], preferred_element_type=f32) + b2_ref[...]
    h = jnp.where(h > 0, h, slope * h)
    out = jnp.dot(h.astype(bf16), w3_ref[...], preferred_element_type=f32) + b3_ref[...]
    o_ref[...] = out.astype(o_ref.dtype)


def readout(x, pool_macro, pool_all, mp):
    Gp = pool_macro.shape[0]
    OUT = mp["w3"].shape[1]
    args = (x, pool_macro, pool_all, mp["w1a"], mp["w1b"], mp["b1"],
            mp["w2"], mp["b2"], mp["w3"], mp["b3"])
    return pl.pallas_call(
        functools.partial(_readout_kernel, slope=LEAKY),
        out_shape=jax.ShapeDtypeStruct((Gp, OUT), jnp.float32),
        grid=(1,),
        in_specs=[_full_spec(a.shape) for a in args],
        out_specs=_full_spec((Gp, OUT)),
        compiler_params=pltpu.CompilerParams(dimension_semantics=("arbitrary",)),
    )(*args)


# ----------------------------------------------------------------------------
# Forward pass
# ----------------------------------------------------------------------------
@functools.partial(jax.jit, static_argnames=("n_self", "skip_cnt"))
def hgnn_forward(params, x, pin_feat, edge_attr,
                 pn_col, pn_row, pe_col, pe_row, pool_macro, pool_all,
                 *, n_self, skip_cnt):
    for i, pp in enumerate(params["convs"]):
        last_x, last_pf = x, pin_feat
        x, pin_feat = hypergat_conv(pp, x, pin_feat, edge_attr,
                                    pn_col, pn_row, pe_col, pe_row, n_self)
        if skip_cnt and i > 0:
            x = x + last_x
            pin_feat = pin_feat + last_pf
    return readout(x, pool_macro, pool_all, params["mlp"])   # [G_pad, OUT_pad]


# ----------------------------------------------------------------------------
# Parameters: logical (PyTorch-shaped) init, then padded/packed kernel params
# ----------------------------------------------------------------------------
def _init(key, shape, scale=0.2):
    return scale * jax.random.normal(key, shape, dtype=jnp.float32)


def make_conv_params(key, in_nch, in_pch, in_ech, nhid, out_ch):
    ks = jax.random.split(key, 9)
    fin = in_nch + in_pch
    return {
        "gat_wl": _init(ks[0], (fin, nhid)), "gat_bl": _init(ks[1], (nhid,)),
        "gat_wr": _init(ks[2], (in_ech, nhid)), "gat_br": _init(ks[3], (nhid,)),
        "gat_att": _init(ks[4], (nhid,)), "gat_bias": _init(ks[5], (nhid,)),
        "sage_wl": _init(ks[6], (nhid, out_ch)), "sage_bl": _init(ks[7], (out_ch,)),
        "sage_wr": _init(ks[8], (fin, out_ch)),
    }


def make_hgnn_params(key, num_node_features, num_pin_features,
                     num_edge_features, nhid, layers):
    ks = jax.random.split(key, layers + 6)
    convs = [make_conv_params(ks[0], num_node_features, num_pin_features,
                              num_edge_features, nhid, nhid)]
    for i in range(layers - 1):
        convs.append(make_conv_params(ks[1 + i], nhid, nhid,
                                      num_edge_features, nhid, nhid))
    return {
        "convs": convs,
        "mlp_w1": _init(ks[layers], (2 * nhid, nhid)),
        "mlp_b1": _init(ks[layers + 1], (nhid,)),
        "mlp_w2": _init(ks[layers + 2], (nhid, nhid)),
        "mlp_b2": _init(ks[layers + 3], (nhid,)),
        "mlp_w3": _init(ks[layers + 4], (nhid, 1)),
        "mlp_b3": _init(ks[layers + 5], (1,)),
    }


def _pad2(w, rows, cols, dtype=jnp.bfloat16):
    r, c = w.shape
    out = jnp.zeros((rows, cols), jnp.float32).at[:r, :c].set(w.astype(jnp.float32))
    return out.astype(dtype)


def pad_hgnn_params(lp, in_nch, in_pch, in_ech, nhid, H_pad):
    convs = []
    for i, cp in enumerate(lp["convs"]):
        if i == 0:
            nch, pch, fn_arr, fp_arr = in_nch, in_pch, in_nch, in_pch
        else:
            nch, pch, fn_arr, fp_arr = nhid, nhid, H_pad, H_pad
        convs.append({
            "wl_n": _pad2(cp["gat_wl"][:nch], fn_arr, H_pad),
            "wl_p": _pad2(cp["gat_wl"][nch:], fp_arr, H_pad),
            "bl": _pad2(cp["gat_bl"][None, :], 1, H_pad, jnp.float32),
            "wr": _pad2(cp["gat_wr"], in_ech, H_pad),
            "br": _pad2(cp["gat_br"][None, :], 1, H_pad, jnp.float32),
            "att": _pad2(cp["gat_att"][None, :], 1, H_pad, jnp.float32),
            "gbias": _pad2(cp["gat_bias"][None, :], 1, H_pad, jnp.float32),
            "swl": _pad2(cp["sage_wl"], H_pad, H_pad),
            "swr_n": _pad2(cp["sage_wr"][:nch], fn_arr, H_pad),
            "swr_p": _pad2(cp["sage_wr"][nch:], fp_arr, H_pad),
            "sb": _pad2(cp["sage_bl"][None, :], 1, H_pad, jnp.float32),
        })
    mlp = {
        "w1a": _pad2(lp["mlp_w1"][:nhid], H_pad, H_pad),
        "w1b": _pad2(lp["mlp_w1"][nhid:], H_pad, H_pad),
        "b1": _pad2(lp["mlp_b1"][None, :], 1, H_pad, jnp.float32),
        "w2": _pad2(lp["mlp_w2"], H_pad, H_pad),
        "b2": _pad2(lp["mlp_b2"][None, :], 1, H_pad, jnp.float32),
        "w3": _pad2(lp["mlp_w3"], H_pad, LANE),
        "b3": _pad2(lp["mlp_b3"][None, :], 1, LANE, jnp.float32),
    }
    return {"convs": convs, "mlp": mlp}


def _pad_rows(x, rows):
    return jnp.zeros((rows, x.shape[1]), x.dtype).at[:x.shape[0]].set(x)


# ----------------------------------------------------------------------------
# Main
# ----------------------------------------------------------------------------
if __name__ == "__main__":
    # synthetic hypergraph: N nodes, P pins, E hyperedges, G graphs in the batch
    N, P, E, G = 12, 24, 8, 2
    num_node_features, num_pin_features, num_edge_features = 6, 2, 1
    nhid, layers, skip_cnt = 16, 2, True

    N_pad, P_pad, E_pad, G_pad = _rup(N, SUB), _rup(P, SUB), _rup(E, SUB), _rup(G, SUB)
    H_pad = _rup(nhid, LANE)

    key = jax.random.PRNGKey(0)
    kx, kp, kw, kpn, kpe, kparam = jax.random.split(key, 6)

    x = jax.random.normal(kx, (N, num_node_features), jnp.float32)          # data.x
    pin_offset = jax.random.normal(kp, (P, num_pin_features), jnp.float32)  # data.pin_offset
    edge_weight = jax.random.normal(kw, (E,), jnp.float32)                  # data.edge_weight
    edge_attr = edge_weight.reshape(-1, 1)                                  # .view(-1, 1)

    # edge_index[0]: node per pin, edge_index[1]: hyperedge per pin
    pin_node = jnp.concatenate(
        [jnp.arange(N), jax.random.randint(kpn, (P - N,), 0, N)]).astype(jnp.int32)
    pin_edge = jnp.concatenate(
        [jnp.arange(E), jax.random.randint(kpe, (P - E,), 0, E)]).astype(jnp.int32)

    batch = jnp.array([0] * (N // 2) + [1] * (N // 2), jnp.int32)           # data.batch
    macro_index = jnp.array([0, 3, 6, 9], jnp.int32)                        # data.macro_index

    # padded activations (zeros in padded rows never pollute real rows)
    x_pad = _pad_rows(x, N_pad)
    pin_pad = _pad_rows(pin_offset, P_pad)
    ea_pad = _pad_rows(edge_attr, E_pad)

    # tiny int32 index vectors (-1 = padded pin); structure matrices are rebuilt
    # in-kernel from these via broadcasted_iota compares
    pn = jnp.full((P_pad,), -1, jnp.int32).at[:P].set(pin_node)
    pe = jnp.full((P_pad,), -1, jnp.int32).at[:P].set(pin_edge)
    pn_col, pn_row = pn.reshape(P_pad, 1), pn.reshape(1, P_pad)
    pe_col, pe_row = pe.reshape(P_pad, 1), pe.reshape(1, P_pad)

    # pooling matrices (global_mean_pool over all nodes / macro nodes), padded
    batch_pad = jnp.full((N_pad,), -1, jnp.int32).at[:N].set(batch)
    sel = (batch_pad[None, :] == jnp.arange(G_pad)[:, None]).astype(jnp.float32)
    pool_all = sel / jnp.maximum(sel.sum(axis=1, keepdims=True), 1.0)
    is_macro = jnp.zeros((N_pad,), jnp.float32).at[macro_index].set(1.0)
    msel = sel * is_macro[None, :]
    pool_macro = msel / jnp.maximum(msel.sum(axis=1, keepdims=True), 1.0)
    pool_all = pool_all.astype(jnp.bfloat16)
    pool_macro = pool_macro.astype(jnp.bfloat16)

    logical = make_hgnn_params(kparam, num_node_features, num_pin_features,
                               num_edge_features, nhid, layers)
    params = pad_hgnn_params(logical, num_node_features, num_pin_features,
                             num_edge_features, nhid, H_pad)

    out_pad = hgnn_forward(params, x_pad, pin_pad, ea_pad,
                           pn_col, pn_row, pe_col, pe_row,
                           pool_macro, pool_all,
                           n_self=min(P, E), skip_cnt=skip_cnt)
    out = out_pad[:G, :1]
    out = jax.block_until_ready(out)
    assert out.shape == (G, 1), out.shape
    assert bool(jnp.all(jnp.isfinite(out)))
    print("KERNEL_OK")
</pallas_src>

<mosaic_0001>
module attributes {stable_mosaic.version = 11 : i64} {
  func.func @_conv_kernel(%arg0: i32, %arg1: memref<24x1xi32, #tpu.memory_space<vmem>>, %arg2: memref<1x24xi32, #tpu.memory_space<vmem>>, %arg3: memref<24x1xi32, #tpu.memory_space<vmem>>, %arg4: memref<1x24xi32, #tpu.memory_space<vmem>>, %arg5: memref<16x128xf32, #tpu.memory_space<vmem>>, %arg6: memref<24x128xf32, #tpu.memory_space<vmem>>, %arg7: memref<8x1xf32, #tpu.memory_space<vmem>>, %arg8: memref<128x128xbf16, #tpu.memory_space<vmem>>, %arg9: memref<128x128xbf16, #tpu.memory_space<vmem>>, %arg10: memref<1x128xf32, #tpu.memory_space<vmem>>, %arg11: memref<1x128xbf16, #tpu.memory_space<vmem>>, %arg12: memref<1x128xf32, #tpu.memory_space<vmem>>, %arg13: memref<1x128xf32, #tpu.memory_space<vmem>>, %arg14: memref<1x128xf32, #tpu.memory_space<vmem>>, %arg15: memref<128x128xbf16, #tpu.memory_space<vmem>>, %arg16: memref<128x128xbf16, #tpu.memory_space<vmem>>, %arg17: memref<128x128xbf16, #tpu.memory_space<vmem>>, %arg18: memref<1x128xf32, #tpu.memory_space<vmem>>, %arg19: memref<16x128xf32, #tpu.memory_space<vmem>>, %arg20: memref<24x128xf32, #tpu.memory_space<vmem>>) attributes {dimension_semantics = [#tpu.dimension_semantics<arbitrary>], iteration_bounds = array<i64: 1>, scalar_prefetch = 0 : i64, scratch_operands = 0 : i64, tpu.core_type = #tpu.core_type<tc>, window_params = [{pipeline_mode = #tpu.pipeline_mode<synchronous>, transform_indices = @transform_0, window_bounds = array<i64: 24, 1>}, {pipeline_mode = #tpu.pipeline_mode<synchronous>, transform_indices = @transform_1, window_bounds = array<i64: 1, 24>}, {pipeline_mode = #tpu.pipeline_mode<synchronous>, transform_indices = @transform_2, window_bounds = array<i64: 24, 1>}, {pipeline_mode = #tpu.pipeline_mode<synchronous>, transform_indices = @transform_3, window_bounds = array<i64: 1, 24>}, {pipeline_mode = #tpu.pipeline_mode<synchronous>, transform_indices = @transform_4, window_bounds = array<i64: 16, 128>}, {pipeline_mode = #tpu.pipeline_mode<synchronous>, transform_indices = @transform_5, window_bounds = array<i64: 24, 128>}, {pipeline_mode = #tpu.pipeline_mode<synchronous>, transform_indices = @transform_6, window_bounds = array<i64: 8, 1>}, {pipeline_mode = #tpu.pipeline_mode<synchronous>, transform_indices = @transform_7, window_bounds = array<i64: 128, 128>}, {pipeline_mode = #tpu.pipeline_mode<synchronous>, transform_indices = @transform_8, window_bounds = array<i64: 128, 128>}, {pipeline_mode = #tpu.pipeline_mode<synchronous>, transform_indices = @transform_9, window_bounds = array<i64: 1, 128>}, {pipeline_mode = #tpu.pipeline_mode<synchronous>, transform_indices = @transform_10, window_bounds = array<i64: 1, 128>}, {pipeline_mode = #tpu.pipeline_mode<synchronous>, transform_indices = @transform_11, window_bounds = array<i64: 1, 128>}, {pipeline_mode = #tpu.pipeline_mode<synchronous>, transform_indices = @transform_12, window_bounds = array<i64: 1, 128>}, {pipeline_mode = #tpu.pipeline_mode<synchronous>, transform_indices = @transform_13, window_bounds = array<i64: 1, 128>}, {pipeline_mode = #tpu.pipeline_mode<synchronous>, transform_indices = @transform_14, window_bounds = array<i64: 128, 128>}, {pipeline_mode = #tpu.pipeline_mode<synchronous>, transform_indices = @transform_15, window_bounds = array<i64: 128, 128>}, {pipeline_mode = #tpu.pipeline_mode<synchronous>, transform_indices = @transform_16, window_bounds = array<i64: 128, 128>}, {pipeline_mode = #tpu.pipeline_mode<synchronous>, transform_indices = @transform_17, window_bounds = array<i64: 1, 128>}, {pipeline_mode = #tpu.pipeline_mode<synchronous>, transform_indices = @transform_18, window_bounds = array<i64: 16, 128>}, {pipeline_mode = #tpu.pipeline_mode<synchronous>, transform_indices = @transform_19, window_bounds = array<i64: 24, 128>}]} {
    %c0 = arith.constant 0 : index
    %c0_0 = arith.constant 0 : index
    %0 = vector.load %arg1[%c0, %c0_0] : memref<24x1xi32, #tpu.memory_space<vmem>>, vector<24x1xi32>
    %c0_1 = arith.constant 0 : index
    %c0_2 = arith.constant 0 : index
    %1 = vector.load %arg2[%c0_1, %c0_2] : memref<1x24xi32, #tpu.memory_space<vmem>>, vector<1x24xi32>
    %c0_3 = arith.constant 0 : index
    %c0_4 = arith.constant 0 : index
    %2 = vector.load %arg3[%c0_3, %c0_4] : memref<24x1xi32, #tpu.memory_space<vmem>>, vector<24x1xi32>
    %c0_5 = arith.constant 0 : index
    %c0_6 = arith.constant 0 : index
    %3 = vector.load %arg4[%c0_5, %c0_6] : memref<1x24xi32, #tpu.memory_space<vmem>>, vector<1x24xi32>
    %4 = tpu.iota {dimensions = array<i32: 1>} : vector<24x16xi32>
    %5 = vector.broadcast %0 : vector<24x1xi32> to vector<24x16xi32>
    %6 = arith.cmpi eq, %5, %4 : vector<24x16xi32>
    %7 = arith.extui %6 : vector<24x16xi1> to vector<24x16xi32>
    %8 = arith.sitofp %7 : vector<24x16xi32> to vector<24x16xf32>
    %9 = arith.truncf %8 : vector<24x16xf32> to vector<24x16xbf16>
    %c0_7 = arith.constant 0 : index
    %c0_8 = arith.constant 0 : index
    %10 = vector.load %arg5[%c0_7, %c0_8] : memref<16x128xf32, #tpu.memory_space<vmem>>, vector<16x128xf32>
    %11 = arith.truncf %10 : vector<16x128xf32> to vector<16x128xbf16>
    %cst = arith.constant dense<0.000000e+00> : vector<24x128xf32>
    %12 = tpu.matmul %9, %11, %cst {dimension_numbers = #tpu.dot_dimension_numbers<[1], [0], [0], [1], [0, 0, 1, 1], [], []>} : vector<24x16xbf16>, vector<16x128xbf16>, vector<24x128xf32> -> vector<24x128xf32>
    %13 = arith.truncf %12 : vector<24x128xf32> to vector<24x128xbf16>
    %c0_9 = arith.constant 0 : index
    %c0_10 = arith.constant 0 : index
    %14 = vector.load %arg6[%c0_9, %c0_10] : memref<24x128xf32, #tpu.memory_space<vmem>>, vector<24x128xf32>
    %15 = arith.truncf %14 : vector<24x128xf32> to vector<24x128xbf16>
    %c0_11 = arith.constant 0 : index
    %c0_12 = arith.constant 0 : index
    %16 = vector.load %arg8[%c0_11, %c0_12] : memref<128x128xbf16, #tpu.memory_space<vmem>>, vector<128x128xbf16>
    %cst_13 = arith.constant dense<0.000000e+00> : vector<24x128xf32>
    %17 = tpu.matmul %13, %16, %cst_13 {dimension_numbers = #tpu.dot_dimension_numbers<[1], [0], [0], [1], [0, 0, 1, 1], [], []>} : vector<24x128xbf16>, vector<128x128xbf16>, vector<24x128xf32> -> vector<24x128xf32>
    %c0_14 = arith.constant 0 : index
    %c0_15 = arith.constant 0 : index
    %18 = vector.load %arg9[%c0_14, %c0_15] : memref<128x128xbf16, #tpu.memory_space<vmem>>, vector<128x128xbf16>
    %cst_16 = arith.constant dense<0.000000e+00> : vector<24x128xf32>
    %19 = tpu.matmul %15, %18, %cst_16 {dimension_numbers = #tpu.dot_dimension_numbers<[1], [0], [0], [1], [0, 0, 1, 1], [], []>} : vector<24x128xbf16>, vector<128x128xbf16>, vector<24x128xf32> -> vector<24x128xf32>
    %20 = arith.addf %17, %19 : vector<24x128xf32>
    %c0_17 = arith.constant 0 : index
    %c0_18 = arith.constant 0 : index
    %21 = vector.load %arg10[%c0_17, %c0_18] : memref<1x128xf32, #tpu.memory_space<vmem>>, vector<1x128xf32>
    %22 = vector.broadcast %21 : vector<1x128xf32> to vector<24x128xf32>
    %23 = arith.addf %20, %22 : vector<24x128xf32>
    %c0_19 = arith.constant 0 : index
    %c0_20 = arith.constant 0 : index
    %24 = vector.load %arg7[%c0_19, %c0_20] : memref<8x1xf32, #tpu.memory_space<vmem>>, vector<8x1xf32>
    %25 = arith.truncf %24 : vector<8x1xf32> to vector<8x1xbf16>
    %c0_21 = arith.constant 0 : index
    %c0_22 = arith.constant 0 : index
    %26 = vector.load %arg11[%c0_21, %c0_22] : memref<1x128xbf16, #tpu.memory_space<vmem>>, vector<1x128xbf16>
    %cst_23 = arith.constant dense<0.000000e+00> : vector<8x128xf32>
    %27 = tpu.matmul %25, %26, %cst_23 {dimension_numbers = #tpu.dot_dimension_numbers<[1], [0], [0], [1], [0, 0, 1, 1], [], []>} : vector<8x1xbf16>, vector<1x128xbf16>, vector<8x128xf32> -> vector<8x128xf32>
    %c0_24 = arith.constant 0 : index
    %c0_25 = arith.constant 0 : index
    %28 = vector.load %arg12[%c0_24, %c0_25] : memref<1x128xf32, #tpu.memory_space<vmem>>, vector<1x128xf32>
    %29 = vector.broadcast %28 : vector<1x128xf32> to vector<8x128xf32>
    %30 = arith.addf %27, %29 : vector<8x128xf32>
    %c0_26 = arith.constant 0 : index
    %c0_27 = arith.constant 0 : index
    %31 = vector.load %arg13[%c0_26, %c0_27] : memref<1x128xf32, #tpu.memory_space<vmem>>, vector<1x128xf32>
    %32 = vector.shape_cast %23 : vector<24x128xf32> to vector<1x24x128xf32>
    %33 = vector.shape_cast %30 : vector<8x128xf32> to vector<8x1x128xf32>
    %34 = vector.broadcast %32 : vector<1x24x128xf32> to vector<8x24x128xf32>
    %35 = vector.broadcast %33 : vector<8x1x128xf32> to vector<8x24x128xf32>
    %36 = arith.addf %34, %35 : vector<8x24x128xf32>
    %cst_28 = arith.constant 0.000000e+00 : f32
    %37 = vector.broadcast %cst_28 : f32 to vector<8x24x128xf32>
    %38 = arith.cmpf ogt, %36, %37 : vector<8x24x128xf32>
    %cst_29 = arith.constant 2.000000e-01 : f32
    %39 = vector.broadcast %cst_29 : f32 to vector<8x24x128xf32>
    %40 = arith.mulf %39, %36 : vector<8x24x128xf32>
    %41 = arith.select %38, %36, %40 : vector<8x24x128xi1>, vector<8x24x128xf32>
    %42 = vector.shape_cast %31 : vector<1x128xf32> to vector<1x1x128xf32>
    %43 = vector.broadcast %42 : vector<1x1x128xf32> to vector<8x24x128xf32>
    %44 = arith.mulf %41, %43 : vector<8x24x128xf32>
    %cst_30 = arith.constant dense<0.000000e+00> : vector<8x24xf32>
    %45 = vector.multi_reduction <add>, %44, %cst_30 [2] : vector<8x24x128xf32> to vector<8x24xf32>
    %46 = tpu.iota {dimensions = array<i32: 0>} : vector<8x24xi32>
    %47 = tpu.iota {dimensions = array<i32: 1>} : vector<8x24xi32>
    %48 = vector.broadcast %3 : vector<1x24xi32> to vector<8x24xi32>
    %49 = arith.cmpi eq, %48, %46 : vector<8x24xi32>
    %50 = arith.cmpi eq, %47, %46 : vector<8x24xi32>
    %c8_i32 = arith.constant 8 : i32
    %51 = vector.broadcast %c8_i32 : i32 to vector<8x24xi32>
    %52 = arith.cmpi slt, %47, %51 : vector<8x24xi32>
    %53 = arith.andi %50, %52 : vector<8x24xi1>
    %54 = arith.ori %49, %53 : vector<8x24xi1>
    %cst_31 = arith.constant -1.000000e+30 : f32
    %55 = vector.broadcast %cst_31 : f32 to vector<8x24xf32>
    %56 = arith.select %54, %45, %55 : vector<8x24xi1>, vector<8x24xf32>
    %cst_32 = arith.constant dense<0xFF800000> : vector<8xf32>
    %57 = vector.multi_reduction <maximumf>, %56, %cst_32 [1] : vector<8x24xf32> to vector<8xf32>
    %58 = vector.shape_cast %57 : vector<8xf32> to vector<8x1xf32>
    %59 = vector.broadcast %58 : vector<8x1xf32> to vector<8x24xf32>
    %60 = arith.subf %56, %59 : vector<8x24xf32>
    %61 = math.exp %60 : vector<8x24xf32>
    %62 = arith.extui %54 : vector<8x24xi1> to vector<8x24xi32>
    %63 = arith.sitofp %62 : vector<8x24xi32> to vector<8x24xf32>
    %64 = arith.mulf %61, %63 : vector<8x24xf32>
    %cst_33 = arith.constant dense<0.000000e+00> : vector<8xf32>
    %65 = vector.multi_reduction <add>, %64, %cst_33 [1] : vector<8x24xf32> to vector<8xf32>
    %66 = vector.shape_cast %65 : vector<8xf32> to vector<8x1xf32>
    %cst_34 = arith.constant 1.000000e-30 : f32
    %67 = vector.broadcast %cst_34 : f32 to vector<8x1xf32>
    %68 = arith.maximumf %66, %67 : vector<8x1xf32>
    %69 = tpu.reciprocal %68 {approx = true} : vector<8x1xf32> -> vector<8x1xf32>
    %70 = vector.broadcast %69 : vector<8x1xf32> to vector<8x24xf32>
    %71 = arith.mulf %64, %70 : vector<8x24xf32>
    %72 = arith.truncf %71 : vector<8x24xf32> to vector<8x24xbf16>
    %73 = arith.truncf %23 : vector<24x128xf32> to vector<24x128xbf16>
    %cst_35 = arith.constant dense<0.000000e+00> : vector<8x128xf32>
    %74 = tpu.matmul %72, %73, %cst_35 {dimension_numbers = #tpu.dot_dimension_numbers<[1], [0], [0], [1], [0, 0, 1, 1], [], []>} : vector<8x24xbf16>, vector<24x128xbf16>, vector<8x128xf32> -> vector<8x128xf32>
    %c0_36 = arith.constant 0 : index
    %c0_37 = arith.constant 0 : index
    %75 = vector.load %arg14[%c0_36, %c0_37] : memref<1x128xf32, #tpu.memory_space<vmem>>, vector<1x128xf32>
    %76 = vector.broadcast %75 : vector<1x128xf32> to vector<8x128xf32>
    %77 = arith.addf %74, %76 : vector<8x128xf32>
    %cst_38 = arith.constant 0.000000e+00 : f32
    %78 = vector.broadcast %cst_38 : f32 to vector<8x128xf32>
    %79 = arith.cmpf ogt, %77, %78 : vector<8x128xf32>
    %cst_39 = arith.constant 1.000000e-01 : f32
    %80 = vector.broadcast %cst_39 : f32 to vector<8x128xf32>
    %81 = arith.mulf %80, %77 : vector<8x128xf32>
    %82 = arith.select %79, %77, %81 : vector<8x128xi1>, vector<8x128xf32>
    %83 = tpu.iota {dimensions = array<i32: 1>} : vector<24x8xi32>
    %84 = vector.broadcast %2 : vector<24x1xi32> to vector<24x8xi32>
    %85 = arith.cmpi eq, %84, %83 : vector<24x8xi32>
    %86 = arith.extui %85 : vector<24x8xi1> to vector<24x8xi32>
    %87 = arith.sitofp %86 : vector<24x8xi32> to vector<24x8xf32>
    %88 = arith.truncf %87 : vector<24x8xf32> to vector<24x8xbf16>
    %89 = arith.truncf %82 : vector<8x128xf32> to vector<8x128xbf16>
    %cst_40 = arith.constant dense<0.000000e+00> : vector<24x128xf32>
    %90 = tpu.matmul %88, %89, %cst_40 {dimension_numbers = #tpu.dot_dimension_numbers<[1], [0], [0], [1], [0, 0, 1, 1], [], []>} : vector<24x8xbf16>, vector<8x128xbf16>, vector<24x128xf32> -> vector<24x128xf32>
    %91 = arith.truncf %90 : vector<24x128xf32> to vector<24x128xbf16>
    %c0_41 = arith.constant 0 : index
    %c0_42 = arith.constant 0 : index
    %92 = vector.load %arg15[%c0_41, %c0_42] : memref<128x128xbf16, #tpu.memory_space<vmem>>, vector<128x128xbf16>
    %cst_43 = arith.constant dense<0.000000e+00> : vector<24x128xf32>
    %93 = tpu.matmul %91, %92, %cst_43 {dimension_numbers = #tpu.dot_dimension_numbers<[1], [0], [0], [1], [0, 0, 1, 1], [], []>} : vector<24x128xbf16>, vector<128x128xbf16>, vector<24x128xf32> -> vector<24x128xf32>
    %c0_44 = arith.constant 0 : index
    %c0_45 = arith.constant 0 : index
    %94 = vector.load %arg16[%c0_44, %c0_45] : memref<128x128xbf16, #tpu.memory_space<vmem>>, vector<128x128xbf16>
    %cst_46 = arith.constant dense<0.000000e+00> : vector<24x128xf32>
    %95 = tpu.matmul %13, %94, %cst_46 {dimension_numbers = #tpu.dot_dimension_numbers<[1], [0], [0], [1], [0, 0, 1, 1], [], []>} : vector<24x128xbf16>, vector<128x128xbf16>, vector<24x128xf32> -> vector<24x128xf32>
    %96 = arith.addf %93, %95 : vector<24x128xf32>
    %c0_47 = arith.constant 0 : index
    %c0_48 = arith.constant 0 : index
    %97 = vector.load %arg17[%c0_47, %c0_48] : memref<128x128xbf16, #tpu.memory_space<vmem>>, vector<128x128xbf16>
    %cst_49 = arith.constant dense<0.000000e+00> : vector<24x128xf32>
    %98 = tpu.matmul %15, %97, %cst_49 {dimension_numbers = #tpu.dot_dimension_numbers<[1], [0], [0], [1], [0, 0, 1, 1], [], []>} : vector<24x128xbf16>, vector<128x128xbf16>, vector<24x128xf32> -> vector<24x128xf32>
    %99 = arith.addf %96, %98 : vector<24x128xf32>
    %c0_50 = arith.constant 0 : index
    %c0_51 = arith.constant 0 : index
    %100 = vector.load %arg18[%c0_50, %c0_51] : memref<1x128xf32, #tpu.memory_space<vmem>>, vector<1x128xf32>
    %101 = vector.broadcast %100 : vector<1x128xf32> to vector<24x128xf32>
    %102 = arith.addf %99, %101 : vector<24x128xf32>
    %cst_52 = arith.constant 0.000000e+00 : f32
    %103 = vector.broadcast %cst_52 : f32 to vector<24x128xf32>
    %104 = arith.cmpf ogt, %102, %103 : vector<24x128xf32>
    %cst_53 = arith.constant 1.000000e-01 : f32
    %105 = vector.broadcast %cst_53 : f32 to vector<24x128xf32>
    %106 = arith.mulf %105, %102 : vector<24x128xf32>
    %107 = arith.select %104, %102, %106 : vector<24x128xi1>, vector<24x128xf32>
    %c0_54 = arith.constant 0 : index
    %c0_55 = arith.constant 0 : index
    %108 = vector.load %arg20[%c0_54, %c0_55] : memref<24x128xf32, #tpu.memory_space<vmem>>, vector<24x128xf32>
    tpu.vector_store %arg20[%c0_54, %c0_55], %107 {strides = array<i32>} : memref<24x128xf32, #tpu.memory_space<vmem>>, vector<24x128xf32>,
    %109 = tpu.iota {dimensions = array<i32: 0>} : vector<16x24xi32>
    %110 = vector.broadcast %1 : vector<1x24xi32> to vector<16x24xi32>
    %111 = arith.cmpi eq, %110, %109 : vector<16x24xi32>
    %112 = arith.extui %111 : vector<16x24xi1> to vector<16x24xi32>
    %113 = arith.sitofp %112 : vector<16x24xi32> to vector<16x24xf32>
    %cst_56 = arith.constant dense<0.000000e+00> : vector<16xf32>
    %114 = vector.multi_reduction <add>, %113, %cst_56 [1] : vector<16x24xf32> to vector<16xf32>
    %115 = vector.shape_cast %114 : vector<16xf32> to vector<16x1xf32>
    %cst_57 = arith.constant 1.000000e+00 : f32
    %116 = vector.broadcast %cst_57 : f32 to vector<16x1xf32>
    %117 = arith.maximumf %115, %116 : vector<16x1xf32>
    %118 = vector.broadcast %117 : vector<16x1xf32> to vector<16x24xf32>
    %119 = arith.divf %113, %118 : vector<16x24xf32>
    %120 = arith.truncf %119 : vector<16x24xf32> to vector<16x24xbf16>
    %121 = arith.truncf %107 : vector<24x128xf32> to vector<24x128xbf16>
    %cst_58 = arith.constant dense<0.000000e+00> : vector<16x128xf32>
    %122 = tpu.matmul %120, %121, %cst_58 {dimension_numbers = #tpu.dot_dimension_numbers<[1], [0], [0], [1], [0, 0, 1, 1], [], []>} : vector<16x24xbf16>, vector<24x128xbf16>, vector<16x128xf32> -> vector<16x128xf32>
    %c0_59 = arith.constant 0 : index
    %c0_60 = arith.constant 0 : index
    %123 = vector.load %arg19[%c0_59, %c0_60] : memref<16x128xf32, #tpu.memory_space<vmem>>, vector<16x128xf32>
    tpu.vector_store %arg19[%c0_59, %c0_60], %122 {strides = array<i32>} : memref<16x128xf32, #tpu.memory_space<vmem>>, vector<16x128xf32>,
    return
  }
  func.func @transform_0(%arg0: i32) -> (i32, i32) {
    %c0_i32 = arith.constant 0 : i32
    %c0_i32_0 = arith.constant 0 : i32
    %c0_i32_1 = arith.constant 0 : i32
    return %c0_i32, %c0_i32_0 : i32, i32
  }
  func.func @transform_1(%arg0: i32) -> (i32, i32) {
    %c0_i32 = arith.constant 0 : i32
    %c0_i32_0 = arith.constant 0 : i32
    %c0_i32_1 = arith.constant 0 : i32
    return %c0_i32, %c0_i32_0 : i32, i32
  }
  func.func @transform_2(%arg0: i32) -> (i32, i32) {
    %c0_i32 = arith.constant 0 : i32
    %c0_i32_0 = arith.constant 0 : i32
    %c0_i32_1 = arith.constant 0 : i32
    return %c0_i32, %c0_i32_0 : i32, i32
  }
  func.func @transform_3(%arg0: i32) -> (i32, i32) {
    %c0_i32 = arith.constant 0 : i32
    %c0_i32_0 = arith.constant 0 : i32
    %c0_i32_1 = arith.constant 0 : i32
    return %c0_i32, %c0_i32_0 : i32, i32
  }
  func.func @transform_4(%arg0: i32) -> (i32, i32) {
    %c0_i32 = arith.constant 0 : i32
    %c0_i32_0 = arith.constant 0 : i32
    %c0_i32_1 = arith.constant 0 : i32
    return %c0_i32, %c0_i32_0 : i32, i32
  }
  func.func @transform_5(%arg0: i32) -> (i32, i32) {
    %c0_i32 = arith.constant 0 : i32
    %c0_i32_0 = arith.constant 0 : i32
    %c0_i32_1 = arith.constant 0 : i32
    return %c0_i32, %c0_i32_0 : i32, i32
  }
  func.func @transform_6(%arg0: i32) -> (i32, i32) {
    %c0_i32 = arith.constant 0 : i32
    %c0_i32_0 = arith.constant 0 : i32
    %c0_i32_1 = arith.constant 0 : i32
    return %c0_i32, %c0_i32_0 : i32, i32
  }
  func.func @transform_7(%arg0: i32) -> (i32, i32) {
    %c0_i32 = arith.constant 0 : i32
    %c0_i32_0 = arith.constant 0 : i32
    %c0_i32_1 = arith.constant 0 : i32
    return %c0_i32, %c0_i32_0 : i32, i32
  }
  func.func @transform_8(%arg0: i32) -> (i32, i32) {
    %c0_i32 = arith.constant 0 : i32
    %c0_i32_0 = arith.constant 0 : i32
    %c0_i32_1 = arith.constant 0 : i32
    return %c0_i32, %c0_i32_0 : i32, i32
  }
  func.func @transform_9(%arg0: i32) -> (i32, i32) {
    %c0_i32 = arith.constant 0 : i32
    %c0_i32_0 = arith.constant 0 : i32
    %c0_i32_1 = arith.constant 0 : i32
    return %c0_i32, %c0_i32_0 : i32, i32
  }
  func.func @transform_10(%arg0: i32) -> (i32, i32) {
    %c0_i32 = arith.constant 0 : i32
    %c0_i32_0 = arith.constant 0 : i32
    %c0_i32_1 = arith.constant 0 : i32
    return %c0_i32, %c0_i32_0 : i32, i32
  }
  func.func @transform_11(%arg0: i32) -> (i32, i32) {
    %c0_i32 = arith.constant 0 : i32
    %c0_i32_0 = arith.constant 0 : i32
    %c0_i32_1 = arith.constant 0 : i32
    return %c0_i32, %c0_i32_0 : i32, i32
  }
  func.func @transform_12(%arg0: i32) -> (i32, i32) {
    %c0_i32 = arith.constant 0 : i32
    %c0_i32_0 = arith.constant 0 : i32
    %c0_i32_1 = arith.constant 0 : i32
    return %c0_i32, %c0_i32_0 : i32, i32
  }
  func.func @transform_13(%arg0: i32) -> (i32, i32) {
    %c0_i32 = arith.constant 0 : i32
    %c0_i32_0 = arith.constant 0 : i32
    %c0_i32_1 = arith.constant 0 : i32
    return %c0_i32, %c0_i32_0 : i32, i32
  }
  func.func @transform_14(%arg0: i32) -> (i32, i32) {
    %c0_i32 = arith.constant 0 : i32
    %c0_i32_0 = arith.constant 0 : i32
    %c0_i32_1 = arith.constant 0 : i32
    return %c0_i32, %c0_i32_0 : i32, i32
  }
  func.func @transform_15(%arg0: i32) -> (i32, i32) {
    %c0_i32 = arith.constant 0 : i32
    %c0_i32_0 = arith.constant 0 : i32
    %c0_i32_1 = arith.constant 0 : i32
    return %c0_i32, %c0_i32_0 : i32, i32
  }
  func.func @transform_16(%arg0: i32) -> (i32, i32) {
    %c0_i32 = arith.constant 0 : i32
    %c0_i32_0 = arith.constant 0 : i32
    %c0_i32_1 = arith.constant 0 : i32
    return %c0_i32, %c0_i32_0 : i32, i32
  }
  func.func @transform_17(%arg0: i32) -> (i32, i32) {
    %c0_i32 = arith.constant 0 : i32
    %c0_i32_0 = arith.constant 0 : i32
    %c0_i32_1 = arith.constant 0 : i32
    return %c0_i32, %c0_i32_0 : i32, i32
  }
  func.func @transform_18(%arg0: i32) -> (i32, i32) {
    %c0_i32 = arith.constant 0 : i32
    %c0_i32_0 = arith.constant 0 : i32
    %c0_i32_1 = arith.constant 0 : i32
    return %c0_i32, %c0_i32_0 : i32, i32
  }
  func.func @transform_19(%arg0: i32) -> (i32, i32) {
    %c0_i32 = arith.constant 0 : i32
    %c0_i32_0 = arith.constant 0 : i32
    %c0_i32_1 = arith.constant 0 : i32
    return %c0_i32, %c0_i32_0 : i32, i32
  }
}

module attributes {stable_mosaic.version = 11 : i64} {
  func.func @_readout_kernel(%arg0: i32, %arg1: memref<16x128xf32, #tpu.memory_space<vmem>>, %arg2: memref<8x16xbf16, #tpu.memory_space<vmem>>, %arg3: memref<8x16xbf16, #tpu.memory_space<vmem>>, %arg4: memref<128x128xbf16, #tpu.memory_space<vmem>>, %arg5: memref<128x128xbf16, #tpu.memory_space<vmem>>, %arg6: memref<1x128xf32, #tpu.memory_space<vmem>>, %arg7: memref<128x128xbf16, #tpu.memory_space<vmem>>, %arg8: memref<1x128xf32, #tpu.memory_space<vmem>>, %arg9: memref<128x128xbf16, #tpu.memory_space<vmem>>, %arg10: memref<1x128xf32, #tpu.memory_space<vmem>>, %arg11: memref<8x128xf32, #tpu.memory_space<vmem>>) attributes {dimension_semantics = [#tpu.dimension_semantics<arbitrary>], iteration_bounds = array<i64: 1>, scalar_prefetch = 0 : i64, scratch_operands = 0 : i64, tpu.core_type = #tpu.core_type<tc>, window_params = [{pipeline_mode = #tpu.pipeline_mode<synchronous>, transform_indices = @transform_0, window_bounds = array<i64: 16, 128>}, {pipeline_mode = #tpu.pipeline_mode<synchronous>, transform_indices = @transform_1, window_bounds = array<i64: 8, 16>}, {pipeline_mode = #tpu.pipeline_mode<synchronous>, transform_indices = @transform_2, window_bounds = array<i64: 8, 16>}, {pipeline_mode = #tpu.pipeline_mode<synchronous>, transform_indices = @transform_3, window_bounds = array<i64: 128, 128>}, {pipeline_mode = #tpu.pipeline_mode<synchronous>, transform_indices = @transform_4, window_bounds = array<i64: 128, 128>}, {pipeline_mode = #tpu.pipeline_mode<synchronous>, transform_indices = @transform_5, window_bounds = array<i64: 1, 128>}, {pipeline_mode = #tpu.pipeline_mode<synchronous>, transform_indices = @transform_6, window_bounds = array<i64: 128, 128>}, {pipeline_mode = #tpu.pipeline_mode<synchronous>, transform_indices = @transform_7, window_bounds = array<i64: 1, 128>}, {pipeline_mode = #tpu.pipeline_mode<synchronous>, transform_indices = @transform_8, window_bounds = array<i64: 128, 128>}, {pipeline_mode = #tpu.pipeline_mode<synchronous>, transform_indices = @transform_9, window_bounds = array<i64: 1, 128>}, {pipeline_mode = #tpu.pipeline_mode<synchronous>, transform_indices = @transform_10, window_bounds = array<i64: 8, 128>}]} {
    %c0 = arith.constant 0 : index
    %c0_0 = arith.constant 0 : index
    %0 = vector.load %arg1[%c0, %c0_0] : memref<16x128xf32, #tpu.memory_space<vmem>>, vector<16x128xf32>
    %1 = arith.truncf %0 : vector<16x128xf32> to vector<16x128xbf16>
    %c0_1 = arith.constant 0 : index
    %c0_2 = arith.constant 0 : index
    %2 = vector.load %arg2[%c0_1, %c0_2] : memref<8x16xbf16, #tpu.memory_space<vmem>>, vector<8x16xbf16>
    %cst = arith.constant dense<0.000000e+00> : vector<8x128xf32>
    %3 = tpu.matmul %2, %1, %cst {dimension_numbers = #tpu.dot_dimension_numbers<[1], [0], [0], [1], [0, 0, 1, 1], [], []>} : vector<8x16xbf16>, vector<16x128xbf16>, vector<8x128xf32> -> vector<8x128xf32>
    %c0_3 = arith.constant 0 : index
    %c0_4 = arith.constant 0 : index
    %4 = vector.load %arg3[%c0_3, %c0_4] : memref<8x16xbf16, #tpu.memory_space<vmem>>, vector<8x16xbf16>
    %cst_5 = arith.constant dense<0.000000e+00> : vector<8x128xf32>
    %5 = tpu.matmul %4, %1, %cst_5 {dimension_numbers = #tpu.dot_dimension_numbers<[1], [0], [0], [1], [0, 0, 1, 1], [], []>} : vector<8x16xbf16>, vector<16x128xbf16>, vector<8x128xf32> -> vector<8x128xf32>
    %6 = arith.truncf %3 : vector<8x128xf32> to vector<8x128xbf16>
    %c0_6 = arith.constant 0 : index
    %c0_7 = arith.constant 0 : index
    %7 = vector.load %arg4[%c0_6, %c0_7] : memref<128x128xbf16, #tpu.memory_space<vmem>>, vector<128x128xbf16>
    %cst_8 = arith.constant dense<0.000000e+00> : vector<8x128xf32>
    %8 = tpu.matmul %6, %7, %cst_8 {dimension_numbers = #tpu.dot_dimension_numbers<[1], [0], [0], [1], [0, 0, 1, 1], [], []>} : vector<8x128xbf16>, vector<128x128xbf16>, vector<8x128xf32> -> vector<8x128xf32>
    %9 = arith.truncf %5 : vector<8x128xf32> to vector<8x128xbf16>
    %c0_9 = arith.constant 0 : index
    %c0_10 = arith.constant 0 : index
    %10 = vector.load %arg5[%c0_9, %c0_10] : memref<128x128xbf16, #tpu.memory_space<vmem>>, vector<128x128xbf16>
    %cst_11 = arith.constant dense<0.000000e+00> : vector<8x128xf32>
    %11 = tpu.matmul %9, %10, %cst_11 {dimension_numbers = #tpu.dot_dimension_numbers<[1], [0], [0], [1], [0, 0, 1, 1], [], []>} : vector<8x128xbf16>, vector<128x128xbf16>, vector<8x128xf32> -> vector<8x128xf32>
    %12 = arith.addf %8, %11 : vector<8x128xf32>
    %c0_12 = arith.constant 0 : index
    %c0_13 = arith.constant 0 : index
    %13 = vector.load %arg6[%c0_12, %c0_13] : memref<1x128xf32, #tpu.memory_space<vmem>>, vector<1x128xf32>
    %14 = vector.broadcast %13 : vector<1x128xf32> to vector<8x128xf32>
    %15 = arith.addf %12, %14 : vector<8x128xf32>
    %cst_14 = arith.constant 0.000000e+00 : f32
    %16 = vector.broadcast %cst_14 : f32 to vector<8x128xf32>
    %17 = arith.cmpf ogt, %15, %16 : vector<8x128xf32>
    %cst_15 = arith.constant 1.000000e-01 : f32
    %18 = vector.broadcast %cst_15 : f32 to vector<8x128xf32>
    %19 = arith.mulf %18, %15 : vector<8x128xf32>
    %20 = arith.select %17, %15, %19 : vector<8x128xi1>, vector<8x128xf32>
    %21 = arith.truncf %20 : vector<8x128xf32> to vector<8x128xbf16>
    %c0_16 = arith.constant 0 : index
    %c0_17 = arith.constant 0 : index
    %22 = vector.load %arg7[%c0_16, %c0_17] : memref<128x128xbf16, #tpu.memory_space<vmem>>, vector<128x128xbf16>
    %cst_18 = arith.constant dense<0.000000e+00> : vector<8x128xf32>
    %23 = tpu.matmul %21, %22, %cst_18 {dimension_numbers = #tpu.dot_dimension_numbers<[1], [0], [0], [1], [0, 0, 1, 1], [], []>} : vector<8x128xbf16>, vector<128x128xbf16>, vector<8x128xf32> -> vector<8x128xf32>
    %c0_19 = arith.constant 0 : index
    %c0_20 = arith.constant 0 : index
    %24 = vector.load %arg8[%c0_19, %c0_20] : memref<1x128xf32, #tpu.memory_space<vmem>>, vector<1x128xf32>
    %25 = vector.broadcast %24 : vector<1x128xf32> to vector<8x128xf32>
    %26 = arith.addf %23, %25 : vector<8x128xf32>
    %cst_21 = arith.constant 0.000000e+00 : f32
    %27 = vector.broadcast %cst_21 : f32 to vector<8x128xf32>
    %28 = arith.cmpf ogt, %26, %27 : vector<8x128xf32>
    %cst_22 = arith.constant 1.000000e-01 : f32
    %29 = vector.broadcast %cst_22 : f32 to vector<8x128xf32>
    %30 = arith.mulf %29, %26 : vector<8x128xf32>
    %31 = arith.select %28, %26, %30 : vector<8x128xi1>, vector<8x128xf32>
    %32 = arith.truncf %31 : vector<8x128xf32> to vector<8x128xbf16>
    %c0_23 = arith.constant 0 : index
    %c0_24 = arith.constant 0 : index
    %33 = vector.load %arg9[%c0_23, %c0_24] : memref<128x128xbf16, #tpu.memory_space<vmem>>, vector<128x128xbf16>
    %cst_25 = arith.constant dense<0.000000e+00> : vector<8x128xf32>
    %34 = tpu.matmul %32, %33, %cst_25 {dimension_numbers = #tpu.dot_dimension_numbers<[1], [0], [0], [1], [0, 0, 1, 1], [], []>} : vector<8x128xbf16>, vector<128x128xbf16>, vector<8x128xf32> -> vector<8x128xf32>
    %c0_26 = arith.constant 0 : index
    %c0_27 = arith.constant 0 : index
    %35 = vector.load %arg10[%c0_26, %c0_27] : memref<1x128xf32, #tpu.memory_space<vmem>>, vector<1x128xf32>
    %36 = vector.broadcast %35 : vector<1x128xf32> to vector<8x128xf32>
    %37 = arith.addf %34, %36 : vector<8x128xf32>
    %c0_28 = arith.constant 0 : index
    %c0_29 = arith.constant 0 : index
    %38 = vector.load %arg11[%c0_28, %c0_29] : memref<8x128xf32, #tpu.memory_space<vmem>>, vector<8x128xf32>
    tpu.vector_store %arg11[%c0_28, %c0_29], %37 {strides = array<i32>} : memref<8x128xf32, #tpu.memory_space<vmem>>, vector<8x128xf32>,
    return
  }
  func.func @transform_0(%arg0: i32) -> (i32, i32) {
    %c0_i32 = arith.constant 0 : i32
    %c0_i32_0 = arith.constant 0 : i32
    %c0_i32_1 = arith.constant 0 : i32
    return %c0_i32, %c0_i32_0 : i32, i32
  }
  func.func @transform_1(%arg0: i32) -> (i32, i32) {
    %c0_i32 = arith.constant 0 : i32
    %c0_i32_0 = arith.constant 0 : i32
    %c0_i32_1 = arith.constant 0 : i32
    return %c0_i32, %c0_i32_0 : i32, i32
  }
  func.func @transform_2(%arg0: i32) -> (i32, i32) {
    %c0_i32 = arith.constant 0 : i32
    %c0_i32_0 = arith.constant 0 : i32
    %c0_i32_1 = arith.constant 0 : i32
    return %c0_i32, %c0_i32_0 : i32, i32
  }
  func.func @transform_3(%arg0: i32) -> (i32, i32) {
    %c0_i32 = arith.constant 0 : i32
    %c0_i32_0 = arith.constant 0 : i32
    %c0_i32_1 = arith.constant 0 : i32
    return %c0_i32, %c0_i32_0 : i32, i32
  }
  func.func @transform_4(%arg0: i32) -> (i32, i32) {
    %c0_i32 = arith.constant 0 : i32
    %c0_i32_0 = arith.constant 0 : i32
    %c0_i32_1 = arith.constant 0 : i32
    return %c0_i32, %c0_i32_0 : i32, i32
  }
  func.func @transform_5(%arg0: i32) -> (i32, i32) {
    %c0_i32 = arith.constant 0 : i32
    %c0_i32_0 = arith.constant 0 : i32
    %c0_i32_1 = arith.constant 0 : i32
    return %c0_i32, %c0_i32_0 : i32, i32
  }
  func.func @transform_6(%arg0: i32) -> (i32, i32) {
    %c0_i32 = arith.constant 0 : i32
    %c0_i32_0 = arith.constant 0 : i32
    %c0_i32_1 = arith.constant 0 : i32
    return %c0_i32, %c0_i32_0 : i32, i32
  }
  func.func @transform_7(%arg0: i32) -> (i32, i32) {
    %c0_i32 = arith.constant 0 : i32
    %c0_i32_0 = arith.constant 0 : i32
    %c0_i32_1 = arith.constant 0 : i32
    return %c0_i32, %c0_i32_0 : i32, i32
  }
  func.func @transform_8(%arg0: i32) -> (i32, i32) {
    %c0_i32 = arith.constant 0 : i32
    %c0_i32_0 = arith.constant 0 : i32
    %c0_i32_1 = arith.constant 0 : i32
    return %c0_i32, %c0_i32_0 : i32, i32
  }
  func.func @transform_9(%arg0: i32) -> (i32, i32) {
    %c0_i32 = arith.constant 0 : i32
    %c0_i32_0 = arith.constant 0 : i32
    %c0_i32_1 = arith.constant 0 : i32
    return %c0_i32, %c0_i32_0 : i32, i32
  }
  func.func @transform_10(%arg0: i32) -> (i32, i32) {
    %c0_i32 = arith.constant 0 : i32
    %c0_i32_0 = arith.constant 0 : i32
    %c0_i32_1 = arith.constant 0 : i32
    return %c0_i32, %c0_i32_0 : i32, i32
  }
}

module attributes {stable_mosaic.version = 11 : i64} {
  func.func @_conv_kernel(%arg0: i32, %arg1: memref<24x1xi32, #tpu.memory_space<vmem>>, %arg2: memref<1x24xi32, #tpu.memory_space<vmem>>, %arg3: memref<24x1xi32, #tpu.memory_space<vmem>>, %arg4: memref<1x24xi32, #tpu.memory_space<vmem>>, %arg5: memref<16x6xf32, #tpu.memory_space<vmem>>, %arg6: memref<24x2xf32, #tpu.memory_space<vmem>>, %arg7: memref<8x1xf32, #tpu.memory_space<vmem>>, %arg8: memref<6x128xbf16, #tpu.memory_space<vmem>>, %arg9: memref<2x128xbf16, #tpu.memory_space<vmem>>, %arg10: memref<1x128xf32, #tpu.memory_space<vmem>>, %arg11: memref<1x128xbf16, #tpu.memory_space<vmem>>, %arg12: memref<1x128xf32, #tpu.memory_space<vmem>>, %arg13: memref<1x128xf32, #tpu.memory_space<vmem>>, %arg14: memref<1x128xf32, #tpu.memory_space<vmem>>, %arg15: memref<128x128xbf16, #tpu.memory_space<vmem>>, %arg16: memref<6x128xbf16, #tpu.memory_space<vmem>>, %arg17: memref<2x128xbf16, #tpu.memory_space<vmem>>, %arg18: memref<1x128xf32, #tpu.memory_space<vmem>>, %arg19: memref<16x128xf32, #tpu.memory_space<vmem>>, %arg20: memref<24x128xf32, #tpu.memory_space<vmem>>) attributes {dimension_semantics = [#tpu.dimension_semantics<arbitrary>], iteration_bounds = array<i64: 1>, scalar_prefetch = 0 : i64, scratch_operands = 0 : i64, tpu.core_type = #tpu.core_type<tc>, window_params = [{pipeline_mode = #tpu.pipeline_mode<synchronous>, transform_indices = @transform_0, window_bounds = array<i64: 24, 1>}, {pipeline_mode = #tpu.pipeline_mode<synchronous>, transform_indices = @transform_1, window_bounds = array<i64: 1, 24>}, {pipeline_mode = #tpu.pipeline_mode<synchronous>, transform_indices = @transform_2, window_bounds = array<i64: 24, 1>}, {pipeline_mode = #tpu.pipeline_mode<synchronous>, transform_indices = @transform_3, window_bounds = array<i64: 1, 24>}, {pipeline_mode = #tpu.pipeline_mode<synchronous>, transform_indices = @transform_4, window_bounds = array<i64: 16, 6>}, {pipeline_mode = #tpu.pipeline_mode<synchronous>, transform_indices = @transform_5, window_bounds = array<i64: 24, 2>}, {pipeline_mode = #tpu.pipeline_mode<synchronous>, transform_indices = @transform_6, window_bounds = array<i64: 8, 1>}, {pipeline_mode = #tpu.pipeline_mode<synchronous>, transform_indices = @transform_7, window_bounds = array<i64: 6, 128>}, {pipeline_mode = #tpu.pipeline_mode<synchronous>, transform_indices = @transform_8, window_bounds = array<i64: 2, 128>}, {pipeline_mode = #tpu.pipeline_mode<synchronous>, transform_indices = @transform_9, window_bounds = array<i64: 1, 128>}, {pipeline_mode = #tpu.pipeline_mode<synchronous>, transform_indices = @transform_10, window_bounds = array<i64: 1, 128>}, {pipeline_mode = #tpu.pipeline_mode<synchronous>, transform_indices = @transform_11, window_bounds = array<i64: 1, 128>}, {pipeline_mode = #tpu.pipeline_mode<synchronous>, transform_indices = @transform_12, window_bounds = array<i64: 1, 128>}, {pipeline_mode = #tpu.pipeline_mode<synchronous>, transform_indices = @transform_13, window_bounds = array<i64: 1, 128>}, {pipeline_mode = #tpu.pipeline_mode<synchronous>, transform_indices = @transform_14, window_bounds = array<i64: 128, 128>}, {pipeline_mode = #tpu.pipeline_mode<synchronous>, transform_indices = @transform_15, window_bounds = array<i64: 6, 128>}, {pipeline_mode = #tpu.pipeline_mode<synchronous>, transform_indices = @transform_16, window_bounds = array<i64: 2, 128>}, {pipeline_mode = #tpu.pipeline_mode<synchronous>, transform_indices = @transform_17, window_bounds = array<i64: 1, 128>}, {pipeline_mode = #tpu.pipeline_mode<synchronous>, transform_indices = @transform_18, window_bounds = array<i64: 16, 128>}, {pipeline_mode = #tpu.pipeline_mode<synchronous>, transform_indices = @transform_19, window_bounds = array<i64: 24, 128>}]} {
    %c0 = arith.constant 0 : index
    %c0_0 = arith.constant 0 : index
    %0 = vector.load %arg1[%c0, %c0_0] : memref<24x1xi32, #tpu.memory_space<vmem>>, vector<24x1xi32>
    %c0_1 = arith.constant 0 : index
    %c0_2 = arith.constant 0 : index
    %1 = vector.load %arg2[%c0_1, %c0_2] : memref<1x24xi32, #tpu.memory_space<vmem>>, vector<1x24xi32>
    %c0_3 = arith.constant 0 : index
    %c0_4 = arith.constant 0 : index
    %2 = vector.load %arg3[%c0_3, %c0_4] : memref<24x1xi32, #tpu.memory_space<vmem>>, vector<24x1xi32>
    %c0_5 = arith.constant 0 : index
    %c0_6 = arith.constant 0 : index
    %3 = vector.load %arg4[%c0_5, %c0_6] : memref<1x24xi32, #tpu.memory_space<vmem>>, vector<1x24xi32>
    %4 = tpu.iota {dimensions = array<i32: 1>} : vector<24x16xi32>
    %5 = vector.broadcast %0 : vector<24x1xi32> to vector<24x16xi32>
    %6 = arith.cmpi eq, %5, %4 : vector<24x16xi32>
    %7 = arith.extui %6 : vector<24x16xi1> to vector<24x16xi32>
    %8 = arith.sitofp %7 : vector<24x16xi32> to vector<24x16xf32>
    %9 = arith.truncf %8 : vector<24x16xf32> to vector<24x16xbf16>
    %c0_7 = arith.constant 0 : index
    %c0_8 = arith.constant 0 : index
    %10 = vector.load %arg5[%c0_7, %c0_8] : memref<16x6xf32, #tpu.memory_space<vmem>>, vector<16x6xf32>
    %11 = arith.truncf %10 : vector<16x6xf32> to vector<16x6xbf16>
    %cst = arith.constant dense<0.000000e+00> : vector<24x6xf32>
    %12 = tpu.matmul %9, %11, %cst {dimension_numbers = #tpu.dot_dimension_numbers<[1], [0], [0], [1], [0, 0, 1, 1], [], []>} : vector<24x16xbf16>, vector<16x6xbf16>, vector<24x6xf32> -> vector<24x6xf32>
    %13 = arith.truncf %12 : vector<24x6xf32> to vector<24x6xbf16>
    %c0_9 = arith.constant 0 : index
    %c0_10 = arith.constant 0 : index
    %14 = vector.load %arg6[%c0_9, %c0_10] : memref<24x2xf32, #tpu.memory_space<vmem>>, vector<24x2xf32>
    %15 = arith.truncf %14 : vector<24x2xf32> to vector<24x2xbf16>
    %c0_11 = arith.constant 0 : index
    %c0_12 = arith.constant 0 : index
    %16 = vector.load %arg8[%c0_11, %c0_12] : memref<6x128xbf16, #tpu.memory_space<vmem>>, vector<6x128xbf16>
    %cst_13 = arith.constant dense<0.000000e+00> : vector<24x128xf32>
    %17 = tpu.matmul %13, %16, %cst_13 {dimension_numbers = #tpu.dot_dimension_numbers<[1], [0], [0], [1], [0, 0, 1, 1], [], []>} : vector<24x6xbf16>, vector<6x128xbf16>, vector<24x128xf32> -> vector<24x128xf32>
    %c0_14 = arith.constant 0 : index
    %c0_15 = arith.constant 0 : index
    %18 = vector.load %arg9[%c0_14, %c0_15] : memref<2x128xbf16, #tpu.memory_space<vmem>>, vector<2x128xbf16>
    %cst_16 = arith.constant dense<0.000000e+00> : vector<24x128xf32>
    %19 = tpu.matmul %15, %18, %cst_16 {dimension_numbers = #tpu.dot_dimension_numbers<[1], [0], [0], [1], [0, 0, 1, 1], [], []>} : vector<24x2xbf16>, vector<2x128xbf16>, vector<24x128xf32> -> vector<24x128xf32>
    %20 = arith.addf %17, %19 : vector<24x128xf32>
    %c0_17 = arith.constant 0 : index
    %c0_18 = arith.constant 0 : index
    %21 = vector.load %arg10[%c0_17, %c0_18] : memref<1x128xf32, #tpu.memory_space<vmem>>, vector<1x128xf32>
    %22 = vector.broadcast %21 : vector<1x128xf32> to vector<24x128xf32>
    %23 = arith.addf %20, %22 : vector<24x128xf32>
    %c0_19 = arith.constant 0 : index
    %c0_20 = arith.constant 0 : index
    %24 = vector.load %arg7[%c0_19, %c0_20] : memref<8x1xf32, #tpu.memory_space<vmem>>, vector<8x1xf32>
    %25 = arith.truncf %24 : vector<8x1xf32> to vector<8x1xbf16>
    %c0_21 = arith.constant 0 : index
    %c0_22 = arith.constant 0 : index
    %26 = vector.load %arg11[%c0_21, %c0_22] : memref<1x128xbf16, #tpu.memory_space<vmem>>, vector<1x128xbf16>
    %cst_23 = arith.constant dense<0.000000e+00> : vector<8x128xf32>
    %27 = tpu.matmul %25, %26, %cst_23 {dimension_numbers = #tpu.dot_dimension_numbers<[1], [0], [0], [1], [0, 0, 1, 1], [], []>} : vector<8x1xbf16>, vector<1x128xbf16>, vector<8x128xf32> -> vector<8x128xf32>
    %c0_24 = arith.constant 0 : index
    %c0_25 = arith.constant 0 : index
    %28 = vector.load %arg12[%c0_24, %c0_25] : memref<1x128xf32, #tpu.memory_space<vmem>>, vector<1x128xf32>
    %29 = vector.broadcast %28 : vector<1x128xf32> to vector<8x128xf32>
    %30 = arith.addf %27, %29 : vector<8x128xf32>
    %c0_26 = arith.constant 0 : index
    %c0_27 = arith.constant 0 : index
    %31 = vector.load %arg13[%c0_26, %c0_27] : memref<1x128xf32, #tpu.memory_space<vmem>>, vector<1x128xf32>
    %32 = vector.shape_cast %23 : vector<24x128xf32> to vector<1x24x128xf32>
    %33 = vector.shape_cast %30 : vector<8x128xf32> to vector<8x1x128xf32>
    %34 = vector.broadcast %32 : vector<1x24x128xf32> to vector<8x24x128xf32>
    %35 = vector.broadcast %33 : vector<8x1x128xf32> to vector<8x24x128xf32>
    %36 = arith.addf %34, %35 : vector<8x24x128xf32>
    %cst_28 = arith.constant 0.000000e+00 : f32
    %37 = vector.broadcast %cst_28 : f32 to vector<8x24x128xf32>
    %38 = arith.cmpf ogt, %36, %37 : vector<8x24x128xf32>
    %cst_29 = arith.constant 2.000000e-01 : f32
    %39 = vector.broadcast %cst_29 : f32 to vector<8x24x128xf32>
    %40 = arith.mulf %39, %36 : vector<8x24x128xf32>
    %41 = arith.select %38, %36, %40 : vector<8x24x128xi1>, vector<8x24x128xf32>
    %42 = vector.shape_cast %31 : vector<1x128xf32> to vector<1x1x128xf32>
    %43 = vector.broadcast %42 : vector<1x1x128xf32> to vector<8x24x128xf32>
    %44 = arith.mulf %41, %43 : vector<8x24x128xf32>
    %cst_30 = arith.constant dense<0.000000e+00> : vector<8x24xf32>
    %45 = vector.multi_reduction <add>, %44, %cst_30 [2] : vector<8x24x128xf32> to vector<8x24xf32>
    %46 = tpu.iota {dimensions = array<i32: 0>} : vector<8x24xi32>
    %47 = tpu.iota {dimensions = array<i32: 1>} : vector<8x24xi32>
    %48 = vector.broadcast %3 : vector<1x24xi32> to vector<8x24xi32>
    %49 = arith.cmpi eq, %48, %46 : vector<8x24xi32>
    %50 = arith.cmpi eq, %47, %46 : vector<8x24xi32>
    %c8_i32 = arith.constant 8 : i32
    %51 = vector.broadcast %c8_i32 : i32 to vector<8x24xi32>
    %52 = arith.cmpi slt, %47, %51 : vector<8x24xi32>
    %53 = arith.andi %50, %52 : vector<8x24xi1>
    %54 = arith.ori %49, %53 : vector<8x24xi1>
    %cst_31 = arith.constant -1.000000e+30 : f32
    %55 = vector.broadcast %cst_31 : f32 to vector<8x24xf32>
    %56 = arith.select %54, %45, %55 : vector<8x24xi1>, vector<8x24xf32>
    %cst_32 = arith.constant dense<0xFF800000> : vector<8xf32>
    %57 = vector.multi_reduction <maximumf>, %56, %cst_32 [1] : vector<8x24xf32> to vector<8xf32>
    %58 = vector.shape_cast %57 : vector<8xf32> to vector<8x1xf32>
    %59 = vector.broadcast %58 : vector<8x1xf32> to vector<8x24xf32>
    %60 = arith.subf %56, %59 : vector<8x24xf32>
    %61 = math.exp %60 : vector<8x24xf32>
    %62 = arith.extui %54 : vector<8x24xi1> to vector<8x24xi32>
    %63 = arith.sitofp %62 : vector<8x24xi32> to vector<8x24xf32>
    %64 = arith.mulf %61, %63 : vector<8x24xf32>
    %cst_33 = arith.constant dense<0.000000e+00> : vector<8xf32>
    %65 = vector.multi_reduction <add>, %64, %cst_33 [1] : vector<8x24xf32> to vector<8xf32>
    %66 = vector.shape_cast %65 : vector<8xf32> to vector<8x1xf32>
    %cst_34 = arith.constant 1.000000e-30 : f32
    %67 = vector.broadcast %cst_34 : f32 to vector<8x1xf32>
    %68 = arith.maximumf %66, %67 : vector<8x1xf32>
    %69 = tpu.reciprocal %68 {approx = true} : vector<8x1xf32> -> vector<8x1xf32>
    %70 = vector.broadcast %69 : vector<8x1xf32> to vector<8x24xf32>
    %71 = arith.mulf %64, %70 : vector<8x24xf32>
    %72 = arith.truncf %71 : vector<8x24xf32> to vector<8x24xbf16>
    %73 = arith.truncf %23 : vector<24x128xf32> to vector<24x128xbf16>
    %cst_35 = arith.constant dense<0.000000e+00> : vector<8x128xf32>
    %74 = tpu.matmul %72, %73, %cst_35 {dimension_numbers = #tpu.dot_dimension_numbers<[1], [0], [0], [1], [0, 0, 1, 1], [], []>} : vector<8x24xbf16>, vector<24x128xbf16>, vector<8x128xf32> -> vector<8x128xf32>
    %c0_36 = arith.constant 0 : index
    %c0_37 = arith.constant 0 : index
    %75 = vector.load %arg14[%c0_36, %c0_37] : memref<1x128xf32, #tpu.memory_space<vmem>>, vector<1x128xf32>
    %76 = vector.broadcast %75 : vector<1x128xf32> to vector<8x128xf32>
    %77 = arith.addf %74, %76 : vector<8x128xf32>
    %cst_38 = arith.constant 0.000000e+00 : f32
    %78 = vector.broadcast %cst_38 : f32 to vector<8x128xf32>
    %79 = arith.cmpf ogt, %77, %78 : vector<8x128xf32>
    %cst_39 = arith.constant 1.000000e-01 : f32
    %80 = vector.broadcast %cst_39 : f32 to vector<8x128xf32>
    %81 = arith.mulf %80, %77 : vector<8x128xf32>
    %82 = arith.select %79, %77, %81 : vector<8x128xi1>, vector<8x128xf32>
    %83 = tpu.iota {dimensions = array<i32: 1>} : vector<24x8xi32>
    %84 = vector.broadcast %2 : vector<24x1xi32> to vector<24x8xi32>
    %85 = arith.cmpi eq, %84, %83 : vector<24x8xi32>
    %86 = arith.extui %85 : vector<24x8xi1> to vector<24x8xi32>
    %87 = arith.sitofp %86 : vector<24x8xi32> to vector<24x8xf32>
    %88 = arith.truncf %87 : vector<24x8xf32> to vector<24x8xbf16>
    %89 = arith.truncf %82 : vector<8x128xf32> to vector<8x128xbf16>
    %cst_40 = arith.constant dense<0.000000e+00> : vector<24x128xf32>
    %90 = tpu.matmul %88, %89, %cst_40 {dimension_numbers = #tpu.dot_dimension_numbers<[1], [0], [0], [1], [0, 0, 1, 1], [], []>} : vector<24x8xbf16>, vector<8x128xbf16>, vector<24x128xf32> -> vector<24x128xf32>
    %91 = arith.truncf %90 : vector<24x128xf32> to vector<24x128xbf16>
    %c0_41 = arith.constant 0 : index
    %c0_42 = arith.constant 0 : index
    %92 = vector.load %arg15[%c0_41, %c0_42] : memref<128x128xbf16, #tpu.memory_space<vmem>>, vector<128x128xbf16>
    %cst_43 = arith.constant dense<0.000000e+00> : vector<24x128xf32>
    %93 = tpu.matmul %91, %92, %cst_43 {dimension_numbers = #tpu.dot_dimension_numbers<[1], [0], [0], [1], [0, 0, 1, 1], [], []>} : vector<24x128xbf16>, vector<128x128xbf16>, vector<24x128xf32> -> vector<24x128xf32>
    %c0_44 = arith.constant 0 : index
    %c0_45 = arith.constant 0 : index
    %94 = vector.load %arg16[%c0_44, %c0_45] : memref<6x128xbf16, #tpu.memory_space<vmem>>, vector<6x128xbf16>
    %cst_46 = arith.constant dense<0.000000e+00> : vector<24x128xf32>
    %95 = tpu.matmul %13, %94, %cst_46 {dimension_numbers = #tpu.dot_dimension_numbers<[1], [0], [0], [1], [0, 0, 1, 1], [], []>} : vector<24x6xbf16>, vector<6x128xbf16>, vector<24x128xf32> -> vector<24x128xf32>
    %96 = arith.addf %93, %95 : vector<24x128xf32>
    %c0_47 = arith.constant 0 : index
    %c0_48 = arith.constant 0 : index
    %97 = vector.load %arg17[%c0_47, %c0_48] : memref<2x128xbf16, #tpu.memory_space<vmem>>, vector<2x128xbf16>
    %cst_49 = arith.constant dense<0.000000e+00> : vector<24x128xf32>
    %98 = tpu.matmul %15, %97, %cst_49 {dimension_numbers = #tpu.dot_dimension_numbers<[1], [0], [0], [1], [0, 0, 1, 1], [], []>} : vector<24x2xbf16>, vector<2x128xbf16>, vector<24x128xf32> -> vector<24x128xf32>
    %99 = arith.addf %96, %98 : vector<24x128xf32>
    %c0_50 = arith.constant 0 : index
    %c0_51 = arith.constant 0 : index
    %100 = vector.load %arg18[%c0_50, %c0_51] : memref<1x128xf32, #tpu.memory_space<vmem>>, vector<1x128xf32>
    %101 = vector.broadcast %100 : vector<1x128xf32> to vector<24x128xf32>
    %102 = arith.addf %99, %101 : vector<24x128xf32>
    %cst_52 = arith.constant 0.000000e+00 : f32
    %103 = vector.broadcast %cst_52 : f32 to vector<24x128xf32>
    %104 = arith.cmpf ogt, %102, %103 : vector<24x128xf32>
    %cst_53 = arith.constant 1.000000e-01 : f32
    %105 = vector.broadcast %cst_53 : f32 to vector<24x128xf32>
    %106 = arith.mulf %105, %102 : vector<24x128xf32>
    %107 = arith.select %104, %102, %106 : vector<24x128xi1>, vector<24x128xf32>
    %c0_54 = arith.constant 0 : index
    %c0_55 = arith.constant 0 : index
    %108 = vector.load %arg20[%c0_54, %c0_55] : memref<24x128xf32, #tpu.memory_space<vmem>>, vector<24x128xf32>
    tpu.vector_store %arg20[%c0_54, %c0_55], %107 {strides = array<i32>} : memref<24x128xf32, #tpu.memory_space<vmem>>, vector<24x128xf32>,
    %109 = tpu.iota {dimensions = array<i32: 0>} : vector<16x24xi32>
    %110 = vector.broadcast %1 : vector<1x24xi32> to vector<16x24xi32>
    %111 = arith.cmpi eq, %110, %109 : vector<16x24xi32>
    %112 = arith.extui %111 : vector<16x24xi1> to vector<16x24xi32>
    %113 = arith.sitofp %112 : vector<16x24xi32> to vector<16x24xf32>
    %cst_56 = arith.constant dense<0.000000e+00> : vector<16xf32>
    %114 = vector.multi_reduction <add>, %113, %cst_56 [1] : vector<16x24xf32> to vector<16xf32>
    %115 = vector.shape_cast %114 : vector<16xf32> to vector<16x1xf32>
    %cst_57 = arith.constant 1.000000e+00 : f32
    %116 = vector.broadcast %cst_57 : f32 to vector<16x1xf32>
    %117 = arith.maximumf %115, %116 : vector<16x1xf32>
    %118 = vector.broadcast %117 : vector<16x1xf32> to vector<16x24xf32>
    %119 = arith.divf %113, %118 : vector<16x24xf32>
    %120 = arith.truncf %119 : vector<16x24xf32> to vector<16x24xbf16>
    %121 = arith.truncf %107 : vector<24x128xf32> to vector<24x128xbf16>
    %cst_58 = arith.constant dense<0.000000e+00> : vector<16x128xf32>
    %122 = tpu.matmul %120, %121, %cst_58 {dimension_numbers = #tpu.dot_dimension_numbers<[1], [0], [0], [1], [0, 0, 1, 1], [], []>} : vector<16x24xbf16>, vector<24x128xbf16>, vector<16x128xf32> -> vector<16x128xf32>
    %c0_59 = arith.constant 0 : index
    %c0_60 = arith.constant 0 : index
    %123 = vector.load %arg19[%c0_59, %c0_60] : memref<16x128xf32, #tpu.memory_space<vmem>>, vector<16x128xf32>
    tpu.vector_store %arg19[%c0_59, %c0_60], %122 {strides = array<i32>} : memref<16x128xf32, #tpu.memory_space<vmem>>, vector<16x128xf32>,
    return
  }
  func.func @transform_0(%arg0: i32) -> (i32, i32) {
    %c0_i32 = arith.constant 0 : i32
    %c0_i32_0 = arith.constant 0 : i32
    %c0_i32_1 = arith.constant 0 : i32
    return %c0_i32, %c0_i32_0 : i32, i32
  }
  func.func @transform_1(%arg0: i32) -> (i32, i32) {
    %c0_i32 = arith.constant 0 : i32
    %c0_i32_0 = arith.constant 0 : i32
    %c0_i32_1 = arith.constant 0 : i32
    return %c0_i32, %c0_i32_0 : i32, i32
  }
  func.func @transform_2(%arg0: i32) -> (i32, i32) {
    %c0_i32 = arith.constant 0 : i32
    %c0_i32_0 = arith.constant 0 : i32
    %c0_i32_1 = arith.constant 0 : i32
    return %c0_i32, %c0_i32_0 : i32, i32
  }
  func.func @transform_3(%arg0: i32) -> (i32, i32) {
    %c0_i32 = arith.constant 0 : i32
    %c0_i32_0 = arith.constant 0 : i32
    %c0_i32_1 = arith.constant 0 : i32
    return %c0_i32, %c0_i32_0 : i32, i32
  }
  func.func @transform_4(%arg0: i32) -> (i32, i32) {
    %c0_i32 = arith.constant 0 : i32
    %c0_i32_0 = arith.constant 0 : i32
    %c0_i32_1 = arith.constant 0 : i32
    return %c0_i32, %c0_i32_0 : i32, i32
  }
  func.func @transform_5(%arg0: i32) -> (i32, i32) {
    %c0_i32 = arith.constant 0 : i32
    %c0_i32_0 = arith.constant 0 : i32
    %c0_i32_1 = arith.constant 0 : i32
    return %c0_i32, %c0_i32_0 : i32, i32
  }
  func.func @transform_6(%arg0: i32) -> (i32, i32) {
    %c0_i32 = arith.constant 0 : i32
    %c0_i32_0 = arith.constant 0 : i32
    %c0_i32_1 = arith.constant 0 : i32
    return %c0_i32, %c0_i32_0 : i32, i32
  }
  func.func @transform_7(%arg0: i32) -> (i32, i32) {
    %c0_i32 = arith.constant 0 : i32
    %c0_i32_0 = arith.constant 0 : i32
    %c0_i32_1 = arith.constant 0 : i32
    return %c0_i32, %c0_i32_0 : i32, i32
  }
  func.func @transform_8(%arg0: i32) -> (i32, i32) {
    %c0_i32 = arith.constant 0 : i32
    %c0_i32_0 = arith.constant 0 : i32
    %c0_i32_1 = arith.constant 0 : i32
    return %c0_i32, %c0_i32_0 : i32, i32
  }
  func.func @transform_9(%arg0: i32) -> (i32, i32) {
    %c0_i32 = arith.constant 0 : i32
    %c0_i32_0 = arith.constant 0 : i32
    %c0_i32_1 = arith.constant 0 : i32
    return %c0_i32, %c0_i32_0 : i32, i32
  }
  func.func @transform_10(%arg0: i32) -> (i32, i32) {
    %c0_i32 = arith.constant 0 : i32
    %c0_i32_0 = arith.constant 0 : i32
    %c0_i32_1 = arith.constant 0 : i32
    return %c0_i32, %c0_i32_0 : i32, i32
  }
  func.func @transform_11(%arg0: i32) -> (i32, i32) {
    %c0_i32 = arith.constant 0 : i32
    %c0_i32_0 = arith.constant 0 : i32
    %c0_i32_1 = arith.constant 0 : i32
    return %c0_i32, %c0_i32_0 : i32, i32
  }
  func.func @transform_12(%arg0: i32) -> (i32, i32) {
    %c0_i32 = arith.constant 0 : i32
    %c0_i32_0 = arith.constant 0 : i32
    %c0_i32_1 = arith.constant 0 : i32
    return %c0_i32, %c0_i32_0 : i32, i32
  }
  func.func @transform_13(%arg0: i32) -> (i32, i32) {
    %c0_i32 = arith.constant 0 : i32
    %c0_i32_0 = arith.constant 0 : i32
    %c0_i32_1 = arith.constant 0 : i32
    return %c0_i32, %c0_i32_0 : i32, i32
  }
  func.func @transform_14(%arg0: i32) -> (i32, i32) {
    %c0_i32 = arith.constant 0 : i32
    %c0_i32_0 = arith.constant 0 : i32
    %c0_i32_1 = arith.constant 0 : i32
    return %c0_i32, %c0_i32_0 : i32, i32
  }
  func.func @transform_15(%arg0: i32) -> (i32, i32) {
    %c0_i32 = arith.constant 0 : i32
    %c0_i32_0 = arith.constant 0 : i32
    %c0_i32_1 = arith.constant 0 : i32
    return %c0_i32, %c0_i32_0 : i32, i32
  }
  func.func @transform_16(%arg0: i32) -> (i32, i32) {
    %c0_i32 = arith.constant 0 : i32
    %c0_i32_0 = arith.constant 0 : i32
    %c0_i32_1 = arith.constant 0 : i32
    return %c0_i32, %c0_i32_0 : i32, i32
  }
  func.func @transform_17(%arg0: i32) -> (i32, i32) {
    %c0_i32 = arith.constant 0 : i32
    %c0_i32_0 = arith.constant 0 : i32
    %c0_i32_1 = arith.constant 0 : i32
    return %c0_i32, %c0_i32_0 : i32, i32
  }
  func.func @transform_18(%arg0: i32) -> (i32, i32) {
    %c0_i32 = arith.constant 0 : i32
    %c0_i32_0 = arith.constant 0 : i32
    %c0_i32_1 = arith.constant 0 : i32
    return %c0_i32, %c0_i32_0 : i32, i32
  }
  func.func @transform_19(%arg0: i32) -> (i32, i32) {
    %c0_i32 = arith.constant 0 : i32
    %c0_i32_0 = arith.constant 0 : i32
    %c0_i32_1 = arith.constant 0 : i32
    return %c0_i32, %c0_i32_0 : i32, i32
  }
}

</mosaic_0001>

<llo_original>
// kernel: hgnn_forward.5
$region0: #{hgnn_forward.5}
  #allocation0 [shape = 'u32[]', space=smem, size = 0x4, offset = 0x4, fixed_abs, tag = 'smem constant byte address 0x4 - core index']
  #allocation1 [shape = 'u32[72,128]{1,0:T(1,128)}', space=vmem, size = 0x9000, scoped, tag = 'internal scratch']
  %s0 = inlined_call_operand.vmem [shape: f32[16,128], index: 0, kind: input, shape index: {}]
  %s1 = inlined_call_operand.vmem [shape: bf16[8,16], index: 1, kind: input, shape index: {}]
  %s2 = inlined_call_operand.vmem [shape: bf16[8,16], index: 2, kind: input, shape index: {}]
  %s3 = inlined_call_operand.vmem [shape: bf16[128,128], index: 3, kind: input, shape index: {}]
  %s4 = inlined_call_operand.hbm [shape: bf16[128,128], index: 4, kind: input, shape index: {}]
  %s5 = inlined_call_operand.vmem [shape: f32[1,128], index: 5, kind: input, shape index: {}]
  %s6 = inlined_call_operand.hbm [shape: bf16[128,128], index: 6, kind: input, shape index: {}]
  %s7 = inlined_call_operand.vmem [shape: f32[1,128], index: 7, kind: input, shape index: {}]
  %s8 = inlined_call_operand.hbm [shape: bf16[128,128], index: 8, kind: input, shape index: {}]
  %s9 = inlined_call_operand.vmem [shape: f32[1,128], index: 9, kind: input, shape index: {}]
  %s10 = inlined_call_operand.hbm [shape: f32[8,128], index: 10, kind: output, shape index: {}]
  %s11 = sld [smem:[#allocation0]]
  $region62: #{hgnn_forward.5} parent=0
    _
  %s13 = ssub.s32 1, %s11
  %s14 = scalar_select 0, %s13, %s11
  $region1: #{hgnn_forward.5} parent=0
    #allocation2 [shape = 'u8[32768]{0}', space=vmem, size = 0x8000, scoped, tag = 'input window, operand 4, single buffered']
    #allocation3 [shape = 's32[1]{0}', space=sflag, size = 0x4, scoped, tag = 'scoped memory for hgnn_forward.5']
    #allocation4 [shape = 's32[1]{0}', space=sflag, size = 0x4, scoped, tag = 'scoped memory for hgnn_forward.5']
    #allocation5 [shape = 'u8[32768]{0}', space=vmem, size = 0x8000, scoped, tag = 'input window, operand 6, single buffered']
    #allocation6 [shape = 's32[1]{0}', space=sflag, size = 0x4, scoped, tag = 'scoped memory for hgnn_forward.5']
    #allocation7 [shape = 'u8[32768]{0}', space=vmem, size = 0x8000, scoped, tag = 'input window, operand 8, single buffered']
    #allocation8 [shape = 'u8[4096]{0}', space=vmem, size = 0x1000, scoped, tag = 'output window, operand 0, single buffered']
    %15 = vsyncpa [#allocation3], 0
    %16 = vsyncpa [#allocation6], 0
    %17 = vsyncpa [#allocation4], 0
    // Predicated region
    $region2: #{hgnn_forward.5} parent=1 // pred_check
      _
    $region3: #{hgnn_forward.5} parent=1 // pred_check_branch
      %19 = sbr.rel (0) target = $region5
    $region4: #{hgnn_forward.5} parent=1 // pred_region
      _
    $region5: #{hgnn_forward.5} parent=1 // pred_fallthru
      _
    // Predicated region
    $region6: #{hgnn_forward.5} parent=1 // pred_check
      _
    $region7: #{hgnn_forward.5} parent=1 // pred_check_branch
      %21 = sbr.rel (0) target = $region9
    $region8: #{hgnn_forward.5} parent=1 // pred_region
      _
    $region9: #{hgnn_forward.5} parent=1 // pred_fallthru
      _
    // Predicated region
    $region10: #{hgnn_forward.5} parent=1 // pred_check
      _
    $region11: #{hgnn_forward.5} parent=1 // pred_check_branch
      %23 = sbr.rel (0) target = $region13
    $region12: #{hgnn_forward.5} parent=1 // pred_region
      _
    $region13: #{hgnn_forward.5} parent=1 // pred_fallthru
      _
    // Predicated region
    $region14: #{hgnn_forward.5} parent=1 // pred_check
      _
    $region15: #{hgnn_forward.5} parent=1 // pred_check_branch
      %25 = sbr.rel (0) target = $region17
    $region16: #{hgnn_forward.5} parent=1 // pred_region
      _
    $region17: #{hgnn_forward.5} parent=1 // pred_fallthru
      _
    // Predicated region
    $region18: #{hgnn_forward.5} parent=1 // pred_check
      _
    $region19: #{hgnn_forward.5} parent=1 // pred_check_branch
      %27 = sbr.rel (0) target = $region21
    $region20: #{hgnn_forward.5} parent=1 // pred_region
      %29 = vsyncadd [#allocation3], 0
      %s30 = sshll.u32 %s4, 4
      %s31 = int_to_ptr.hbm [resolvable:$true] %s30
      %s32 = sshll.u32 [#allocation2], 4
      %s33 = int_to_ptr.vmem [resolvable:$true] %s32
      %38 = dma.hbm_to_vmem [thread:$0]  %s31, 1024, %s33, [#allocation3], 64, 64, 4
    $region21: #{hgnn_forward.5} parent=1 // pred_fallthru
      _
    // Predicated region
    $region22: #{hgnn_forward.5} parent=1 // pred_check
      _
    $region23: #{hgnn_forward.5} parent=1 // pred_check_branch
      %40 = sbr.rel (0) target = $region25
    $region24: #{hgnn_forward.5} parent=1 // pred_region
      _
    $region25: #{hgnn_forward.5} parent=1 // pred_fallthru
      _
    // Predicated region
    $region26: #{hgnn_forward.5} parent=1 // pred_check
      _
    $region27: #{hgnn_forward.5} parent=1 // pred_check_branch
      %42 = sbr.rel (0) target = $region29
    $region28: #{hgnn_forward.5} parent=1 // pred_region
      %44 = vsyncadd [#allocation6], 0
      %s45 = sshll.u32 %s6, 4
      %s46 = int_to_ptr.hbm [resolvable:$true] %s45
      %s47 = sshll.u32 [#allocation5], 4
      %s48 = int_to_ptr.vmem [resolvable:$true] %s47
      %53 = dma.hbm_to_vmem [thread:$0]  %s46, 1024, %s48, [#allocation6], 64, 64, 4
    $region29: #{hgnn_forward.5} parent=1 // pred_fallthru
      _
    // Predicated region
    $region30: #{hgnn_forward.5} parent=1 // pred_check
      _
    $region31: #{hgnn_forward.5} parent=1 // pred_check_branch
      %55 = sbr.rel (0) target = $region33
    $region32: #{hgnn_forward.5} parent=1 // pred_region
      _
    $region33: #{hgnn_forward.5} parent=1 // pred_fallthru
      _
    // Predicated region
    $region34: #{hgnn_forward.5} parent=1 // pred_check
      _
    $region35: #{hgnn_forward.5} parent=1 // pred_check_branch
      %57 = sbr.rel (0) target = $region37
    $region36: #{hgnn_forward.5} parent=1 // pred_region
      %59 = vsyncadd [#allocation6], 0
      %s60 = sshll.u32 %s8, 4
      %s61 = int_to_ptr.hbm [resolvable:$true] %s60
      %s62 = sshll.u32 [#allocation7], 4
      %s63 = int_to_ptr.vmem [resolvable:$true] %s62
      %68 = dma.hbm_to_vmem [thread:$0]  %s61, 1024, %s63, [#allocation6], 64, 64, 4
    $region37: #{hgnn_forward.5} parent=1 // pred_fallthru
      _
    // Predicated region
    $region38: #{hgnn_forward.5} parent=1 // pred_check
      _
    $region39: #{hgnn_forward.5} parent=1 // pred_check_branch
      %70 = sbr.rel (0) target = $region41
    $region40: #{hgnn_forward.5} parent=1 // pred_region
      _
    $region41: #{hgnn_forward.5} parent=1 // pred_fallthru
      _
    // Predicated region
    $region42: #{hgnn_forward.5} parent=1 // pred_check
      _
    $region43: #{hgnn_forward.5} parent=1 // pred_check_branch
      %72 = sbr.rel (0) target = $region45
    $region44: #{hgnn_forward.5} parent=1 // pred_region
      %74 = dma.done [#allocation3], 1024
    $region45: #{hgnn_forward.5} parent=1 // pred_fallthru
      _
    // Predicated region
    $region46: #{hgnn_forward.5} parent=1 // pred_check
      _
    $region47: #{hgnn_forward.5} parent=1 // pred_check_branch
      %76 = sbr.rel (0) target = $region49
    $region48: #{hgnn_forward.5} parent=1 // pred_region
      %78 = dma.done [#allocation6], 1024
    $region49: #{hgnn_forward.5} parent=1 // pred_fallthru
      _
    // Predicated region
    $region50: #{hgnn_forward.5} parent=1 // pred_check
      _
    $region51: #{hgnn_forward.5} parent=1 // pred_check_branch
      %80 = sbr.rel (0) target = $region53
    $region52: #{hgnn_forward.5} parent=1 // pred_region
      %82 = dma.done [#allocation6], 1024
    $region53: #{hgnn_forward.5} parent=1 // pred_fallthru
      _
    %v84 = vld [vmem:[%s0] sm:$0xff]
    %v85 = vld [vmem:[%s0 + $0x8] sm:$0xff]
    %v86 = vpack.c.bf16 %v85, %v84
    %v87 = vld [vmem:[%s1] sm:$0xf]
    %vm88 = vcmask 130048
    %v90 = vsel %vm88, %v87, 0
    %92 = vmatpush.bf16.msra.mxu0 0
    %93 = vmatpush.bf16.msra.mxu0 0
    %94 = vmatpush.bf16.msra.mxu0 0
    %95 = vmatpush.bf16.msra.mxu0 0
    %96 = vmatpush.bf16.msra.mxu0 0
    %97 = vmatpush.bf16.msra.mxu0 0
    %98 = vmatpush.bf16.msra.mxu0 0
    %99 = vmatpush.bf16.msra.mxu0 %v86
    %100 = vmatmul.bf16.gmra.mxu0 %v90
    %v101 = vpop.f32.mrf.mxu0
    %v102 = vadd.f32 0.0, %v101
    %v103 = vpop.f32.mrf.mxu0
    %104 = vdwg.mxu0
    %v105 = vld [vmem:[%s2] sm:$0xf]
    %v107 = vsel %vm88, %v105, 0
    %109 = vmatpush.bf16.msra.mxu0 0
    %110 = vmatpush.bf16.msra.mxu0 0
    %111 = vmatpush.bf16.msra.mxu0 0
    %112 = vmatpush.bf16.msra.mxu0 0
    %113 = vmatpush.bf16.msra.mxu0 0
    %114 = vmatpush.bf16.msra.mxu0 0
    %115 = vmatpush.bf16.msra.mxu0 0
    %116 = vmatpush.bf16.msra.mxu0 %v86
    %117 = vmatmul.bf16.gmra.mxu0 %v107
    %v118 = vpop.f32.mrf.mxu0
    %v119 = vadd.f32 0.0, %v118
    %v120 = vpop.f32.mrf.mxu0
    %121 = vdwg.mxu0
    %v122 = vpack.c.bf16 %v102, %v102
    %v123 = vld [vmem:[%s3] sm:$0xf]
    %v124 = vld [vmem:[%s3 + $0x4] sm:$0xf]
    %v125 = vld [vmem:[%s3 + $0x8] sm:$0xf]
    %v126 = vld [vmem:[%s3 + $0xc] sm:$0xf]
    %v127 = vld [vmem:[%s3 + $0x10] sm:$0xf]
    %v128 = vld [vmem:[%s3 + $0x14] sm:$0xf]
    %v129 = vld [vmem:[%s3 + $0x18] sm:$0xf]
    %v130 = vld [vmem:[%s3 + $0x1c] sm:$0xf]
    %v131 = vld [vmem:[%s3 + $0x20] sm:$0xf]
    %v132 = vld [vmem:[%s3 + $0x24] sm:$0xf]
    %v133 = vld [vmem:[%s3 + $0x28] sm:$0xf]
    %v134 = vld [vmem:[%s3 + $0x2c] sm:$0xf]
    %v135 = vld [vmem:[%s3 + $0x30] sm:$0xf]
    %v136 = vld [vmem:[%s3 + $0x34] sm:$0xf]
    %v137 = vld [vmem:[%s3 + $0x38] sm:$0xf]
    %v138 = vld [vmem:[%s3 + $0x3c] sm:$0xf]
    %v139 = vpack.c.bf16 %v119, %v119
    %v140 = vld [vmem:[#allocation2] sm:$0xf]
    %v141 = vld [vmem:[#allocation2 + $0x4] sm:$0xf]
    %v142 = vld [vmem:[#allocation2 + $0x8] sm:$0xf]
    %v143 = vld [vmem:[#allocation2 + $0xc] sm:$0xf]
    %v144 = vld [vmem:[#allocation2 + $0x10] sm:$0xf]
    %v145 = vld [vmem:[#allocation2 + $0x14] sm:$0xf]
    %v146 = vld [vmem:[#allocation2 + $0x18] sm:$0xf]
    %v147 = vld [vmem:[#allocation2 + $0x1c] sm:$0xf]
    %v148 = vld [vmem:[#allocation2 + $0x20] sm:$0xf]
    %v149 = vld [vmem:[#allocation2 + $0x24] sm:$0xf]
    %v150 = vld [vmem:[#allocation2 + $0x28] sm:$0xf]
    %v151 = vld [vmem:[#allocation2 + $0x2c] sm:$0xf]
    %v152 = vld [vmem:[#allocation2 + $0x30] sm:$0xf]
    %v153 = vld [vmem:[#allocation2 + $0x34] sm:$0xf]
    %v154 = vld [vmem:[#allocation2 + $0x38] sm:$0xf]
    %v155 = vld [vmem:[#allocation2 + $0x3c] sm:$0xf]
    %v172 = vunpack.c.l.b16 %v140
    %v173 = vunpack.c.l.b16 %v141
    %v174 = vunpack.c.l.b16 %v142
    %v175 = vunpack.c.l.b16 %v143
    %v176 = vunpack.c.l.b16 %v144
    %v177 = vunpack.c.l.b16 %v145
    %v178 = vunpack.c.l.b16 %v146
    %v179 = vunpack.c.l.b16 %v147
    %v180 = vunpack.c.l.b16 %v148
    %v181 = vunpack.c.l.b16 %v149
    %v182 = vunpack.c.l.b16 %v150
    %v183 = vunpack.c.l.b16 %v151
    %v184 = vunpack.c.l.b16 %v152
    %v185 = vunpack.c.l.b16 %v153
    %v186 = vunpack.c.l.b16 %v154
    %v187 = vunpack.c.l.b16 %v155
    %v188 = vpack.c.b16 %v173, %v172
    %v189 = vpack.c.b16 %v175, %v174
    %v190 = vpack.c.b16 %v177, %v176
    %v191 = vpack.c.b16 %v179, %v178
    %v192 = vpack.c.b16 %v181, %v180
    %v193 = vpack.c.b16 %v183, %v182
    %v194 = vpack.c.b16 %v185, %v184
    %v195 = vpack.c.b16 %v187, %v186
    %204 = vmatpush.bf16.msra.mxu0 %v195
    %205 = vmatpush.bf16.msra.mxu0 %v194
    %206 = vmatpush.bf16.msra.mxu0 %v193
    %207 = vmatpush.bf16.msra.mxu0 %v192
    %208 = vmatpush.bf16.msra.mxu0 %v191
    %209 = vmatpush.bf16.msra.mxu0 %v190
    %210 = vmatpush.bf16.msra.mxu0 %v189
    %211 = vmatpush.bf16.msra.mxu0 %v188
    %212 = vmatmul.bf16.gmra.mxu0 %v139
    %v213 = vpop.f32.mrf.mxu0
    %v214 = vadd.f32 0.0, %v213
    %v215 = vpop.f32.mrf.mxu0
    %216 = vdwg.mxu0
    %v233 = vunpack.c.l.b16 %v123
    %v234 = vunpack.c.l.b16 %v124
    %v235 = vunpack.c.l.b16 %v125
    %v236 = vunpack.c.l.b16 %v126
    %v237 = vunpack.c.l.b16 %v127
    %v238 = vunpack.c.l.b16 %v128
    %v239 = vunpack.c.l.b16 %v129
    %v240 = vunpack.c.l.b16 %v130
    %v241 = vunpack.c.l.b16 %v131
    %v242 = vunpack.c.l.b16 %v132
    %v243 = vunpack.c.l.b16 %v133
    %v244 = vunpack.c.l.b16 %v134
    %v245 = vunpack.c.l.b16 %v135
    %v246 = vunpack.c.l.b16 %v136
    %v247 = vunpack.c.l.b16 %v137
    %v248 = vunpack.c.l.b16 %v138
    %v249 = vpack.c.b16 %v234, %v233
    %v250 = vpack.c.b16 %v236, %v235
    %v251 = vpack.c.b16 %v238, %v237
    %v252 = vpack.c.b16 %v240, %v239
    %v253 = vpack.c.b16 %v242, %v241
    %v254 = vpack.c.b16 %v244, %v243
    %v255 = vpack.c.b16 %v246, %v245
    %v256 = vpack.c.b16 %v248, %v247
    %265 = vmatpush.bf16.msra.mxu0 %v256
    %266 = vmatpush.bf16.msra.mxu0 %v255
    %267 = vmatpush.bf16.msra.mxu0 %v254
    %268 = vmatpush.bf16.msra.mxu0 %v253
    %269 = vmatpush.bf16.msra.mxu0 %v252
    %270 = vmatpush.bf16.msra.mxu0 %v251
    %271 = vmatpush.bf16.msra.mxu0 %v250
    %272 = vmatpush.bf16.msra.mxu0 %v249
    %273 = vmatmul.bf16.gmra.mxu0 %v122
    %v274 = vpop.f32.mrf.mxu0
    %v275 = vadd.f32 %v214, %v274
    %v276 = vpop.f32.mrf.mxu0
    %277 = vdwg.mxu0
    %v278 = vld [vmem:[%s5] sm:$0x1]
    %v280 = vperm.slane %v278, 0
    %v282 = vadd.f32 %v275, %v280
    %vm283 = vcmp.gt.f32.partialorder %v282, 0.0
    %v284 = vmul.f32 %v282, 0.1
    %v285 = vsel %vm283, %v282, %v284
    %v286 = vpack.c.bf16 %v285, %v285
    %v287 = vld [vmem:[#allocation5] sm:$0xf]
    %v288 = vld [vmem:[#allocation5 + $0x4] sm:$0xf]
    %v289 = vld [vmem:[#allocation5 + $0x8] sm:$0xf]
    %v290 = vld [vmem:[#allocation5 + $0xc] sm:$0xf]
    %v291 = vld [vmem:[#allocation5 + $0x10] sm:$0xf]
    %v292 = vld [vmem:[#allocation5 + $0x14] sm:$0xf]
    %v293 = vld [vmem:[#allocation5 + $0x18] sm:$0xf]
    %v294 = vld [vmem:[#allocation5 + $0x1c] sm:$0xf]
    %v295 = vld [vmem:[#allocation5 + $0x20] sm:$0xf]
    %v296 = vld [vmem:[#allocation5 + $0x24] sm:$0xf]
    %v297 = vld [vmem:[#allocation5 + $0x28] sm:$0xf]
    %v298 = vld [vmem:[#allocation5 + $0x2c] sm:$0xf]
    %v299 = vld [vmem:[#allocation5 + $0x30] sm:$0xf]
    %v300 = vld [vmem:[#allocation5 + $0x34] sm:$0xf]
    %v301 = vld [vmem:[#allocation5 + $0x38] sm:$0xf]
    %v302 = vld [vmem:[#allocation5 + $0x3c] sm:$0xf]
    %v303 = vld [vmem:[%s7] sm:$0x1]
    %v305 = vperm.slane %v303, 0
    %v323 = vunpack.c.l.b16 %v287
    %v324 = vunpack.c.l.b16 %v288
    %v325 = vunpack.c.l.b16 %v289
    %v326 = vunpack.c.l.b16 %v290
    %v327 = vunpack.c.l.b16 %v291
    %v328 = vunpack.c.l.b16 %v292
    %v329 = vunpack.c.l.b16 %v293
    %v330 = vunpack.c.l.b16 %v294
    %v331 = vunpack.c.l.b16 %v295
    %v332 = vunpack.c.l.b16 %v296
    %v333 = vunpack.c.l.b16 %v297
    %v334 = vunpack.c.l.b16 %v298
    %v335 = vunpack.c.l.b16 %v299
    %v336 = vunpack.c.l.b16 %v300
    %v337 = vunpack.c.l.b16 %v301
    %v338 = vunpack.c.l.b16 %v302
    %v339 = vpack.c.b16 %v324, %v323
    %v340 = vpack.c.b16 %v326, %v325
    %v341 = vpack.c.b16 %v328, %v327
    %v342 = vpack.c.b16 %v330, %v329
    %v343 = vpack.c.b16 %v332, %v331
    %v344 = vpack.c.b16 %v334, %v333
    %v345 = vpack.c.b16 %v336, %v335
    %v346 = vpack.c.b16 %v338, %v337
    %355 = vmatpush.bf16.msra.mxu0 %v346
    %356 = vmatpush.bf16.msra.mxu0 %v345
    %357 = vmatpush.bf16.msra.mxu0 %v344
    %358 = vmatpush.bf16.msra.mxu0 %v343
    %359 = vmatpush.bf16.msra.mxu0 %v342
    %360 = vmatpush.bf16.msra.mxu0 %v341
    %361 = vmatpush.bf16.msra.mxu0 %v340
    %362 = vmatpush.bf16.msra.mxu0 %v339
    %363 = vmatmul.bf16.gmra.mxu0 %v286
    %v364 = vpop.f32.mrf.mxu0
    %v365 = vadd.f32 %v305, %v364
    %v366 = vpop.f32.mrf.mxu0
    %367 = vdwg.mxu0
    %vm368 = vcmp.gt.f32.partialorder %v365, 0.0
    %v369 = vmul.f32 %v365, 0.1
    %v370 = vsel %vm368, %v365, %v369
    %v371 = vpack.c.bf16 %v370, %v370
    %v372 = vld [vmem:[#allocation7] sm:$0xf]
    %v373 = vld [vmem:[#allocation7 + $0x4] sm:$0xf]
    %v374 = vld [vmem:[#allocation7 + $0x8] sm:$0xf]
    %v375 = vld [vmem:[#allocation7 + $0xc] sm:$0xf]
    %v376 = vld [vmem:[#allocation7 + $0x10] sm:$0xf]
    %v377 = vld [vmem:[#allocation7 + $0x14] sm:$0xf]
    %v378 = vld [vmem:[#allocation7 + $0x18] sm:$0xf]
    %v379 = vld [vmem:[#allocation7 + $0x1c] sm:$0xf]
    %v380 = vld [vmem:[#allocation7 + $0x20] sm:$0xf]
    %v381 = vld [vmem:[#allocation7 + $0x24] sm:$0xf]
    %v382 = vld [vmem:[#allocation7 + $0x28] sm:$0xf]
    %v383 = vld [vmem:[#allocation7 + $0x2c] sm:$0xf]
    %v384 = vld [vmem:[#allocation7 + $0x30] sm:$0xf]
    %v385 = vld [vmem:[#allocation7 + $0x34] sm:$0xf]
    %v386 = vld [vmem:[#allocation7 + $0x38] sm:$0xf]
    %v387 = vld [vmem:[#allocation7 + $0x3c] sm:$0xf]
    %v388 = vld [vmem:[%s9] sm:$0x1]
    %v390 = vperm.slane %v388, 0
    %v408 = vunpack.c.l.b16 %v372
    %v409 = vunpack.c.l.b16 %v373
    %v410 = vunpack.c.l.b16 %v374
    %v411 = vunpack.c.l.b16 %v375
    %v412 = vunpack.c.l.b16 %v376
    %v413 = vunpack.c.l.b16 %v377
    %v414 = vunpack.c.l.b16 %v378
    %v415 = vunpack.c.l.b16 %v379
    %v416 = vunpack.c.l.b16 %v380
    %v417 = vunpack.c.l.b16 %v381
    %v418 = vunpack.c.l.b16 %v382
    %v419 = vunpack.c.l.b16 %v383
    %v420 = vunpack.c.l.b16 %v384
    %v421 = vunpack.c.l.b16 %v385
    %v422 = vunpack.c.l.b16 %v386
    %v423 = vunpack.c.l.b16 %v387
    %v424 = vpack.c.b16 %v409, %v408
    %v425 = vpack.c.b16 %v411, %v410
    %v426 = vpack.c.b16 %v413, %v412
    %v427 = vpack.c.b16 %v415, %v414
    %v428 = vpack.c.b16 %v417, %v416
    %v429 = vpack.c.b16 %v419, %v418
    %v430 = vpack.c.b16 %v421, %v420
    %v431 = vpack.c.b16 %v423, %v422
    %440 = vmatpush.bf16.msra.mxu0 %v431
    %441 = vmatpush.bf16.msra.mxu0 %v430
    %442 = vmatpush.bf16.msra.mxu0 %v429
    %443 = vmatpush.bf16.msra.mxu0 %v428
    %444 = vmatpush.bf16.msra.mxu0 %v427
    %445 = vmatpush.bf16.msra.mxu0 %v426
    %446 = vmatpush.bf16.msra.mxu0 %v425
    %447 = vmatpush.bf16.msra.mxu0 %v424
    %448 = vmatmul.bf16.gmra.mxu0 %v371
    %v449 = vpop.f32.mrf.mxu0
    %v450 = vadd.f32 %v390, %v449
    %v451 = vpop.f32.mrf.mxu0
    %452 = vdwg.mxu0
    %453 = vst [vmem:[#allocation8] sm:$0xff] %v450
    // Predicated region
    $region54: #{hgnn_forward.5} parent=1 // pred_check
      _
    $region55: #{hgnn_forward.5} parent=1 // pred_check_branch
      %455 = sbr.rel (0) target = $region57
    $region56: #{hgnn_forward.5} parent=1 // pred_region
      %457 = vsyncadd [#allocation4], 0
      %s459 = sshll.u32 [#allocation8], 4
      %s460 = int_to_ptr.vmem [resolvable:$true] %s459
      %s461 = sshll.u32 %s10, 4
      %s462 = int_to_ptr.hbm [resolvable:$true] %s461
      %464 = dma.vmem_to_hbm [thread:$0]  %s460, 128, %s462, [#allocation4]
    $region57: #{hgnn_forward.5} parent=1 // pred_fallthru
      _
    // Predicated region
    $region58: #{hgnn_forward.5} parent=1 // pred_check
      _
    $region59: #{hgnn_forward.5} parent=1 // pred_check_branch
      %466 = sbr.rel (0) target = $region61
    $region60: #{hgnn_forward.5} parent=1 // pred_region
      %468 = dma.done [#allocation4], 128
    $region61: #{hgnn_forward.5} parent=1 // pred_fallthru
      _
    %469 = vsyncpa [#allocation3], 1
    %470 = vsyncpa [#allocation6], 1
    %471 = vsyncpa [#allocation4], 1

// kernel: hgnn_forward.4
$region0: #{hgnn_forward.4}
  #allocation0 [shape = 'u32[]', space=smem, size = 0x4, offset = 0x4, fixed_abs, tag = 'smem constant byte address 0x4 - core index']
  #allocation1 [shape = 'u32[72,128]{1,0:T(1,128)}', space=vmem, size = 0x9000, scoped, tag = 'internal scratch']
  %s0 = inlined_call_operand.vmem [shape: s32[24,1], index: 0, kind: input, shape index: {}]
  %s1 = inlined_call_operand.vmem [shape: s32[1,24], index: 1, kind: input, shape index: {}]
  %s2 = inlined_call_operand.vmem [shape: s32[24,1], index: 2, kind: input, shape index: {}]
  %s3 = inlined_call_operand.vmem [shape: s32[1,24], index: 3, kind: input, shape index: {}]
  %s4 = inlined_call_operand.vmem [shape: f32[16,128], index: 4, kind: input, shape index: {}]
  %s5 = inlined_call_operand.vmem [shape: f32[24,128], index: 5, kind: input, shape index: {}]
  %s6 = inlined_call_operand.vmem [shape: f32[8,1], index: 6, kind: input, shape index: {}]
  %s7 = inlined_call_operand.hbm [shape: bf16[128,128], index: 7, kind: input, shape index: {}]
  %s8 = inlined_call_operand.hbm [shape: bf16[128,128], index: 8, kind: input, shape index: {}]
  %s9 = inlined_call_operand.vmem [shape: f32[1,128], index: 9, kind: input, shape index: {}]
  %s10 = inlined_call_operand.vmem [shape: bf16[1,128], index: 10, kind: input, shape index: {}]
  %s11 = inlined_call_operand.vmem [shape: f32[1,128], index: 11, kind: input, shape index: {}]
  %s12 = inlined_call_operand.vmem [shape: f32[1,128], index: 12, kind: input, shape index: {}]
  %s13 = inlined_call_operand.vmem [shape: f32[1,128], index: 13, kind: input, shape index: {}]
  %s14 = inlined_call_operand.hbm [shape: bf16[128,128], index: 14, kind: input, shape index: {}]
  %s15 = inlined_call_operand.hbm [shape: bf16[128,128], index: 15, kind: input, shape index: {}]
  %s16 = inlined_call_operand.hbm [shape: bf16[128,128], index: 16, kind: input, shape index: {}]
  %s17 = inlined_call_operand.vmem [shape: f32[1,128], index: 17, kind: input, shape index: {}]
  %s18 = inlined_call_operand.vmem [shape: f32[16,128], index: 18, kind: output, shape index: {0}]
  %s19 = inlined_call_operand.hbm [shape: f32[24,128], index: 19, kind: output, shape index: {1}]
  %20 = xla_tuple %s18, %s19
  %s21 = sld [smem:[#allocation0]]
  $region110: #{hgnn_forward.4} parent=0
    _
  %s23 = ssub.s32 1, %s21
  %s24 = scalar_select 0, %s23, %s21
  $region1: #{hgnn_forward.4} parent=0
    #allocation2 [shape = 'u8[32768]{0}', space=vmem, size = 0x8000, scoped, tag = 'input window, operand 7, single buffered']
    #allocation3 [shape = 's32[1]{0}', space=sflag, size = 0x4, scoped, tag = 'scoped memory for hgnn_forward.4']
    #allocation4 [shape = 's32[1]{0}', space=sflag, size = 0x4, scoped, tag = 'scoped memory for hgnn_forward.4']
    #allocation5 [shape = 'u8[32768]{0}', space=vmem, size = 0x8000, scoped, tag = 'input window, operand 8, single buffered']
    #allocation6 [shape = 's32[1]{0}', space=sflag, size = 0x4, scoped, tag = 'scoped memory for hgnn_forward.4']
    #allocation7 [shape = 'u8[32768]{0}', space=vmem, size = 0x8000, scoped, tag = 'input window, operand 14, single buffered']
    #allocation8 [shape = 'u8[32768]{0}', space=vmem, size = 0x8000, scoped, tag = 'input window, operand 15, single buffered']
    #allocation9 [shape = 's32[1]{0}', space=sflag, size = 0x4, scoped, tag = 'scoped memory for hgnn_forward.4']
    #allocation10 [shape = 'u8[32768]{0}', space=vmem, size = 0x8000, scoped, tag = 'input window, operand 16, single buffered']
    #allocation11 [shape = 'u8[12288]{0}', space=vmem, size = 0x3000, scoped, tag = 'output window, operand 1, single buffered']
    %25 = vsyncpa [#allocation3], 0
    %26 = vsyncpa [#allocation6], 0
    %27 = vsyncpa [#allocation9], 0
    %28 = vsyncpa [#allocation4], 0
    // Predicated region
    $region2: #{hgnn_forward.4} parent=1 // pred_check
      _
    $region3: #{hgnn_forward.4} parent=1 // pred_check_branch
      %30 = sbr.rel (0) target = $region5
    $region4: #{hgnn_forward.4} parent=1 // pred_region
      _
    $region5: #{hgnn_forward.4} parent=1 // pred_fallthru
      _
    // Predicated region
    $region6: #{hgnn_forward.4} parent=1 // pred_check
      _
    $region7: #{hgnn_forward.4} parent=1 // pred_check_branch
      %32 = sbr.rel (0) target = $region9
    $region8: #{hgnn_forward.4} parent=1 // pred_region
      _
    $region9: #{hgnn_forward.4} parent=1 // pred_fallthru
      _
    // Predicated region
    $region10: #{hgnn_forward.4} parent=1 // pred_check
      _
    $region11: #{hgnn_forward.4} parent=1 // pred_check_branch
      %34 = sbr.rel (0) target = $region13
    $region12: #{hgnn_forward.4} parent=1 // pred_region
      _
    $region13: #{hgnn_forward.4} parent=1 // pred_fallthru
      _
    // Predicated region
    $region14: #{hgnn_forward.4} parent=1 // pred_check
      _
    $region15: #{hgnn_forward.4} parent=1 // pred_check_branch
      %36 = sbr.rel (0) target = $region17
    $region16: #{hgnn_forward.4} parent=1 // pred_region
      _
    $region17: #{hgnn_forward.4} parent=1 // pred_fallthru
      _
    // Predicated region
    $region18: #{hgnn_forward.4} parent=1 // pred_check
      _
    $region19: #{hgnn_forward.4} parent=1 // pred_check_branch
      %38 = sbr.rel (0) target = $region21
    $region20: #{hgnn_forward.4} parent=1 // pred_region
      _
    $region21: #{hgnn_forward.4} parent=1 // pred_fallthru
      _
    // Predicated region
    $region22: #{hgnn_forward.4} parent=1 // pred_check
      _
    $region23: #{hgnn_forward.4} parent=1 // pred_check_branch
      %40 = sbr.rel (0) target = $region25
    $region24: #{hgnn_forward.4} parent=1 // pred_region
      _
    $region25: #{hgnn_forward.4} parent=1 // pred_fallthru
      _
    // Predicated region
    $region26: #{hgnn_forward.4} parent=1 // pred_check
      _
    $region27: #{hgnn_forward.4} parent=1 // pred_check_branch
      %42 = sbr.rel (0) target = $region29
    $region28: #{hgnn_forward.4} parent=1 // pred_region
      _
    $region29: #{hgnn_forward.4} parent=1 // pred_fallthru
      _
    // Predicated region
    $region30: #{hgnn_forward.4} parent=1 // pred_check
      _
    $region31: #{hgnn_forward.4} parent=1 // pred_check_branch
      %44 = sbr.rel (0) target = $region33
    $region32: #{hgnn_forward.4} parent=1 // pred_region
      %46 = vsyncadd [#allocation3], 0
      %s47 = sshll.u32 %s7, 4
      %s48 = int_to_ptr.hbm [resolvable:$true] %s47
      %s49 = sshll.u32 [#allocation2], 4
      %s50 = int_to_ptr.vmem [resolvable:$true] %s49
      %55 = dma.hbm_to_vmem [thread:$0]  %s48, 1024, %s50, [#allocation3], 64, 64, 4
    $region33: #{hgnn_forward.4} parent=1 // pred_fallthru
      _
    // Predicated region
    $region34: #{hgnn_forward.4} parent=1 // pred_check
      _
    $region35: #{hgnn_forward.4} parent=1 // pred_check_branch
      %57 = sbr.rel (0) target = $region37
    $region36: #{hgnn_forward.4} parent=1 // pred_region
      %59 = vsyncadd [#allocation6], 0
      %s60 = sshll.u32 %s8, 4
      %s61 = int_to_ptr.hbm [resolvable:$true] %s60
      %s62 = sshll.u32 [#allocation5], 4
      %s63 = int_to_ptr.vmem [resolvable:$true] %s62
      %68 = dma.hbm_to_vmem [thread:$0]  %s61, 1024, %s63, [#allocation6], 64, 64, 4
    $region37: #{hgnn_forward.4} parent=1 // pred_fallthru
      _
    // Predicated region
    $region38: #{hgnn_forward.4} parent=1 // pred_check
      _
    $region39: #{hgnn_forward.4} parent=1 // pred_check_branch
      %70 = sbr.rel (0) target = $region41
    $region40: #{hgnn_forward.4} parent=1 // pred_region
      _
    $region41: #{hgnn_forward.4} parent=1 // pred_fallthru
      _
    // Predicated region
    $region42: #{hgnn_forward.4} parent=1 // pred_check
      _
    $region43: #{hgnn_forward.4} parent=1 // pred_check_branch
      %72 = sbr.rel (0) target = $region45
    $region44: #{hgnn_forward.4} parent=1 // pred_region
      _
    $region45: #{hgnn_forward.4} parent=1 // pred_fallthru
      _
    // Predicated region
    $region46: #{hgnn_forward.4} parent=1 // pred_check
      _
    $region47: #{hgnn_forward.4} parent=1 // pred_check_branch
      %74 = sbr.rel (0) target = $region49
    $region48: #{hgnn_forward.4} parent=1 // pred_region
      _
    $region49: #{hgnn_forward.4} parent=1 // pred_fallthru
      _
    // Predicated region
    $region50: #{hgnn_forward.4} parent=1 // pred_check
      _
    $region51: #{hgnn_forward.4} parent=1 // pred_check_branch
      %76 = sbr.rel (0) target = $region53
    $region52: #{hgnn_forward.4} parent=1 // pred_region
      _
    $region53: #{hgnn_forward.4} parent=1 // pred_fallthru
      _
    // Predicated region
    $region54: #{hgnn_forward.4} parent=1 // pred_check
      _
    $region55: #{hgnn_forward.4} parent=1 // pred_check_branch
      %78 = sbr.rel (0) target = $region57
    $region56: #{hgnn_forward.4} parent=1 // pred_region
      _
    $region57: #{hgnn_forward.4} parent=1 // pred_fallthru
      _
    // Predicated region
    $region58: #{hgnn_forward.4} parent=1 // pred_check
      _
    $region59: #{hgnn_forward.4} parent=1 // pred_check_branch
      %80 = sbr.rel (0) target = $region61
    $region60: #{hgnn_forward.4} parent=1 // pred_region
      %82 = vsyncadd [#allocation6], 0
      %s83 = sshll.u32 %s14, 4
      %s84 = int_to_ptr.hbm [resolvable:$true] %s83
      %s85 = sshll.u32 [#allocation7], 4
      %s86 = int_to_ptr.vmem [resolvable:$true] %s85
      %91 = dma.hbm_to_vmem [thread:$0]  %s84, 1024, %s86, [#allocation6], 64, 64, 4
    $region61: #{hgnn_forward.4} parent=1 // pred_fallthru
      _
    // Predicated region
    $region62: #{hgnn_forward.4} parent=1 // pred_check
      _
    $region63: #{hgnn_forward.4} parent=1 // pred_check_branch
      %93 = sbr.rel (0) target = $region65
    $region64: #{hgnn_forward.4} parent=1 // pred_region
      %95 = vsyncadd [#allocation9], 0
      %s96 = sshll.u32 %s15, 4
      %s97 = int_to_ptr.hbm [resolvable:$true] %s96
      %s98 = sshll.u32 [#allocation8], 4
      %s99 = int_to_ptr.vmem [resolvable:$true] %s98
      %104 = dma.hbm_to_vmem [thread:$0]  %s97, 1024, %s99, [#allocation9], 64, 64, 4
    $region65: #{hgnn_forward.4} parent=1 // pred_fallthru
      _
    // Predicated region
    $region66: #{hgnn_forward.4} parent=1 // pred_check
      _
    $region67: #{hgnn_forward.4} parent=1 // pred_check_branch
      %106 = sbr.rel (0) target = $region69
    $region68: #{hgnn_forward.4} parent=1 // pred_region
      %108 = vsyncadd [#allocation9], 0
      %s109 = sshll.u32 %s16, 4
      %s110 = int_to_ptr.hbm [resolvable:$true] %s109
      %s111 = sshll.u32 [#allocation10], 4
      %s112 = int_to_ptr.vmem [resolvable:$true] %s111
      %117 = dma.hbm_to_vmem [thread:$0]  %s110, 1024, %s112, [#allocation9], 64, 64, 4
    $region69: #{hgnn_forward.4} parent=1 // pred_fallthru
      _
    // Predicated region
    $region70: #{hgnn_forward.4} parent=1 // pred_check
      _
    $region71: #{hgnn_forward.4} parent=1 // pred_check_branch
      %119 = sbr.rel (0) target = $region73
    $region72: #{hgnn_forward.4} parent=1 // pred_region
      _
    $region73: #{hgnn_forward.4} parent=1 // pred_fallthru
      _
    // Predicated region
    $region74: #{hgnn_forward.4} parent=1 // pred_check
      _
    $region75: #{hgnn_forward.4} parent=1 // pred_check_branch
      %121 = sbr.rel (0) target = $region77
    $region76: #{hgnn_forward.4} parent=1 // pred_region
      %123 = dma.done [#allocation3], 1024
    $region77: #{hgnn_forward.4} parent=1 // pred_fallthru
      _
    // Predicated region
    $region78: #{hgnn_forward.4} parent=1 // pred_check
      _
    $region79: #{hgnn_forward.4} parent=1 // pred_check_branch
      %125 = sbr.rel (0) target = $region81
    $region80: #{hgnn_forward.4} parent=1 // pred_region
      %127 = dma.done [#allocation6], 1024
    $region81: #{hgnn_forward.4} parent=1 // pred_fallthru
      _
    // Predicated region
    $region82: #{hgnn_forward.4} parent=1 // pred_check
      _
    $region83: #{hgnn_forward.4} parent=1 // pred_check_branch
      %129 = sbr.rel (0) target = $region85
    $region84: #{hgnn_forward.4} parent=1 // pred_region
      %131 = dma.done [#allocation6], 1024
    $region85: #{hgnn_forward.4} parent=1 // pred_fallthru
      _
    // Predicated region
    $region86: #{hgnn_forward.4} parent=1 // pred_check
      _
    $region87: #{hgnn_forward.4} parent=1 // pred_check_branch
      %133 = sbr.rel (0) target = $region89
    $region88: #{hgnn_forward.4} parent=1 // pred_region
      %135 = dma.done [#allocation9], 1024
    $region89: #{hgnn_forward.4} parent=1 // pred_fallthru
      _
    // Predicated region
    $region90: #{hgnn_forward.4} parent=1 // pred_check
      _
    $region91: #{hgnn_forward.4} parent=1 // pred_check_branch
      %137 = sbr.rel (0) target = $region93
    $region92: #{hgnn_forward.4} parent=1 // pred_region
      %139 = dma.done [#allocation9], 1024
    $region93: #{hgnn_forward.4} parent=1 // pred_fallthru
      _
    %v141 = vld [vmem:[%s0] sm:$0xff]
    %v142 = vld [vmem:[%s0 + $0x8] sm:$0xff]
    %v143 = vld [vmem:[%s0 + $0x10] sm:$0xff]
    %v144 = vld [vmem:[%s1] sm:$0x1]
    %v145 = vld [vmem:[%s2] sm:$0xff]
    %v146 = vld [vmem:[%s2 + $0x8] sm:$0xff]
    %v147 = vld [vmem:[%s2 + $0x10] sm:$0xff]
    %v148 = vld [vmem:[%s3] sm:$0x1]
    %v149 = vlaneseq
    %v150 = vand.u32 %v149, 127
    %151 = vset.pattern.permute.xlu0 0
    %152 = vperm.xlu0 %151, %v141
    %v153 = vpop.permute.xlu0 %152
    %154 = vset.pattern.permute.xlu0 0
    %155 = vperm.xlu0 %154, %v142
    %v156 = vpop.permute.xlu0 %155
    %157 = vset.pattern.permute.xlu0 0
    %158 = vperm.xlu0 %157, %v143
    %v159 = vpop.permute.xlu0 %158
    %vm160 = vcmp.eq.s32.totalorder %v153, %v150
    %vm161 = vcmp.eq.s32.totalorder %v156, %v150
    %vm162 = vcmp.eq.s32.totalorder %v159, %v150
    %v163 = vsel %vm160, 1, 0
    %v164 = vsel %vm161, 1, 0
    %v165 = vsel %vm162, 1, 0
    %v166 = vcvt.s32.f32 %v163
    %v167 = vcvt.s32.f32 %v164
    %v168 = vcvt.s32.f32 %v165
    %v169 = vpack.c.bf16 %v167, %v166
    %v170 = vpack.c.bf16 %v168, %v168
    %v171 = vld [vmem:[%s4] sm:$0xff]
    %v172 = vld [vmem:[%s4 + $0x8] sm:$0xff]
    %v173 = vpack.c.bf16 %v172, %v171
    %vm174 = vcmask 130048
    %v176 = vsel %vm174, %v169, 0
    %v179 = vsel %vm174, %v170, 0
    %181 = vmatpush.bf16.msra.mxu0 0
    %182 = vmatpush.bf16.msra.mxu0 0
    %183 = vmatpush.bf16.msra.mxu0 0
    %184 = vmatpush.bf16.msra.mxu0 0
    %185 = vmatpush.bf16.msra.mxu0 0
    %186 = vmatpush.bf16.msra.mxu0 0
    %187 = vmatpush.bf16.msra.mxu0 0
    %188 = vmatpush.bf16.msra.mxu0 %v173
    %189 = vmatmul.bf16.gmra.mxu0 %v176
    %v190 = vpop.f32.mrf.mxu0
    %v191 = vadd.f32 0.0, %v190
    %v192 = vpop.f32.mrf.mxu0
    %v193 = vadd.f32 0.0, %v192
    %194 = vmatmul.bf16.gmra.mxu0 %v179
    %v195 = vpop.f32.mrf.mxu0
    %v196 = vadd.f32 0.0, %v195
    %v197 = vpop.f32.mrf.mxu0
    %198 = vdwg.mxu0
    %v199 = vpack.c.bf16 %v193, %v191
    %v200 = vpack.c.bf16 %v196, %v196
    %v201 = vld [vmem:[%s5] sm:$0xff]
    %v202 = vld [vmem:[%s5 + $0x8] sm:$0xff]
    %v203 = vld [vmem:[%s5 + $0x10] sm:$0xff]
    %v204 = vpack.c.bf16 %v202, %v201
    %v205 = vpack.c.bf16 %v203, %v203
    %v206 = vld [vmem:[#allocation2] sm:$0xf]
    %v207 = vld [vmem:[#allocation2 + $0x4] sm:$0xf]
    %v208 = vld [vmem:[#allocation2 + $0x8] sm:$0xf]
    %v209 = vld [vmem:[#allocation2 + $0xc] sm:$0xf]
    %v210 = vld [vmem:[#allocation2 + $0x10] sm:$0xf]
    %v211 = vld [vmem:[#allocation2 + $0x14] sm:$0xf]
    %v212 = vld [vmem:[#allocation2 + $0x18] sm:$0xf]
    %v213 = vld [vmem:[#allocation2 + $0x1c] sm:$0xf]
    %v214 = vld [vmem:[#allocation2 + $0x20] sm:$0xf]
    %v215 = vld [vmem:[#allocation2 + $0x24] sm:$0xf]
    %v216 = vld [vmem:[#allocation2 + $0x28] sm:$0xf]
    %v217 = vld [vmem:[#allocation2 + $0x2c] sm:$0xf]
    %v218 = vld [vmem:[#allocation2 + $0x30] sm:$0xf]
    %v219 = vld [vmem:[#allocation2 + $0x34] sm:$0xf]
    %v220 = vld [vmem:[#allocation2 + $0x38] sm:$0xf]
    %v221 = vld [vmem:[#allocation2 + $0x3c] sm:$0xf]
    %v222 = vld [vmem:[#allocation5] sm:$0xf]
    %v223 = vld [vmem:[#allocation5 + $0x4] sm:$0xf]
    %v224 = vld [vmem:[#allocation5 + $0x8] sm:$0xf]
    %v225 = vld [vmem:[#allocation5 + $0xc] sm:$0xf]
    %v226 = vld [vmem:[#allocation5 + $0x10] sm:$0xf]
    %v227 = vld [vmem:[#allocation5 + $0x14] sm:$0xf]
    %v228 = vld [vmem:[#allocation5 + $0x18] sm:$0xf]
    %v229 = vld [vmem:[#allocation5 + $0x1c] sm:$0xf]
    %v230 = vld [vmem:[#allocation5 + $0x20] sm:$0xf]
    %v231 = vld [vmem:[#allocation5 + $0x24] sm:$0xf]
    %v232 = vld [vmem:[#allocation5 + $0x28] sm:$0xf]
    %v233 = vld [vmem:[#allocation5 + $0x2c] sm:$0xf]
    %v234 = vld [vmem:[#allocation5 + $0x30] sm:$0xf]
    %v235 = vld [vmem:[#allocation5 + $0x34] sm:$0xf]
    %v236 = vld [vmem:[#allocation5 + $0x38] sm:$0xf]
    %v237 = vld [vmem:[#allocation5 + $0x3c] sm:$0xf]
    %v254 = vunpack.c.l.b16 %v222
    %v255 = vunpack.c.l.b16 %v223
    %v256 = vunpack.c.l.b16 %v224
    %v257 = vunpack.c.l.b16 %v225
    %v258 = vunpack.c.l.b16 %v226
    %v259 = vunpack.c.l.b16 %v227
    %v260 = vunpack.c.l.b16 %v228
    %v261 = vunpack.c.l.b16 %v229
    %v262 = vunpack.c.l.b16 %v230
    %v263 = vunpack.c.l.b16 %v231
    %v264 = vunpack.c.l.b16 %v232
    %v265 = vunpack.c.l.b16 %v233
    %v266 = vunpack.c.l.b16 %v234
    %v267 = vunpack.c.l.b16 %v235
    %v268 = vunpack.c.l.b16 %v236
    %v269 = vunpack.c.l.b16 %v237
    %v270 = vpack.c.b16 %v255, %v254
    %v271 = vpack.c.b16 %v257, %v256
    %v272 = vpack.c.b16 %v259, %v258
    %v273 = vpack.c.b16 %v261, %v260
    %v274 = vpack.c.b16 %v263, %v262
    %v275 = vpack.c.b16 %v265, %v264
    %v276 = vpack.c.b16 %v267, %v266
    %v277 = vpack.c.b16 %v269, %v268
    %286 = vmatpush.bf16.msra.mxu0 %v277
    %287 = vmatpush.bf16.msra.mxu0 %v276
    %288 = vmatpush.bf16.msra.mxu0 %v275
    %289 = vmatpush.bf16.msra.mxu0 %v274
    %290 = vmatpush.bf16.msra.mxu0 %v273
    %291 = vmatpush.bf16.msra.mxu0 %v272
    %292 = vmatpush.bf16.msra.mxu0 %v271
    %293 = vmatpush.bf16.msra.mxu0 %v270
    %294 = vmatmul.bf16.gmra.mxu0 %v204
    %v295 = vpop.f32.mrf.mxu0
    %v296 = vadd.f32 0.0, %v295
    %v297 = vpop.f32.mrf.mxu0
    %v298 = vadd.f32 0.0, %v297
    %299 = vmatmul.bf16.gmra.mxu0 %v205
    %v300 = vpop.f32.mrf.mxu0
    %v301 = vadd.f32 0.0, %v300
    %v302 = vpop.f32.mrf.mxu0
    %303 = vdwg.mxu0
    %v320 = vunpack.c.l.b16 %v206
    %v321 = vunpack.c.l.b16 %v207
    %v322 = vunpack.c.l.b16 %v208
    %v323 = vunpack.c.l.b16 %v209
    %v324 = vunpack.c.l.b16 %v210
    %v325 = vunpack.c.l.b16 %v211
    %v326 = vunpack.c.l.b16 %v212
    %v327 = vunpack.c.l.b16 %v213
    %v328 = vunpack.c.l.b16 %v214
    %v329 = vunpack.c.l.b16 %v215
    %v330 = vunpack.c.l.b16 %v216
    %v331 = vunpack.c.l.b16 %v217
    %v332 = vunpack.c.l.b16 %v218
    %v333 = vunpack.c.l.b16 %v219
    %v334 = vunpack.c.l.b16 %v220
    %v335 = vunpack.c.l.b16 %v221
    %v336 = vpack.c.b16 %v321, %v320
    %v337 = vpack.c.b16 %v323, %v322
    %v338 = vpack.c.b16 %v325, %v324
    %v339 = vpack.c.b16 %v327, %v326
    %v340 = vpack.c.b16 %v329, %v328
    %v341 = vpack.c.b16 %v331, %v330
    %v342 = vpack.c.b16 %v333, %v332
    %v343 = vpack.c.b16 %v335, %v334
    %352 = vmatpush.bf16.msra.mxu0 %v343
    %353 = vmatpush.bf16.msra.mxu0 %v342
    %354 = vmatpush.bf16.msra.mxu0 %v341
    %355 = vmatpush.bf16.msra.mxu0 %v340
    %356 = vmatpush.bf16.msra.mxu0 %v339
    %357 = vmatpush.bf16.msra.mxu0 %v338
    %358 = vmatpush.bf16.msra.mxu0 %v337
    %359 = vmatpush.bf16.msra.mxu0 %v336
    %360 = vmatmul.bf16.gmra.mxu0 %v199
    %v361 = vpop.f32.mrf.mxu0
    %v362 = vadd.f32 %v296, %v361
    %v363 = vpop.f32.mrf.mxu0
    %v364 = vadd.f32 %v298, %v363
    %365 = vmatmul.bf16.gmra.mxu0 %v200
    %v366 = vpop.f32.mrf.mxu0
    %v367 = vadd.f32 %v301, %v366
    %v368 = vpop.f32.mrf.mxu0
    %369 = vdwg.mxu0
    %v370 = vld [vmem:[%s9] sm:$0x1]
    %v372 = vperm.slane %v370, 0
    %v374 = vadd.f32 %v362, %v372
    %v375 = vadd.f32 %v364, %v372
    %v376 = vadd.f32 %v367, %v372
    %v377 = vld [vmem:[%s6] sm:$0xff]
    %v378 = vpack.c.bf16 %v377, %v377
    %v379 = vld [vmem:[%s10] sm:$0x1]
    %v380 = vld [vmem:[%s11] sm:$0x1]
    %v382 = vperm.slane %v380, 0
    %vm384 = vcmask 7168
    %v386 = vsel %vm384, %v378, 0
    %vm388 = vcmask 1040384
    %v389 = vsel 0, 4294967295, 65535
    %v390 = vsel %vm388, %v389, 0
    %v392 = vand.u32 %v379, %v390
    %394 = vmatpush.bf16.msra.mxu0 0
    %395 = vmatpush.bf16.msra.mxu0 0
    %396 = vmatpush.bf16.msra.mxu0 0
    %397 = vmatpush.bf16.msra.mxu0 0
    %398 = vmatpush.bf16.msra.mxu0 0
    %399 = vmatpush.bf16.msra.mxu0 0
    %400 = vmatpush.bf16.msra.mxu0 0
    %401 = vmatpush.bf16.msra.mxu0 %v392
    %402 = vmatmul.bf16.gmra.mxu0 %v386
    %v403 = vpop.f32.mrf.mxu0
    %v404 = vadd.f32 %v382, %v403
    %v405 = vpop.f32.mrf.mxu0
    %406 = vdwg.mxu0
    %v407 = vld [vmem:[%s12] sm:$0x1]
    %v409 = vrot.slane %v404, 1
    %v410 = vrot.slane %v404, 2
    %v411 = vrot.slane %v404, 3
    %v412 = vrot.slane %v404, 4
    %v413 = vrot.slane %v404, 5
    %v414 = vrot.slane %v404, 6
    %v415 = vrot.slane %v404, 7
    %v416 = vperm.slane %v404, 0
    %v417 = vperm.slane %v409, 0
    %v418 = vperm.slane %v410, 0
    %v419 = vperm.slane %v411, 0
    %v420 = vperm.slane %v412, 0
    %v421 = vperm.slane %v413, 0
    %v422 = vperm.slane %v414, 0
    %v423 = vperm.slane %v415, 0
    %v432 = vadd.f32 %v374, %v416
    %v433 = vadd.f32 %v375, %v416
    %v434 = vadd.f32 %v376, %v416
    %v435 = vadd.f32 %v374, %v417
    %v436 = vadd.f32 %v375, %v417
    %v437 = vadd.f32 %v376, %v417
    %v438 = vadd.f32 %v374, %v418
    %v439 = vadd.f32 %v375, %v418
    %v440 = vadd.f32 %v376, %v418
    %v441 = vadd.f32 %v374, %v419
    %v442 = vadd.f32 %v375, %v419
    %v443 = vadd.f32 %v376, %v419
    %v444 = vadd.f32 %v374, %v420
    %v445 = vadd.f32 %v375, %v420
    %v446 = vadd.f32 %v376, %v420
    %v447 = vadd.f32 %v374, %v421
    %v448 = vadd.f32 %v375, %v421
    %v449 = vadd.f32 %v376, %v421
    %v450 = vadd.f32 %v374, %v422
    %v451 = vadd.f32 %v375, %v422
    %v452 = vadd.f32 %v376, %v422
    %v453 = vadd.f32 %v374, %v423
    %v454 = vadd.f32 %v375, %v423
    %v455 = vadd.f32 %v376, %v423
    %vm456 = vcmp.gt.f32.partialorder %v432, 0.0
    %vm457 = vcmp.gt.f32.partialorder %v433, 0.0
    %vm458 = vcmp.gt.f32.partialorder %v434, 0.0
    %vm459 = vcmp.gt.f32.partialorder %v435, 0.0
    %vm460 = vcmp.gt.f32.partialorder %v436, 0.0
    %vm461 = vcmp.gt.f32.partialorder %v437, 0.0
    %vm462 = vcmp.gt.f32.partialorder %v438, 0.0
    %vm463 = vcmp.gt.f32.partialorder %v439, 0.0
    %vm464 = vcmp.gt.f32.partialorder %v440, 0.0
    %vm465 = vcmp.gt.f32.partialorder %v441, 0.0
    %vm466 = vcmp.gt.f32.partialorder %v442, 0.0
    %vm467 = vcmp.gt.f32.partialorder %v443, 0.0
    %vm468 = vcmp.gt.f32.partialorder %v444, 0.0
    %vm469 = vcmp.gt.f32.partialorder %v445, 0.0
    %vm470 = vcmp.gt.f32.partialorder %v446, 0.0
    %vm471 = vcmp.gt.f32.partialorder %v447, 0.0
    %vm472 = vcmp.gt.f32.partialorder %v448, 0.0
    %vm473 = vcmp.gt.f32.partialorder %v449, 0.0
    %vm474 = vcmp.gt.f32.partialorder %v450, 0.0
    %vm475 = vcmp.gt.f32.partialorder %v451, 0.0
    %vm476 = vcmp.gt.f32.partialorder %v452, 0.0
    %vm477 = vcmp.gt.f32.partialorder %v453, 0.0
    %vm478 = vcmp.gt.f32.partialorder %v454, 0.0
    %vm479 = vcmp.gt.f32.partialorder %v455, 0.0
    %v480 = vmul.f32 %v432, 0.2
    %v481 = vmul.f32 %v433, 0.2
    %v482 = vmul.f32 %v434, 0.2
    %v483 = vmul.f32 %v435, 0.2
    %v484 = vmul.f32 %v436, 0.2
    %v485 = vmul.f32 %v437, 0.2
    %v486 = vmul.f32 %v438, 0.2
    %v487 = vmul.f32 %v439, 0.2
    %v488 = vmul.f32 %v440, 0.2
    %v489 = vmul.f32 %v441, 0.2
    %v490 = vmul.f32 %v442, 0.2
    %v491 = vmul.f32 %v443, 0.2
    %v492 = vmul.f32 %v444, 0.2
    %v493 = vmul.f32 %v445, 0.2
    %v494 = vmul.f32 %v446, 0.2
    %v495 = vmul.f32 %v447, 0.2
    %v496 = vmul.f32 %v448, 0.2
    %v497 = vmul.f32 %v449, 0.2
    %v498 = vmul.f32 %v450, 0.2
    %v499 = vmul.f32 %v451, 0.2
    %v500 = vmul.f32 %v452, 0.2
    %v501 = vmul.f32 %v453, 0.2
    %v502 = vmul.f32 %v454, 0.2
    %v503 = vmul.f32 %v455, 0.2
    %v504 = vsel %vm456, %v432, %v480
    %v505 = vsel %vm457, %v433, %v481
    %v506 = vsel %vm458, %v434, %v482
    %v507 = vsel %vm459, %v435, %v483
    %v508 = vsel %vm460, %v436, %v484
    %v509 = vsel %vm461, %v437, %v485
    %v510 = vsel %vm462, %v438, %v486
    %v511 = vsel %vm463, %v439, %v487
    %v512 = vsel %vm464, %v440, %v488
    %v513 = vsel %vm465, %v441, %v489
    %v514 = vsel %vm466, %v442, %v490
    %v515 = vsel %vm467, %v443, %v491
    %v516 = vsel %vm468, %v444, %v492
    %v517 = vsel %vm469, %v445, %v493
    %v518 = vsel %vm470, %v446, %v494
    %v519 = vsel %vm471, %v447, %v495
    %v520 = vsel %vm472, %v448, %v496
    %v521 = vsel %vm473, %v449, %v497
    %v522 = vsel %vm474, %v450, %v498
    %v523 = vsel %vm475, %v451, %v499
    %v524 = vsel %vm476, %v452, %v500
    %v525 = vsel %vm477, %v453, %v501
    %v526 = vsel %vm478, %v454, %v502
    %v527 = vsel %vm479, %v455, %v503
    %v529 = vperm.slane %v407, 0
    %v531 = vmul.f32 %v504, %v529
    %v532 = vmul.f32 %v505, %v529
    %v533 = vmul.f32 %v506, %v529
    %v534 = vmul.f32 %v507, %v529
    %v535 = vmul.f32 %v508, %v529
    %v536 = vmul.f32 %v509, %v529
    %v537 = vmul.f32 %v510, %v529
    %v538 = vmul.f32 %v511, %v529
    %v539 = vmul.f32 %v512, %v529
    %v540 = vmul.f32 %v513, %v529
    %v541 = vmul.f32 %v514, %v529
    %v542 = vmul.f32 %v515, %v529
    %v543 = vmul.f32 %v516, %v529
    %v544 = vmul.f32 %v517, %v529
    %v545 = vmul.f32 %v518, %v529
    %v546 = vmul.f32 %v519, %v529
    %v547 = vmul.f32 %v520, %v529
    %v548 = vmul.f32 %v521, %v529
    %v549 = vmul.f32 %v522, %v529
    %v550 = vmul.f32 %v523, %v529
    %v551 = vmul.f32 %v524, %v529
    %v552 = vmul.f32 %v525, %v529
    %v553 = vmul.f32 %v526, %v529
    %v554 = vmul.f32 %v527, %v529
    %555 = vadd.xlane.f32.xlu0 %v531
    %v556 = vpop.xlane.xlu0 %555
    %557 = vadd.xlane.f32.xlu0 %v532
    %v558 = vpop.xlane.xlu0 %557
    %559 = vadd.xlane.f32.xlu0 %v533
    %v560 = vpop.xlane.xlu0 %559
    %561 = vadd.xlane.f32.xlu0 %v534
    %v562 = vpop.xlane.xlu0 %561
    %563 = vadd.xlane.f32.xlu0 %v535
    %v564 = vpop.xlane.xlu0 %563
    %565 = vadd.xlane.f32.xlu0 %v536
    %v566 = vpop.xlane.xlu0 %565
    %567 = vadd.xlane.f32.xlu0 %v537
    %v568 = vpop.xlane.xlu0 %567
    %569 = vadd.xlane.f32.xlu0 %v538
    %v570 = vpop.xlane.xlu0 %569
    %571 = vadd.xlane.f32.xlu0 %v539
    %v572 = vpop.xlane.xlu0 %571
    %573 = vadd.xlane.f32.xlu0 %v540
    %v574 = vpop.xlane.xlu0 %573
    %575 = vadd.xlane.f32.xlu0 %v541
    %v576 = vpop.xlane.xlu0 %575
    %577 = vadd.xlane.f32.xlu0 %v542
    %v578 = vpop.xlane.xlu0 %577
    %579 = vadd.xlane.f32.xlu0 %v543
    %v580 = vpop.xlane.xlu0 %579
    %581 = vadd.xlane.f32.xlu0 %v544
    %v582 = vpop.xlane.xlu0 %581
    %583 = vadd.xlane.f32.xlu0 %v545
    %v584 = vpop.xlane.xlu0 %583
    %585 = vadd.xlane.f32.xlu0 %v546
    %v586 = vpop.xlane.xlu0 %585
    %587 = vadd.xlane.f32.xlu0 %v547
    %v588 = vpop.xlane.xlu0 %587
    %589 = vadd.xlane.f32.xlu0 %v548
    %v590 = vpop.xlane.xlu0 %589
    %591 = vadd.xlane.f32.xlu0 %v549
    %v592 = vpop.xlane.xlu0 %591
    %593 = vadd.xlane.f32.xlu0 %v550
    %v594 = vpop.xlane.xlu0 %593
    %595 = vadd.xlane.f32.xlu0 %v551
    %v596 = vpop.xlane.xlu0 %595
    %597 = vadd.xlane.f32.xlu0 %v552
    %v598 = vpop.xlane.xlu0 %597
    %599 = vadd.xlane.f32.xlu0 %v553
    %v600 = vpop.xlane.xlu0 %599
    %601 = vadd.xlane.f32.xlu0 %v554
    %v602 = vpop.xlane.xlu0 %601
    %v603 = vlaneseq
    %v604 = vshrl.u32 %v603, 7
    %v605 = vperm.slane %v148, 0
    %vm606 = vcmp.eq.s32.totalorder %v605, %v604
    %vm607 = vcmp.eq.s32.totalorder %v150, %v604
    %vm608 = vcmp.lt.s32.totalorder %v150, 8
    %vm609 = vmand %vm607, %vm608
    %vm610 = vmor %vm606, %vm609
    %v635 = vperm.slane %v556, %v150
    %v636 = vadd.s32 %v150, 4294967288
    %v637 = vperm.slane %v558, %v636
    %vm638 = vcmask 130112
    %v639 = vsel %vm638, %v637, %v635
    %v640 = vadd.s32 %v150, 4294967280
    %v641 = vperm.slane %v560, %v640
    %vm642 = vcmask 195712
    %v643 = vsel %vm642, %v641, %v639
    %v644 = vperm.slane %v562, %v150
    %v645 = vperm.slane %v564, %v636
    %v646 = vsel %vm638, %v645, %v644
    %v647 = vperm.slane %v566, %v640
    %v648 = vsel %vm642, %v647, %v646
    %v649 = vperm.slane %v568, %v150
    %v650 = vperm.slane %v570, %v636
    %v651 = vsel %vm638, %v650, %v649
    %v652 = vperm.slane %v572, %v640
    %v653 = vsel %vm642, %v652, %v651
    %v654 = vperm.slane %v574, %v150
    %v655 = vperm.slane %v576, %v636
    %v656 = vsel %vm638, %v655, %v654
    %v657 = vperm.slane %v578, %v640
    %v658 = vsel %vm642, %v657, %v656
    %v659 = vperm.slane %v580, %v150
    %v660 = vperm.slane %v582, %v636
    %v661 = vsel %vm638, %v660, %v659
    %v662 = vperm.slane %v584, %v640
    %v663 = vsel %vm642, %v662, %v661
    %v664 = vperm.slane %v586, %v150
    %v665 = vperm.slane %v588, %v636
    %v666 = vsel %vm638, %v665, %v664
    %v667 = vperm.slane %v590, %v640
    %v668 = vsel %vm642, %v667, %v666
    %v669 = vperm.slane %v592, %v150
    %v670 = vperm.slane %v594, %v636
    %v671 = vsel %vm638, %v670, %v669
    %v672 = vperm.slane %v596, %v640
    %v673 = vsel %vm642, %v672, %v671
    %v674 = vperm.slane %v598, %v150
    %v675 = vperm.slane %v600, %v636
    %v676 = vsel %vm638, %v675, %v674
    %v677 = vperm.slane %v602, %v640
    %v678 = vsel %vm642, %v677, %v676
    %vm679 = vcmask 1041409
    %v680 = vsel %vm679, %v648, %v643
    %vm681 = vcmask 1042434
    %v682 = vsel %vm681, %v653, %v680
    %vm683 = vcmask 1043459
    %v684 = vsel %vm683, %v658, %v682
    %vm685 = vcmask 1044484
    %v686 = vsel %vm685, %v663, %v684
    %vm687 = vcmask 1045509
    %v688 = vsel %vm687, %v668, %v686
    %vm689 = vcmask 1046534
    %v690 = vsel %vm689, %v673, %v688
    %vm691 = vcmask 1047559
    %v692 = vsel %vm691, %v678, %v690
    %v694 = vsel %vm610, %v692, -1e+30
    %vm695 = vcmask 195584
    %v696 = vsel %vm695, %v694, -inf
    %697 = vmax.xlane.f32.xlu0 %v696
    %v698 = vpop.xlane.xlu0 %697
    %v699 = vsub.f32 %v694, %v698
    %v700 = vmul.f32 %v699, 1.442695
    %v701 = vpow.pop %v700
    %v702 = vsel %vm610, 1, 0
    %v703 = vcvt.s32.f32 %v702
    %v704 = vmul.f32 %v701, %v703
    %v705 = vsel %vm695, %v704, 0.0
    %706 = vadd.xlane.f32.xlu0 %v705
    %v707 = vpop.xlane.xlu0 %706
    %v708 = vmax.f32 %v707, 1e-30
    %v709 = vrcp.pop %v708
    %v710 = vmul.f32 %v704, %v709
    %v711 = vpack.c.bf16 %v710, %v710
    %v712 = vpack.c.bf16 %v375, %v374
    %v713 = vpack.c.bf16 %v376, %v376
    %v714 = vld [vmem:[%s13] sm:$0x1]
    %v716 = vperm.slane %v714, 0
    %v719 = vsel %vm695, %v711, 0
    %vm721 = vcmask 1043456
    %v723 = vsel %vm721, %v713, 0
    %725 = vmatpush.bf16.msra.mxu0 0
    %726 = vmatpush.bf16.msra.mxu0 0
    %727 = vmatpush.bf16.msra.mxu0 0
    %728 = vmatpush.bf16.msra.mxu0 0
    %729 = vmatpush.bf16.msra.mxu0 0
    %730 = vmatpush.bf16.msra.mxu0 0
    %731 = vmatpush.bf16.msra.mxu0 %v723
    %732 = vmatpush.bf16.msra.mxu0 %v712
    %733 = vmatmul.bf16.gmra.mxu0 %v719
    %v734 = vpop.f32.mrf.mxu0
    %v735 = vadd.f32 %v716, %v734
    %v736 = vpop.f32.mrf.mxu0
    %737 = vdwg.mxu0
    %vm738 = vcmp.gt.f32.partialorder %v735, 0.0
    %v739 = vmul.f32 %v735, 0.1
    %v740 = vsel %vm738, %v735, %v739
    %741 = vset.pattern.permute.xlu0 0
    %742 = vperm.xlu0 %741, %v145
    %v743 = vpop.permute.xlu0 %742
    %744 = vset.pattern.permute.xlu0 0
    %745 = vperm.xlu0 %744, %v146
    %v746 = vpop.permute.xlu0 %745
    %747 = vset.pattern.permute.xlu0 0
    %748 = vperm.xlu0 %747, %v147
    %v749 = vpop.permute.xlu0 %748
    %vm750 = vcmp.eq.s32.totalorder %v743, %v150
    %vm751 = vcmp.eq.s32.totalorder %v746, %v150
    %vm752 = vcmp.eq.s32.totalorder %v749, %v150
    %v753 = vsel %vm750, 1, 0
    %v754 = vsel %vm751, 1, 0
    %v755 = vsel %vm752, 1, 0
    %v756 = vcvt.s32.f32 %v753
    %v757 = vcvt.s32.f32 %v754
    %v758 = vcvt.s32.f32 %v755
    %v759 = vpack.c.bf16 %v757, %v756
    %v760 = vpack.c.bf16 %v758, %v758
    %v761 = vpack.c.bf16 %v740, %v740
    %vm762 = vcmask 64512
    %v764 = vsel %vm762, %v759, 0
    %v767 = vsel %vm762, %v760, 0
    %v770 = vsel %vm721, %v761, 0
    %772 = vmatpush.bf16.msra.mxu0 0
    %773 = vmatpush.bf16.msra.mxu0 0
    %774 = vmatpush.bf16.msra.mxu0 0
    %775 = vmatpush.bf16.msra.mxu0 0
    %776 = vmatpush.bf16.msra.mxu0 0
    %777 = vmatpush.bf16.msra.mxu0 0
    %778 = vmatpush.bf16.msra.mxu0 0
    %779 = vmatpush.bf16.msra.mxu0 %v770
    %780 = vmatmul.bf16.gmra.mxu0 %v764
    %v781 = vpop.f32.mrf.mxu0
    %v782 = vadd.f32 0.0, %v781
    %v783 = vpop.f32.mrf.mxu0
    %v784 = vadd.f32 0.0, %v783
    %785 = vmatmul.bf16.gmra.mxu0 %v767
    %v786 = vpop.f32.mrf.mxu0
    %v787 = vadd.f32 0.0, %v786
    %v788 = vpop.f32.mrf.mxu0
    %789 = vdwg.mxu0
    %v790 = vpack.c.bf16 %v784, %v782
    %v791 = vpack.c.bf16 %v787, %v787
    %v792 = vld [vmem:[#allocation7] sm:$0xf]
    %v793 = vld [vmem:[#allocation7 + $0x4] sm:$0xf]
    %v794 = vld [vmem:[#allocation7 + $0x8] sm:$0xf]
    %v795 = vld [vmem:[#allocation7 + $0xc] sm:$0xf]
    %v796 = vld [vmem:[#allocation7 + $0x10] sm:$0xf]
    %v797 = vld [vmem:[#allocation7 + $0x14] sm:$0xf]
    %v798 = vld [vmem:[#allocation7 + $0x18] sm:$0xf]
    %v799 = vld [vmem:[#allocation7 + $0x1c] sm:$0xf]
    %v800 = vld [vmem:[#allocation7 + $0x20] sm:$0xf]
    %v801 = vld [vmem:[#allocation7 + $0x24] sm:$0xf]
    %v802 = vld [vmem:[#allocation7 + $0x28] sm:$0xf]
    %v803 = vld [vmem:[#allocation7 + $0x2c] sm:$0xf]
    %v804 = vld [vmem:[#allocation7 + $0x30] sm:$0xf]
    %v805 = vld [vmem:[#allocation7 + $0x34] sm:$0xf]
    %v806 = vld [vmem:[#allocation7 + $0x38] sm:$0xf]
    %v807 = vld [vmem:[#allocation7 + $0x3c] sm:$0xf]
    %v808 = vld [vmem:[#allocation8] sm:$0xf]
    %v809 = vld [vmem:[#allocation8 + $0x4] sm:$0xf]
    %v810 = vld [vmem:[#allocation8 + $0x8] sm:$0xf]
    %v811 = vld [vmem:[#allocation8 + $0xc] sm:$0xf]
    %v812 = vld [vmem:[#allocation8 + $0x10] sm:$0xf]
    %v813 = vld [vmem:[#allocation8 + $0x14] sm:$0xf]
    %v814 = vld [vmem:[#allocation8 + $0x18] sm:$0xf]
    %v815 = vld [vmem:[#allocation8 + $0x1c] sm:$0xf]
    %v816 = vld [vmem:[#allocation8 + $0x20] sm:$0xf]
    %v817 = vld [vmem:[#allocation8 + $0x24] sm:$0xf]
    %v818 = vld [vmem:[#allocation8 + $0x28] sm:$0xf]
    %v819 = vld [vmem:[#allocation8 + $0x2c] sm:$0xf]
    %v820 = vld [vmem:[#allocation8 + $0x30] sm:$0xf]
    %v821 = vld [vmem:[#allocation8 + $0x34] sm:$0xf]
    %v822 = vld [vmem:[#allocation8 + $0x38] sm:$0xf]
    %v823 = vld [vmem:[#allocation8 + $0x3c] sm:$0xf]
    %v840 = vunpack.c.l.b16 %v808
    %v841 = vunpack.c.l.b16 %v809
    %v842 = vunpack.c.l.b16 %v810
    %v843 = vunpack.c.l.b16 %v811
    %v844 = vunpack.c.l.b16 %v812
    %v845 = vunpack.c.l.b16 %v813
    %v846 = vunpack.c.l.b16 %v814
    %v847 = vunpack.c.l.b16 %v815
    %v848 = vunpack.c.l.b16 %v816
    %v849 = vunpack.c.l.b16 %v817
    %v850 = vunpack.c.l.b16 %v818
    %v851 = vunpack.c.l.b16 %v819
    %v852 = vunpack.c.l.b16 %v820
    %v853 = vunpack.c.l.b16 %v821
    %v854 = vunpack.c.l.b16 %v822
    %v855 = vunpack.c.l.b16 %v823
    %v856 = vpack.c.b16 %v841, %v840
    %v857 = vpack.c.b16 %v843, %v842
    %v858 = vpack.c.b16 %v845, %v844
    %v859 = vpack.c.b16 %v847, %v846
    %v860 = vpack.c.b16 %v849, %v848
    %v861 = vpack.c.b16 %v851, %v850
    %v862 = vpack.c.b16 %v853, %v852
    %v863 = vpack.c.b16 %v855, %v854
    %872 = vmatpush.bf16.msra.mxu0 %v863
    %873 = vmatpush.bf16.msra.mxu0 %v862
    %874 = vmatpush.bf16.msra.mxu0 %v861
    %875 = vmatpush.bf16.msra.mxu0 %v860
    %876 = vmatpush.bf16.msra.mxu0 %v859
    %877 = vmatpush.bf16.msra.mxu0 %v858
    %878 = vmatpush.bf16.msra.mxu0 %v857
    %879 = vmatpush.bf16.msra.mxu0 %v856
    %880 = vmatmul.bf16.gmra.mxu0 %v199
    %v881 = vpop.f32.mrf.mxu0
    %v882 = vadd.f32 0.0, %v881
    %v883 = vpop.f32.mrf.mxu0
    %v884 = vadd.f32 0.0, %v883
    %885 = vmatmul.bf16.gmra.mxu0 %v200
    %v886 = vpop.f32.mrf.mxu0
    %v887 = vadd.f32 0.0, %v886
    %v888 = vpop.f32.mrf.mxu0
    %889 = vdwg.mxu0
    %v906 = vunpack.c.l.b16 %v792
    %v907 = vunpack.c.l.b16 %v793
    %v908 = vunpack.c.l.b16 %v794
    %v909 = vunpack.c.l.b16 %v795
    %v910 = vunpack.c.l.b16 %v796
    %v911 = vunpack.c.l.b16 %v797
    %v912 = vunpack.c.l.b16 %v798
    %v913 = vunpack.c.l.b16 %v799
    %v914 = vunpack.c.l.b16 %v800
    %v915 = vunpack.c.l.b16 %v801
    %v916 = vunpack.c.l.b16 %v802
    %v917 = vunpack.c.l.b16 %v803
    %v918 = vunpack.c.l.b16 %v804
    %v919 = vunpack.c.l.b16 %v805
    %v920 = vunpack.c.l.b16 %v806
    %v921 = vunpack.c.l.b16 %v807
    %v922 = vpack.c.b16 %v907, %v906
    %v923 = vpack.c.b16 %v909, %v908
    %v924 = vpack.c.b16 %v911, %v910
    %v925 = vpack.c.b16 %v913, %v912
    %v926 = vpack.c.b16 %v915, %v914
    %v927 = vpack.c.b16 %v917, %v916
    %v928 = vpack.c.b16 %v919, %v918
    %v929 = vpack.c.b16 %v921, %v920
    %938 = vmatpush.bf16.msra.mxu0 %v929
    %939 = vmatpush.bf16.msra.mxu0 %v928
    %940 = vmatpush.bf16.msra.mxu0 %v927
    %941 = vmatpush.bf16.msra.mxu0 %v926
    %942 = vmatpush.bf16.msra.mxu0 %v925
    %943 = vmatpush.bf16.msra.mxu0 %v924
    %944 = vmatpush.bf16.msra.mxu0 %v923
    %945 = vmatpush.bf16.msra.mxu0 %v922
    %946 = vmatmul.bf16.gmra.mxu0 %v790
    %v947 = vpop.f32.mrf.mxu0
    %v948 = vadd.f32 %v882, %v947
    %v949 = vpop.f32.mrf.mxu0
    %v950 = vadd.f32 %v884, %v949
    %951 = vmatmul.bf16.gmra.mxu0 %v791
    %v952 = vpop.f32.mrf.mxu0
    %v953 = vadd.f32 %v887, %v952
    %v954 = vpop.f32.mrf.mxu0
    %955 = vdwg.mxu0
    %v956 = vld [vmem:[#allocation10] sm:$0xf]
    %v957 = vld [vmem:[#allocation10 + $0x4] sm:$0xf]
    %v958 = vld [vmem:[#allocation10 + $0x8] sm:$0xf]
    %v959 = vld [vmem:[#allocation10 + $0xc] sm:$0xf]
    %v960 = vld [vmem:[#allocation10 + $0x10] sm:$0xf]
    %v961 = vld [vmem:[#allocation10 + $0x14] sm:$0xf]
    %v962 = vld [vmem:[#allocation10 + $0x18] sm:$0xf]
    %v963 = vld [vmem:[#allocation10 + $0x1c] sm:$0xf]
    %v964 = vld [vmem:[#allocation10 + $0x20] sm:$0xf]
    %v965 = vld [vmem:[#allocation10 + $0x24] sm:$0xf]
    %v966 = vld [vmem:[#allocation10 + $0x28] sm:$0xf]
    %v967 = vld [vmem:[#allocation10 + $0x2c] sm:$0xf]
    %v968 = vld [vmem:[#allocation10 + $0x30] sm:$0xf]
    %v969 = vld [vmem:[#allocation10 + $0x34] sm:$0xf]
    %v970 = vld [vmem:[#allocation10 + $0x38] sm:$0xf]
    %v971 = vld [vmem:[#allocation10 + $0x3c] sm:$0xf]
    %v988 = vunpack.c.l.b16 %v956
    %v989 = vunpack.c.l.b16 %v957
    %v990 = vunpack.c.l.b16 %v958
    %v991 = vunpack.c.l.b16 %v959
    %v992 = vunpack.c.l.b16 %v960
    %v993 = vunpack.c.l.b16 %v961
    %v994 = vunpack.c.l.b16 %v962
    %v995 = vunpack.c.l.b16 %v963
    %v996 = vunpack.c.l.b16 %v964
    %v997 = vunpack.c.l.b16 %v965
    %v998 = vunpack.c.l.b16 %v966
    %v999 = vunpack.c.l.b16 %v967
    %v1000 = vunpack.c.l.b16 %v968
    %v1001 = vunpack.c.l.b16 %v969
    %v1002 = vunpack.c.l.b16 %v970
    %v1003 = vunpack.c.l.b16 %v971
    %v1004 = vpack.c.b16 %v989, %v988
    %v1005 = vpack.c.b16 %v991, %v990
    %v1006 = vpack.c.b16 %v993, %v992
    %v1007 = vpack.c.b16 %v995, %v994
    %v1008 = vpack.c.b16 %v997, %v996
    %v1009 = vpack.c.b16 %v999, %v998
    %v1010 = vpack.c.b16 %v1001, %v1000
    %v1011 = vpack.c.b16 %v1003, %v1002
    %1020 = vmatpush.bf16.msra.mxu0 %v1011
    %1021 = vmatpush.bf16.msra.mxu0 %v1010
    %1022 = vmatpush.bf16.msra.mxu0 %v1009
    %1023 = vmatpush.bf16.msra.mxu0 %v1008
    %1024 = vmatpush.bf16.msra.mxu0 %v1007
    %1025 = vmatpush.bf16.msra.mxu0 %v1006
    %1026 = vmatpush.bf16.msra.mxu0 %v1005
    %1027 = vmatpush.bf16.msra.mxu0 %v1004
    %1028 = vmatmul.bf16.gmra.mxu0 %v204
    %v1029 = vpop.f32.mrf.mxu0
    %v1030 = vadd.f32 0.0, %v1029
    %v1031 = vpop.f32.mrf.mxu0
    %v1032 = vadd.f32 0.0, %v1031
    %1033 = vmatmul.bf16.gmra.mxu0 %v205
    %v1034 = vpop.f32.mrf.mxu0
    %v1035 = vadd.f32 0.0, %v1034
    %v1036 = vpop.f32.mrf.mxu0
    %1037 = vdwg.mxu0
    %v1038 = vadd.f32 %v948, %v1030
    %v1039 = vadd.f32 %v950, %v1032
    %v1040 = vadd.f32 %v953, %v1035
    %v1041 = vld [vmem:[%s17] sm:$0x1]
    %v1043 = vperm.slane %v1041, 0
    %v1045 = vadd.f32 %v1038, %v1043
    %v1046 = vadd.f32 %v1039, %v1043
    %v1047 = vadd.f32 %v1040, %v1043
    %vm1048 = vcmp.gt.f32.partialorder %v1045, 0.0
    %vm1049 = vcmp.gt.f32.partialorder %v1046, 0.0
    %vm1050 = vcmp.gt.f32.partialorder %v1047, 0.0
    %v1051 = vmul.f32 %v1045, 0.1
    %v1052 = vmul.f32 %v1046, 0.1
    %v1053 = vmul.f32 %v1047, 0.1
    %v1054 = vsel %vm1048, %v1045, %v1051
    %v1055 = vsel %vm1049, %v1046, %v1052
    %v1056 = vsel %vm1050, %v1047, %v1053
    %1057 = vst [vmem:[#allocation11] sm:$0xff] %v1054
    %1058 = vst [vmem:[#allocation11 + $0x8] sm:$0xff] %v1055
    %1059 = vst [vmem:[#allocation11 + $0x10] sm:$0xff] %v1056
    %v1060 = vadd.s32 %v604, 8
    %v1061 = vperm.slane %v144, 0
    %vm1062 = vcmp.eq.s32.totalorder %v1061, %v604
    %vm1063 = vcmp.eq.s32.totalorder %v1061, %v1060
    %v1064 = vsel %vm1062, 1, 0
    %v1065 = vsel %vm1063, 1, 0
    %v1066 = vcvt.s32.f32 %v1064
    %v1067 = vcvt.s32.f32 %v1065
    %v1068 = vsel %vm695, %v1066, 0.0
    %1069 = vadd.xlane.f32.xlu0 %v1068
    %v1070 = vpop.xlane.xlu0 %1069
    %v1071 = vsel %vm695, %v1067, 0.0
    %1072 = vadd.xlane.f32.xlu0 %v1071
    %v1073 = vpop.xlane.xlu0 %1072
    %v1074 = vmax.f32 %v1070, 1.0
    %v1075 = vmax.f32 %v1073, 1.0
    %v1076 = vrcp.pop %v1074
    %v1077 = vmul.f32 %v1074, %v1076
    %v1078 = vsub.f32 1.0, %v1077
    %v1079 = vmul.f32 %v1076, %v1078
    %v1080 = vadd.f32 %v1076, %v1079
    %vm1081 = vweird.f32 %v1074
    %vm1082 = vweird.f32 %v1076
    %vm1083 = vmor %vm1081, %vm1082
    %v1084 = vsel %vm1083, %v1076, %v1080
    %v1085 = vand.u32 2147483647, %v1074
    %vm1086 = vcmp.eq.f32.partialorder %v1085, 8.507059e+37
    %v1087 = vand.u32 %v1074, 2147483648
    %v1088 = vor.u32 1.1754944e-38, %v1087
    %v1089 = vsel %vm1086, %v1088, %v1084
    %v1090 = vmul.f32 %v1066, %v1089
    %v1091 = vrcp.pop %v1075
    %v1092 = vmul.f32 %v1075, %v1091
    %v1093 = vsub.f32 1.0, %v1092
    %v1094 = vmul.f32 %v1091, %v1093
    %v1095 = vadd.f32 %v1091, %v1094
    %vm1096 = vweird.f32 %v1075
    %vm1097 = vweird.f32 %v1091
    %vm1098 = vmor %vm1096, %vm1097
    %v1099 = vsel %vm1098, %v1091, %v1095
    %v1100 = vand.u32 2147483647, %v1075
    %vm1101 = vcmp.eq.f32.partialorder %v1100, 8.507059e+37
    %v1102 = vand.u32 %v1075, 2147483648
    %v1103 = vor.u32 1.1754944e-38, %v1102
    %v1104 = vsel %vm1101, %v1103, %v1099
    %v1105 = vmul.f32 %v1067, %v1104
    %v1106 = vpack.c.bf16 %v1105, %v1090
    %v1107 = vpack.c.bf16 %v1055, %v1054
    %v1108 = vpack.c.bf16 %v1056, %v1056
    %v1110 = vsel %vm695, %v1106, 0
    %v1113 = vsel %vm721, %v1108, 0
    %1115 = vmatpush.bf16.msra.mxu0 0
    %1116 = vmatpush.bf16.msra.mxu0 0
    %1117 = vmatpush.bf16.msra.mxu0 0
    %1118 = vmatpush.bf16.msra.mxu0 0
    %1119 = vmatpush.bf16.msra.mxu0 0
    %1120 = vmatpush.bf16.msra.mxu0 0
    %1121 = vmatpush.bf16.msra.mxu0 %v1113
    %1122 = vmatpush.bf16.msra.mxu0 %v1107
    %1123 = vmatmul.bf16.gmra.mxu0 %v1110
    %v1124 = vpop.f32.mrf.mxu0
    %v1125 = vadd.f32 0.0, %v1124
    %v1126 = vpop.f32.mrf.mxu0
    %v1127 = vadd.f32 0.0, %v1126
    %1128 = vdwg.mxu0
    %1129 = vst [vmem:[%s18] sm:$0xff] %v1125
    %1130 = vst [vmem:[%s18 + $0x8] sm:$0xff] %v1127
    // Predicated region
    $region94: #{hgnn_forward.4} parent=1 // pred_check
      _
    $region95: #{hgnn_forward.4} parent=1 // pred_check_branch
      %1132 = sbr.rel (0) target = $region97
    $region96: #{hgnn_forward.4} parent=1 // pred_region
      _
    $region97: #{hgnn_forward.4} parent=1 // pred_fallthru
      _
    // Predicated region
    $region98: #{hgnn_forward.4} parent=1 // pred_check
      _
    $region99: #{hgnn_forward.4} parent=1 // pred_check_branch
      %1134 = sbr.rel (0) target = $region101
    $region100: #{hgnn_forward.4} parent=1 // pred_region
      %1136 = vsyncadd [#allocation4], 0
      %s1137 = sshll.u32 [#allocation11], 4
      %s1138 = int_to_ptr.vmem [resolvable:$true] %s1137
      %s1139 = sshll.u32 %s19, 4
      %s1140 = int_to_ptr.hbm [resolvable:$true] %s1139
      %1145 = dma.vmem_to_hbm [thread:$0]  %s1138, 384, %s1140, [#allocation4], 128, 128, 8
    $region101: #{hgnn_forward.4} parent=1 // pred_fallthru
      _
    // Predicated region
    $region102: #{hgnn_forward.4} parent=1 // pred_check
      _
    $region103: #{hgnn_forward.4} parent=1 // pred_check_branch
      %1147 = sbr.rel (0) target = $region105
    $region104: #{hgnn_forward.4} parent=1 // pred_region
      _
    $region105: #{hgnn_forward.4} parent=1 // pred_fallthru
      _
    // Predicated region
    $region106: #{hgnn_forward.4} parent=1 // pred_check
      _
    $region107: #{hgnn_forward.4} parent=1 // pred_check_branch
      %1149 = sbr.rel (0) target = $region109
    $region108: #{hgnn_forward.4} parent=1 // pred_region
      %1151 = dma.done [#allocation4], 384
    $region109: #{hgnn_forward.4} parent=1 // pred_fallthru
      _
    %1152 = vsyncpa [#allocation3], 1
    %1153 = vsyncpa [#allocation6], 1
    %1154 = vsyncpa [#allocation9], 1
    %1155 = vsyncpa [#allocation4], 1

// kernel: hgnn_forward.3
$region0: #{hgnn_forward.3}
  #allocation0 [shape = 'u32[]', space=smem, size = 0x4, offset = 0x4, fixed_abs, tag = 'smem constant byte address 0x4 - core index']
  #allocation1 [shape = 'u32[72,128]{1,0:T(1,128)}', space=vmem, size = 0x9000, scoped, tag = 'internal scratch']
  %s0 = inlined_call_operand.vmem [shape: s32[24,1], index: 0, kind: input, shape index: {}]
  %s1 = inlined_call_operand.vmem [shape: s32[1,24], index: 1, kind: input, shape index: {}]
  %s2 = inlined_call_operand.vmem [shape: s32[24,1], index: 2, kind: input, shape index: {}]
  %s3 = inlined_call_operand.vmem [shape: s32[1,24], index: 3, kind: input, shape index: {}]
  %s4 = inlined_call_operand.vmem [shape: f32[16,6], index: 4, kind: input, shape index: {}]
  %s5 = inlined_call_operand.vmem [shape: f32[24,2], index: 5, kind: input, shape index: {}]
  %s6 = inlined_call_operand.vmem [shape: f32[8,1], index: 6, kind: input, shape index: {}]
  %s7 = inlined_call_operand.vmem [shape: bf16[6,128], index: 7, kind: input, shape index: {}]
  %s8 = inlined_call_operand.vmem [shape: bf16[2,128], index: 8, kind: input, shape index: {}]
  %s9 = inlined_call_operand.vmem [shape: f32[1,128], index: 9, kind: input, shape index: {}]
  %s10 = inlined_call_operand.vmem [shape: bf16[1,128], index: 10, kind: input, shape index: {}]
  %s11 = inlined_call_operand.vmem [shape: f32[1,128], index: 11, kind: input, shape index: {}]
  %s12 = inlined_call_operand.vmem [shape: f32[1,128], index: 12, kind: input, shape index: {}]
  %s13 = inlined_call_operand.vmem [shape: f32[1,128], index: 13, kind: input, shape index: {}]
  %s14 = inlined_call_operand.hbm [shape: bf16[128,128], index: 14, kind: input, shape index: {}]
  %s15 = inlined_call_operand.vmem [shape: bf16[6,128], index: 15, kind: input, shape index: {}]
  %s16 = inlined_call_operand.vmem [shape: bf16[2,128], index: 16, kind: input, shape index: {}]
  %s17 = inlined_call_operand.vmem [shape: f32[1,128], index: 17, kind: input, shape index: {}]
  %s18 = inlined_call_operand.vmem [shape: f32[16,128], index: 18, kind: output, shape index: {0}]
  %s19 = inlined_call_operand.vmem [shape: f32[24,128], index: 19, kind: output, shape index: {1}]
  %20 = xla_tuple %s18, %s19
  %s21 = sld [smem:[#allocation0]]
  $region94: #{hgnn_forward.3} parent=0
    _
  %s23 = ssub.s32 1, %s21
  %s24 = scalar_select 0, %s23, %s21
  $region1: #{hgnn_forward.3} parent=0
    #allocation2 [shape = 'u8[32768]{0}', space=vmem, size = 0x8000, scoped, tag = 'input window, operand 14, single buffered']
    #allocation3 [shape = 's32[1]{0}', space=sflag, size = 0x4, scoped, tag = 'scoped memory for hgnn_forward.3']
    %25 = vsyncpa [#allocation3], 0
    // Predicated region
    $region2: #{hgnn_forward.3} parent=1 // pred_check
      _
    $region3: #{hgnn_forward.3} parent=1 // pred_check_branch
      %27 = sbr.rel (0) target = $region5
    $region4: #{hgnn_forward.3} parent=1 // pred_region
      _
    $region5: #{hgnn_forward.3} parent=1 // pred_fallthru
      _
    // Predicated region
    $region6: #{hgnn_forward.3} parent=1 // pred_check
      _
    $region7: #{hgnn_forward.3} parent=1 // pred_check_branch
      %29 = sbr.rel (0) target = $region9
    $region8: #{hgnn_forward.3} parent=1 // pred_region
      _
    $region9: #{hgnn_forward.3} parent=1 // pred_fallthru
      _
    // Predicated region
    $region10: #{hgnn_forward.3} parent=1 // pred_check
      _
    $region11: #{hgnn_forward.3} parent=1 // pred_check_branch
      %31 = sbr.rel (0) target = $region13
    $region12: #{hgnn_forward.3} parent=1 // pred_region
      _
    $region13: #{hgnn_forward.3} parent=1 // pred_fallthru
      _
    // Predicated region
    $region14: #{hgnn_forward.3} parent=1 // pred_check
      _
    $region15: #{hgnn_forward.3} parent=1 // pred_check_branch
      %33 = sbr.rel (0) target = $region17
    $region16: #{hgnn_forward.3} parent=1 // pred_region
      _
    $region17: #{hgnn_forward.3} parent=1 // pred_fallthru
      _
    // Predicated region
    $region18: #{hgnn_forward.3} parent=1 // pred_check
      _
    $region19: #{hgnn_forward.3} parent=1 // pred_check_branch
      %35 = sbr.rel (0) target = $region21
    $region20: #{hgnn_forward.3} parent=1 // pred_region
      _
    $region21: #{hgnn_forward.3} parent=1 // pred_fallthru
      _
    // Predicated region
    $region22: #{hgnn_forward.3} parent=1 // pred_check
      _
    $region23: #{hgnn_forward.3} parent=1 // pred_check_branch
      %37 = sbr.rel (0) target = $region25
    $region24: #{hgnn_forward.3} parent=1 // pred_region
      _
    $region25: #{hgnn_forward.3} parent=1 // pred_fallthru
      _
    // Predicated region
    $region26: #{hgnn_forward.3} parent=1 // pred_check
      _
    $region27: #{hgnn_forward.3} parent=1 // pred_check_branch
      %39 = sbr.rel (0) target = $region29
    $region28: #{hgnn_forward.3} parent=1 // pred_region
      _
    $region29: #{hgnn_forward.3} parent=1 // pred_fallthru
      _
    // Predicated region
    $region30: #{hgnn_forward.3} parent=1 // pred_check
      _
    $region31: #{hgnn_forward.3} parent=1 // pred_check_branch
      %41 = sbr.rel (0) target = $region33
    $region32: #{hgnn_forward.3} parent=1 // pred_region
      _
    $region33: #{hgnn_forward.3} parent=1 // pred_fallthru
      _
    // Predicated region
    $region34: #{hgnn_forward.3} parent=1 // pred_check
      _
    $region35: #{hgnn_forward.3} parent=1 // pred_check_branch
      %43 = sbr.rel (0) target = $region37
    $region36: #{hgnn_forward.3} parent=1 // pred_region
      _
    $region37: #{hgnn_forward.3} parent=1 // pred_fallthru
      _
    // Predicated region
    $region38: #{hgnn_forward.3} parent=1 // pred_check
      _
    $region39: #{hgnn_forward.3} parent=1 // pred_check_branch
      %45 = sbr.rel (0) target = $region41
    $region40: #{hgnn_forward.3} parent=1 // pred_region
      _
    $region41: #{hgnn_forward.3} parent=1 // pred_fallthru
      _
    // Predicated region
    $region42: #{hgnn_forward.3} parent=1 // pred_check
      _
    $region43: #{hgnn_forward.3} parent=1 // pred_check_branch
      %47 = sbr.rel (0) target = $region45
    $region44: #{hgnn_forward.3} parent=1 // pred_region
      _
    $region45: #{hgnn_forward.3} parent=1 // pred_fallthru
      _
    // Predicated region
    $region46: #{hgnn_forward.3} parent=1 // pred_check
      _
    $region47: #{hgnn_forward.3} parent=1 // pred_check_branch
      %49 = sbr.rel (0) target = $region49
    $region48: #{hgnn_forward.3} parent=1 // pred_region
      _
    $region49: #{hgnn_forward.3} parent=1 // pred_fallthru
      _
    // Predicated region
    $region50: #{hgnn_forward.3} parent=1 // pred_check
      _
    $region51: #{hgnn_forward.3} parent=1 // pred_check_branch
      %51 = sbr.rel (0) target = $region53
    $region52: #{hgnn_forward.3} parent=1 // pred_region
      _
    $region53: #{hgnn_forward.3} parent=1 // pred_fallthru
      _
    // Predicated region
    $region54: #{hgnn_forward.3} parent=1 // pred_check
      _
    $region55: #{hgnn_forward.3} parent=1 // pred_check_branch
      %53 = sbr.rel (0) target = $region57
    $region56: #{hgnn_forward.3} parent=1 // pred_region
      _
    $region57: #{hgnn_forward.3} parent=1 // pred_fallthru
      _
    // Predicated region
    $region58: #{hgnn_forward.3} parent=1 // pred_check
      _
    $region59: #{hgnn_forward.3} parent=1 // pred_check_branch
      %55 = sbr.rel (0) target = $region61
    $region60: #{hgnn_forward.3} parent=1 // pred_region
      %57 = vsyncadd [#allocation3], 0
      %s58 = sshll.u32 %s14, 4
      %s59 = int_to_ptr.hbm [resolvable:$true] %s58
      %s60 = sshll.u32 [#allocation2], 4
      %s61 = int_to_ptr.vmem [resolvable:$true] %s60
      %66 = dma.hbm_to_vmem [thread:$0]  %s59, 1024, %s61, [#allocation3], 64, 64, 4
    $region61: #{hgnn_forward.3} parent=1 // pred_fallthru
      _
    // Predicated region
    $region62: #{hgnn_forward.3} parent=1 // pred_check
      _
    $region63: #{hgnn_forward.3} parent=1 // pred_check_branch
      %68 = sbr.rel (0) target = $region65
    $region64: #{hgnn_forward.3} parent=1 // pred_region
      _
    $region65: #{hgnn_forward.3} parent=1 // pred_fallthru
      _
    // Predicated region
    $region66: #{hgnn_forward.3} parent=1 // pred_check
      _
    $region67: #{hgnn_forward.3} parent=1 // pred_check_branch
      %70 = sbr.rel (0) target = $region69
    $region68: #{hgnn_forward.3} parent=1 // pred_region
      _
    $region69: #{hgnn_forward.3} parent=1 // pred_fallthru
      _
    // Predicated region
    $region70: #{hgnn_forward.3} parent=1 // pred_check
      _
    $region71: #{hgnn_forward.3} parent=1 // pred_check_branch
      %72 = sbr.rel (0) target = $region73
    $region72: #{hgnn_forward.3} parent=1 // pred_region
      _
    $region73: #{hgnn_forward.3} parent=1 // pred_fallthru
      _
    // Predicated region
    $region74: #{hgnn_forward.3} parent=1 // pred_check
      _
    $region75: #{hgnn_forward.3} parent=1 // pred_check_branch
      %74 = sbr.rel (0) target = $region77
    $region76: #{hgnn_forward.3} parent=1 // pred_region
      %76 = dma.done [#allocation3], 1024
    $region77: #{hgnn_forward.3} parent=1 // pred_fallthru
      _
    %v78 = vld [vmem:[%s0] sm:$0xff]
    %v79 = vld [vmem:[%s0 + $0x8] sm:$0xff]
    %v80 = vld [vmem:[%s0 + $0x10] sm:$0xff]
    %v81 = vld [vmem:[%s1] sm:$0x1]
    %v82 = vld [vmem:[%s2] sm:$0xff]
    %v83 = vld [vmem:[%s2 + $0x8] sm:$0xff]
    %v84 = vld [vmem:[%s2 + $0x10] sm:$0xff]
    %v85 = vld [vmem:[%s3] sm:$0x1]
    %v86 = vlaneseq
    %v87 = vand.u32 %v86, 127
    %88 = vset.pattern.permute.xlu0 0
    %89 = vperm.xlu0 %88, %v78
    %v90 = vpop.permute.xlu0 %89
    %91 = vset.pattern.permute.xlu0 0
    %92 = vperm.xlu0 %91, %v79
    %v93 = vpop.permute.xlu0 %92
    %94 = vset.pattern.permute.xlu0 0
    %95 = vperm.xlu0 %94, %v80
    %v96 = vpop.permute.xlu0 %95
    %vm97 = vcmp.eq.s32.totalorder %v90, %v87
    %vm98 = vcmp.eq.s32.totalorder %v93, %v87
    %vm99 = vcmp.eq.s32.totalorder %v96, %v87
    %v100 = vsel %vm97, 1, 0
    %v101 = vsel %vm98, 1, 0
    %v102 = vsel %vm99, 1, 0
    %v103 = vcvt.s32.f32 %v100
    %v104 = vcvt.s32.f32 %v101
    %v105 = vcvt.s32.f32 %v102
    %v106 = vpack.c.bf16 %v104, %v103
    %v107 = vpack.c.bf16 %v105, %v105
    %v108 = vld [vmem:[%s4] sm:$0xff]
    %v109 = vld [vmem:[%s4 + $0x8] sm:$0xff]
    %v110 = vpack.c.bf16 %v109, %v108
    %vm111 = vcmask 130048
    %v113 = vsel %vm111, %v106, 0
    %v116 = vsel %vm111, %v107, 0
    %118 = vmatpush.bf16.msra.mxu0 0
    %119 = vmatpush.bf16.msra.mxu0 0
    %120 = vmatpush.bf16.msra.mxu0 0
    %121 = vmatpush.bf16.msra.mxu0 0
    %122 = vmatpush.bf16.msra.mxu0 0
    %123 = vmatpush.bf16.msra.mxu0 0
    %124 = vmatpush.bf16.msra.mxu0 0
    %125 = vmatpush.bf16.msra.mxu0 %v110
    %126 = vmatmul.bf16.gmra.mxu0 %v113
    %v127 = vpop.f32.mrf.mxu0
    %v128 = vadd.f32 0.0, %v127
    %v129 = vpop.f32.mrf.mxu0
    %v130 = vadd.f32 0.0, %v129
    %131 = vmatmul.bf16.gmra.mxu0 %v116
    %v132 = vpop.f32.mrf.mxu0
    %v133 = vadd.f32 0.0, %v132
    %v134 = vpop.f32.mrf.mxu0
    %135 = vdwg.mxu0
    %v136 = vpack.c.bf16 %v130, %v128
    %v137 = vpack.c.bf16 %v133, %v133
    %v138 = vld [vmem:[%s5] sm:$0xff]
    %v139 = vld [vmem:[%s5 + $0x8] sm:$0xff]
    %v140 = vld [vmem:[%s5 + $0x10] sm:$0xff]
    %v141 = vpack.c.bf16 %v139, %v138
    %v142 = vpack.c.bf16 %v140, %v140
    %v143 = vld [vmem:[%s7] sm:$0x7]
    %v144 = vld [vmem:[%s8] sm:$0x1]
    %vm145 = vcmask 15360
    %v147 = vsel %vm145, %v141, 0
    %v150 = vsel %vm145, %v142, 0
    %vm152 = vcmask 1040384
    %v154 = vsel %vm152, %v144, 0
    %156 = vmatpush.bf16.msra.mxu0 0
    %157 = vmatpush.bf16.msra.mxu0 0
    %158 = vmatpush.bf16.msra.mxu0 0
    %159 = vmatpush.bf16.msra.mxu0 0
    %160 = vmatpush.bf16.msra.mxu0 0
    %161 = vmatpush.bf16.msra.mxu0 0
    %162 = vmatpush.bf16.msra.mxu0 0
    %163 = vmatpush.bf16.msra.mxu0 %v154
    %164 = vmatmul.bf16.gmra.mxu0 %v147
    %v165 = vpop.f32.mrf.mxu0
    %v166 = vadd.f32 0.0, %v165
    %v167 = vpop.f32.mrf.mxu0
    %v168 = vadd.f32 0.0, %v167
    %169 = vmatmul.bf16.gmra.mxu0 %v150
    %v170 = vpop.f32.mrf.mxu0
    %v171 = vadd.f32 0.0, %v170
    %v172 = vpop.f32.mrf.mxu0
    %173 = vdwg.mxu0
    %vm174 = vcmask 48128
    %v176 = vsel %vm174, %v136, 0
    %v179 = vsel %vm174, %v137, 0
    %vm181 = vcmask 1042432
    %v183 = vsel %vm181, %v143, 0
    %185 = vmatpush.bf16.msra.mxu0 0
    %186 = vmatpush.bf16.msra.mxu0 0
    %187 = vmatpush.bf16.msra.mxu0 0
    %188 = vmatpush.bf16.msra.mxu0 0
    %189 = vmatpush.bf16.msra.mxu0 0
    %190 = vmatpush.bf16.msra.mxu0 0
    %191 = vmatpush.bf16.msra.mxu0 0
    %192 = vmatpush.bf16.msra.mxu0 %v183
    %193 = vmatmul.bf16.gmra.mxu0 %v176
    %v194 = vpop.f32.mrf.mxu0
    %v195 = vadd.f32 %v166, %v194
    %v196 = vpop.f32.mrf.mxu0
    %v197 = vadd.f32 %v168, %v196
    %198 = vmatmul.bf16.gmra.mxu0 %v179
    %v199 = vpop.f32.mrf.mxu0
    %v200 = vadd.f32 %v171, %v199
    %v201 = vpop.f32.mrf.mxu0
    %202 = vdwg.mxu0
    %v203 = vld [vmem:[%s9] sm:$0x1]
    %v205 = vperm.slane %v203, 0
    %v207 = vadd.f32 %v195, %v205
    %v208 = vadd.f32 %v197, %v205
    %v209 = vadd.f32 %v200, %v205
    %v210 = vld [vmem:[%s6] sm:$0xff]
    %v211 = vpack.c.bf16 %v210, %v210
    %v212 = vld [vmem:[%s10] sm:$0x1]
    %v213 = vld [vmem:[%s11] sm:$0x1]
    %v215 = vperm.slane %v213, 0
    %vm217 = vcmask 7168
    %v219 = vsel %vm217, %v211, 0
    %v221 = vsel 0, 4294967295, 65535
    %v222 = vsel %vm152, %v221, 0
    %v224 = vand.u32 %v212, %v222
    %226 = vmatpush.bf16.msra.mxu0 0
    %227 = vmatpush.bf16.msra.mxu0 0
    %228 = vmatpush.bf16.msra.mxu0 0
    %229 = vmatpush.bf16.msra.mxu0 0
    %230 = vmatpush.bf16.msra.mxu0 0
    %231 = vmatpush.bf16.msra.mxu0 0
    %232 = vmatpush.bf16.msra.mxu0 0
    %233 = vmatpush.bf16.msra.mxu0 %v224
    %234 = vmatmul.bf16.gmra.mxu0 %v219
    %v235 = vpop.f32.mrf.mxu0
    %v236 = vadd.f32 %v215, %v235
    %v237 = vpop.f32.mrf.mxu0
    %238 = vdwg.mxu0
    %v239 = vld [vmem:[%s12] sm:$0x1]
    %v241 = vrot.slane %v236, 1
    %v242 = vrot.slane %v236, 2
    %v243 = vrot.slane %v236, 3
    %v244 = vrot.slane %v236, 4
    %v245 = vrot.slane %v236, 5
    %v246 = vrot.slane %v236, 6
    %v247 = vrot.slane %v236, 7
    %v248 = vperm.slane %v236, 0
    %v249 = vperm.slane %v241, 0
    %v250 = vperm.slane %v242, 0
    %v251 = vperm.slane %v243, 0
    %v252 = vperm.slane %v244, 0
    %v253 = vperm.slane %v245, 0
    %v254 = vperm.slane %v246, 0
    %v255 = vperm.slane %v247, 0
    %v264 = vadd.f32 %v207, %v248
    %v265 = vadd.f32 %v208, %v248
    %v266 = vadd.f32 %v209, %v248
    %v267 = vadd.f32 %v207, %v249
    %v268 = vadd.f32 %v208, %v249
    %v269 = vadd.f32 %v209, %v249
    %v270 = vadd.f32 %v207, %v250
    %v271 = vadd.f32 %v208, %v250
    %v272 = vadd.f32 %v209, %v250
    %v273 = vadd.f32 %v207, %v251
    %v274 = vadd.f32 %v208, %v251
    %v275 = vadd.f32 %v209, %v251
    %v276 = vadd.f32 %v207, %v252
    %v277 = vadd.f32 %v208, %v252
    %v278 = vadd.f32 %v209, %v252
    %v279 = vadd.f32 %v207, %v253
    %v280 = vadd.f32 %v208, %v253
    %v281 = vadd.f32 %v209, %v253
    %v282 = vadd.f32 %v207, %v254
    %v283 = vadd.f32 %v208, %v254
    %v284 = vadd.f32 %v209, %v254
    %v285 = vadd.f32 %v207, %v255
    %v286 = vadd.f32 %v208, %v255
    %v287 = vadd.f32 %v209, %v255
    %vm288 = vcmp.gt.f32.partialorder %v264, 0.0
    %vm289 = vcmp.gt.f32.partialorder %v265, 0.0
    %vm290 = vcmp.gt.f32.partialorder %v266, 0.0
    %vm291 = vcmp.gt.f32.partialorder %v267, 0.0
    %vm292 = vcmp.gt.f32.partialorder %v268, 0.0
    %vm293 = vcmp.gt.f32.partialorder %v269, 0.0
    %vm294 = vcmp.gt.f32.partialorder %v270, 0.0
    %vm295 = vcmp.gt.f32.partialorder %v271, 0.0
    %vm296 = vcmp.gt.f32.partialorder %v272, 0.0
    %vm297 = vcmp.gt.f32.partialorder %v273, 0.0
    %vm298 = vcmp.gt.f32.partialorder %v274, 0.0
    %vm299 = vcmp.gt.f32.partialorder %v275, 0.0
    %vm300 = vcmp.gt.f32.partialorder %v276, 0.0
    %vm301 = vcmp.gt.f32.partialorder %v277, 0.0
    %vm302 = vcmp.gt.f32.partialorder %v278, 0.0
    %vm303 = vcmp.gt.f32.partialorder %v279, 0.0
    %vm304 = vcmp.gt.f32.partialorder %v280, 0.0
    %vm305 = vcmp.gt.f32.partialorder %v281, 0.0
    %vm306 = vcmp.gt.f32.partialorder %v282, 0.0
    %vm307 = vcmp.gt.f32.partialorder %v283, 0.0
    %vm308 = vcmp.gt.f32.partialorder %v284, 0.0
    %vm309 = vcmp.gt.f32.partialorder %v285, 0.0
    %vm310 = vcmp.gt.f32.partialorder %v286, 0.0
    %vm311 = vcmp.gt.f32.partialorder %v287, 0.0
    %v312 = vmul.f32 %v264, 0.2
    %v313 = vmul.f32 %v265, 0.2
    %v314 = vmul.f32 %v266, 0.2
    %v315 = vmul.f32 %v267, 0.2
    %v316 = vmul.f32 %v268, 0.2
    %v317 = vmul.f32 %v269, 0.2
    %v318 = vmul.f32 %v270, 0.2
    %v319 = vmul.f32 %v271, 0.2
    %v320 = vmul.f32 %v272, 0.2
    %v321 = vmul.f32 %v273, 0.2
    %v322 = vmul.f32 %v274, 0.2
    %v323 = vmul.f32 %v275, 0.2
    %v324 = vmul.f32 %v276, 0.2
    %v325 = vmul.f32 %v277, 0.2
    %v326 = vmul.f32 %v278, 0.2
    %v327 = vmul.f32 %v279, 0.2
    %v328 = vmul.f32 %v280, 0.2
    %v329 = vmul.f32 %v281, 0.2
    %v330 = vmul.f32 %v282, 0.2
    %v331 = vmul.f32 %v283, 0.2
    %v332 = vmul.f32 %v284, 0.2
    %v333 = vmul.f32 %v285, 0.2
    %v334 = vmul.f32 %v286, 0.2
    %v335 = vmul.f32 %v287, 0.2
    %v336 = vsel %vm288, %v264, %v312
    %v337 = vsel %vm289, %v265, %v313
    %v338 = vsel %vm290, %v266, %v314
    %v339 = vsel %vm291, %v267, %v315
    %v340 = vsel %vm292, %v268, %v316
    %v341 = vsel %vm293, %v269, %v317
    %v342 = vsel %vm294, %v270, %v318
    %v343 = vsel %vm295, %v271, %v319
    %v344 = vsel %vm296, %v272, %v320
    %v345 = vsel %vm297, %v273, %v321
    %v346 = vsel %vm298, %v274, %v322
    %v347 = vsel %vm299, %v275, %v323
    %v348 = vsel %vm300, %v276, %v324
    %v349 = vsel %vm301, %v277, %v325
    %v350 = vsel %vm302, %v278, %v326
    %v351 = vsel %vm303, %v279, %v327
    %v352 = vsel %vm304, %v280, %v328
    %v353 = vsel %vm305, %v281, %v329
    %v354 = vsel %vm306, %v282, %v330
    %v355 = vsel %vm307, %v283, %v331
    %v356 = vsel %vm308, %v284, %v332
    %v357 = vsel %vm309, %v285, %v333
    %v358 = vsel %vm310, %v286, %v334
    %v359 = vsel %vm311, %v287, %v335
    %v361 = vperm.slane %v239, 0
    %v363 = vmul.f32 %v336, %v361
    %v364 = vmul.f32 %v337, %v361
    %v365 = vmul.f32 %v338, %v361
    %v366 = vmul.f32 %v339, %v361
    %v367 = vmul.f32 %v340, %v361
    %v368 = vmul.f32 %v341, %v361
    %v369 = vmul.f32 %v342, %v361
    %v370 = vmul.f32 %v343, %v361
    %v371 = vmul.f32 %v344, %v361
    %v372 = vmul.f32 %v345, %v361
    %v373 = vmul.f32 %v346, %v361
    %v374 = vmul.f32 %v347, %v361
    %v375 = vmul.f32 %v348, %v361
    %v376 = vmul.f32 %v349, %v361
    %v377 = vmul.f32 %v350, %v361
    %v378 = vmul.f32 %v351, %v361
    %v379 = vmul.f32 %v352, %v361
    %v380 = vmul.f32 %v353, %v361
    %v381 = vmul.f32 %v354, %v361
    %v382 = vmul.f32 %v355, %v361
    %v383 = vmul.f32 %v356, %v361
    %v384 = vmul.f32 %v357, %v361
    %v385 = vmul.f32 %v358, %v361
    %v386 = vmul.f32 %v359, %v361
    %387 = vadd.xlane.f32.xlu0 %v363
    %v388 = vpop.xlane.xlu0 %387
    %389 = vadd.xlane.f32.xlu0 %v364
    %v390 = vpop.xlane.xlu0 %389
    %391 = vadd.xlane.f32.xlu0 %v365
    %v392 = vpop.xlane.xlu0 %391
    %393 = vadd.xlane.f32.xlu0 %v366
    %v394 = vpop.xlane.xlu0 %393
    %395 = vadd.xlane.f32.xlu0 %v367
    %v396 = vpop.xlane.xlu0 %395
    %397 = vadd.xlane.f32.xlu0 %v368
    %v398 = vpop.xlane.xlu0 %397
    %399 = vadd.xlane.f32.xlu0 %v369
    %v400 = vpop.xlane.xlu0 %399
    %401 = vadd.xlane.f32.xlu0 %v370
    %v402 = vpop.xlane.xlu0 %401
    %403 = vadd.xlane.f32.xlu0 %v371
    %v404 = vpop.xlane.xlu0 %403
    %405 = vadd.xlane.f32.xlu0 %v372
    %v406 = vpop.xlane.xlu0 %405
    %407 = vadd.xlane.f32.xlu0 %v373
    %v408 = vpop.xlane.xlu0 %407
    %409 = vadd.xlane.f32.xlu0 %v374
    %v410 = vpop.xlane.xlu0 %409
    %411 = vadd.xlane.f32.xlu0 %v375
    %v412 = vpop.xlane.xlu0 %411
    %413 = vadd.xlane.f32.xlu0 %v376
    %v414 = vpop.xlane.xlu0 %413
    %415 = vadd.xlane.f32.xlu0 %v377
    %v416 = vpop.xlane.xlu0 %415
    %417 = vadd.xlane.f32.xlu0 %v378
    %v418 = vpop.xlane.xlu0 %417
    %419 = vadd.xlane.f32.xlu0 %v379
    %v420 = vpop.xlane.xlu0 %419
    %421 = vadd.xlane.f32.xlu0 %v380
    %v422 = vpop.xlane.xlu0 %421
    %423 = vadd.xlane.f32.xlu0 %v381
    %v424 = vpop.xlane.xlu0 %423
    %425 = vadd.xlane.f32.xlu0 %v382
    %v426 = vpop.xlane.xlu0 %425
    %427 = vadd.xlane.f32.xlu0 %v383
    %v428 = vpop.xlane.xlu0 %427
    %429 = vadd.xlane.f32.xlu0 %v384
    %v430 = vpop.xlane.xlu0 %429
    %431 = vadd.xlane.f32.xlu0 %v385
    %v432 = vpop.xlane.xlu0 %431
    %433 = vadd.xlane.f32.xlu0 %v386
    %v434 = vpop.xlane.xlu0 %433
    %v435 = vlaneseq
    %v436 = vshrl.u32 %v435, 7
    %v437 = vperm.slane %v85, 0
    %vm438 = vcmp.eq.s32.totalorder %v437, %v436
    %vm439 = vcmp.eq.s32.totalorder %v87, %v436
    %vm440 = vcmp.lt.s32.totalorder %v87, 8
    %vm441 = vmand %vm439, %vm440
    %vm442 = vmor %vm438, %vm441
    %v467 = vperm.slane %v388, %v87
    %v468 = vadd.s32 %v87, 4294967288
    %v469 = vperm.slane %v390, %v468
    %vm470 = vcmask 130112
    %v471 = vsel %vm470, %v469, %v467
    %v472 = vadd.s32 %v87, 4294967280
    %v473 = vperm.slane %v392, %v472
    %vm474 = vcmask 195712
    %v475 = vsel %vm474, %v473, %v471
    %v476 = vperm.slane %v394, %v87
    %v477 = vperm.slane %v396, %v468
    %v478 = vsel %vm470, %v477, %v476
    %v479 = vperm.slane %v398, %v472
    %v480 = vsel %vm474, %v479, %v478
    %v481 = vperm.slane %v400, %v87
    %v482 = vperm.slane %v402, %v468
    %v483 = vsel %vm470, %v482, %v481
    %v484 = vperm.slane %v404, %v472
    %v485 = vsel %vm474, %v484, %v483
    %v486 = vperm.slane %v406, %v87
    %v487 = vperm.slane %v408, %v468
    %v488 = vsel %vm470, %v487, %v486
    %v489 = vperm.slane %v410, %v472
    %v490 = vsel %vm474, %v489, %v488
    %v491 = vperm.slane %v412, %v87
    %v492 = vperm.slane %v414, %v468
    %v493 = vsel %vm470, %v492, %v491
    %v494 = vperm.slane %v416, %v472
    %v495 = vsel %vm474, %v494, %v493
    %v496 = vperm.slane %v418, %v87
    %v497 = vperm.slane %v420, %v468
    %v498 = vsel %vm470, %v497, %v496
    %v499 = vperm.slane %v422, %v472
    %v500 = vsel %vm474, %v499, %v498
    %v501 = vperm.slane %v424, %v87
    %v502 = vperm.slane %v426, %v468
    %v503 = vsel %vm470, %v502, %v501
    %v504 = vperm.slane %v428, %v472
    %v505 = vsel %vm474, %v504, %v503
    %v506 = vperm.slane %v430, %v87
    %v507 = vperm.slane %v432, %v468
    %v508 = vsel %vm470, %v507, %v506
    %v509 = vperm.slane %v434, %v472
    %v510 = vsel %vm474, %v509, %v508
    %vm511 = vcmask 1041409
    %v512 = vsel %vm511, %v480, %v475
    %vm513 = vcmask 1042434
    %v514 = vsel %vm513, %v485, %v512
    %vm515 = vcmask 1043459
    %v516 = vsel %vm515, %v490, %v514
    %vm517 = vcmask 1044484
    %v518 = vsel %vm517, %v495, %v516
    %vm519 = vcmask 1045509
    %v520 = vsel %vm519, %v500, %v518
    %vm521 = vcmask 1046534
    %v522 = vsel %vm521, %v505, %v520
    %vm523 = vcmask 1047559
    %v524 = vsel %vm523, %v510, %v522
    %v526 = vsel %vm442, %v524, -1e+30
    %vm527 = vcmask 195584
    %v528 = vsel %vm527, %v526, -inf
    %529 = vmax.xlane.f32.xlu0 %v528
    %v530 = vpop.xlane.xlu0 %529
    %v531 = vsub.f32 %v526, %v530
    %v532 = vmul.f32 %v531, 1.442695
    %v533 = vpow.pop %v532
    %v534 = vsel %vm442, 1, 0
    %v535 = vcvt.s32.f32 %v534
    %v536 = vmul.f32 %v533, %v535
    %v537 = vsel %vm527, %v536, 0.0
    %538 = vadd.xlane.f32.xlu0 %v537
    %v539 = vpop.xlane.xlu0 %538
    %v540 = vmax.f32 %v539, 1e-30
    %v541 = vrcp.pop %v540
    %v542 = vmul.f32 %v536, %v541
    %v543 = vpack.c.bf16 %v542, %v542
    %v544 = vpack.c.bf16 %v208, %v207
    %v545 = vpack.c.bf16 %v209, %v209
    %v546 = vld [vmem:[%s13] sm:$0x1]
    %v548 = vperm.slane %v546, 0
    %v551 = vsel %vm527, %v543, 0
    %vm553 = vcmask 1043456
    %v555 = vsel %vm553, %v545, 0
    %557 = vmatpush.bf16.msra.mxu0 0
    %558 = vmatpush.bf16.msra.mxu0 0
    %559 = vmatpush.bf16.msra.mxu0 0
    %560 = vmatpush.bf16.msra.mxu0 0
    %561 = vmatpush.bf16.msra.mxu0 0
    %562 = vmatpush.bf16.msra.mxu0 0
    %563 = vmatpush.bf16.msra.mxu0 %v555
    %564 = vmatpush.bf16.msra.mxu0 %v544
    %565 = vmatmul.bf16.gmra.mxu0 %v551
    %v566 = vpop.f32.mrf.mxu0
    %v567 = vadd.f32 %v548, %v566
    %v568 = vpop.f32.mrf.mxu0
    %569 = vdwg.mxu0
    %vm570 = vcmp.gt.f32.partialorder %v567, 0.0
    %v571 = vmul.f32 %v567, 0.1
    %v572 = vsel %vm570, %v567, %v571
    %573 = vset.pattern.permute.xlu0 0
    %574 = vperm.xlu0 %573, %v82
    %v575 = vpop.permute.xlu0 %574
    %576 = vset.pattern.permute.xlu0 0
    %577 = vperm.xlu0 %576, %v83
    %v578 = vpop.permute.xlu0 %577
    %579 = vset.pattern.permute.xlu0 0
    %580 = vperm.xlu0 %579, %v84
    %v581 = vpop.permute.xlu0 %580
    %vm582 = vcmp.eq.s32.totalorder %v575, %v87
    %vm583 = vcmp.eq.s32.totalorder %v578, %v87
    %vm584 = vcmp.eq.s32.totalorder %v581, %v87
    %v585 = vsel %vm582, 1, 0
    %v586 = vsel %vm583, 1, 0
    %v587 = vsel %vm584, 1, 0
    %v588 = vcvt.s32.f32 %v585
    %v589 = vcvt.s32.f32 %v586
    %v590 = vcvt.s32.f32 %v587
    %v591 = vpack.c.bf16 %v589, %v588
    %v592 = vpack.c.bf16 %v590, %v590
    %v593 = vpack.c.bf16 %v572, %v572
    %vm594 = vcmask 64512
    %v596 = vsel %vm594, %v591, 0
    %v599 = vsel %vm594, %v592, 0
    %v602 = vsel %vm553, %v593, 0
    %604 = vmatpush.bf16.msra.mxu0 0
    %605 = vmatpush.bf16.msra.mxu0 0
    %606 = vmatpush.bf16.msra.mxu0 0
    %607 = vmatpush.bf16.msra.mxu0 0
    %608 = vmatpush.bf16.msra.mxu0 0
    %609 = vmatpush.bf16.msra.mxu0 0
    %610 = vmatpush.bf16.msra.mxu0 0
    %611 = vmatpush.bf16.msra.mxu0 %v602
    %612 = vmatmul.bf16.gmra.mxu0 %v596
    %v613 = vpop.f32.mrf.mxu0
    %v614 = vadd.f32 0.0, %v613
    %v615 = vpop.f32.mrf.mxu0
    %v616 = vadd.f32 0.0, %v615
    %617 = vmatmul.bf16.gmra.mxu0 %v599
    %v618 = vpop.f32.mrf.mxu0
    %v619 = vadd.f32 0.0, %v618
    %v620 = vpop.f32.mrf.mxu0
    %621 = vdwg.mxu0
    %v622 = vpack.c.bf16 %v616, %v614
    %v623 = vpack.c.bf16 %v619, %v619
    %v624 = vld [vmem:[#allocation2] sm:$0xf]
    %v625 = vld [vmem:[#allocation2 + $0x4] sm:$0xf]
    %v626 = vld [vmem:[#allocation2 + $0x8] sm:$0xf]
    %v627 = vld [vmem:[#allocation2 + $0xc] sm:$0xf]
    %v628 = vld [vmem:[#allocation2 + $0x10] sm:$0xf]
    %v629 = vld [vmem:[#allocation2 + $0x14] sm:$0xf]
    %v630 = vld [vmem:[#allocation2 + $0x18] sm:$0xf]
    %v631 = vld [vmem:[#allocation2 + $0x1c] sm:$0xf]
    %v632 = vld [vmem:[#allocation2 + $0x20] sm:$0xf]
    %v633 = vld [vmem:[#allocation2 + $0x24] sm:$0xf]
    %v634 = vld [vmem:[#allocation2 + $0x28] sm:$0xf]
    %v635 = vld [vmem:[#allocation2 + $0x2c] sm:$0xf]
    %v636 = vld [vmem:[#allocation2 + $0x30] sm:$0xf]
    %v637 = vld [vmem:[#allocation2 + $0x34] sm:$0xf]
    %v638 = vld [vmem:[#allocation2 + $0x38] sm:$0xf]
    %v639 = vld [vmem:[#allocation2 + $0x3c] sm:$0xf]
    %v640 = vld [vmem:[%s15] sm:$0x7]
    %v642 = vsel %vm181, %v640, 0
    %644 = vmatpush.bf16.msra.mxu0 0
    %645 = vmatpush.bf16.msra.mxu0 0
    %646 = vmatpush.bf16.msra.mxu0 0
    %647 = vmatpush.bf16.msra.mxu0 0
    %648 = vmatpush.bf16.msra.mxu0 0
    %649 = vmatpush.bf16.msra.mxu0 0
    %650 = vmatpush.bf16.msra.mxu0 0
    %651 = vmatpush.bf16.msra.mxu0 %v642
    %652 = vmatmul.bf16.gmra.mxu0 %v176
    %v653 = vpop.f32.mrf.mxu0
    %v654 = vadd.f32 0.0, %v653
    %v655 = vpop.f32.mrf.mxu0
    %v656 = vadd.f32 0.0, %v655
    %657 = vmatmul.bf16.gmra.mxu0 %v179
    %v658 = vpop.f32.mrf.mxu0
    %v659 = vadd.f32 0.0, %v658
    %v660 = vpop.f32.mrf.mxu0
    %661 = vdwg.mxu0
    %v678 = vunpack.c.l.b16 %v624
    %v679 = vunpack.c.l.b16 %v625
    %v680 = vunpack.c.l.b16 %v626
    %v681 = vunpack.c.l.b16 %v627
    %v682 = vunpack.c.l.b16 %v628
    %v683 = vunpack.c.l.b16 %v629
    %v684 = vunpack.c.l.b16 %v630
    %v685 = vunpack.c.l.b16 %v631
    %v686 = vunpack.c.l.b16 %v632
    %v687 = vunpack.c.l.b16 %v633
    %v688 = vunpack.c.l.b16 %v634
    %v689 = vunpack.c.l.b16 %v635
    %v690 = vunpack.c.l.b16 %v636
    %v691 = vunpack.c.l.b16 %v637
    %v692 = vunpack.c.l.b16 %v638
    %v693 = vunpack.c.l.b16 %v639
    %v694 = vpack.c.b16 %v679, %v678
    %v695 = vpack.c.b16 %v681, %v680
    %v696 = vpack.c.b16 %v683, %v682
    %v697 = vpack.c.b16 %v685, %v684
    %v698 = vpack.c.b16 %v687, %v686
    %v699 = vpack.c.b16 %v689, %v688
    %v700 = vpack.c.b16 %v691, %v690
    %v701 = vpack.c.b16 %v693, %v692
    %710 = vmatpush.bf16.msra.mxu0 %v701
    %711 = vmatpush.bf16.msra.mxu0 %v700
    %712 = vmatpush.bf16.msra.mxu0 %v699
    %713 = vmatpush.bf16.msra.mxu0 %v698
    %714 = vmatpush.bf16.msra.mxu0 %v697
    %715 = vmatpush.bf16.msra.mxu0 %v696
    %716 = vmatpush.bf16.msra.mxu0 %v695
    %717 = vmatpush.bf16.msra.mxu0 %v694
    %718 = vmatmul.bf16.gmra.mxu0 %v622
    %v719 = vpop.f32.mrf.mxu0
    %v720 = vadd.f32 %v654, %v719
    %v721 = vpop.f32.mrf.mxu0
    %v722 = vadd.f32 %v656, %v721
    %723 = vmatmul.bf16.gmra.mxu0 %v623
    %v724 = vpop.f32.mrf.mxu0
    %v725 = vadd.f32 %v659, %v724
    %v726 = vpop.f32.mrf.mxu0
    %727 = vdwg.mxu0
    %v728 = vld [vmem:[%s16] sm:$0x1]
    %v730 = vsel %vm152, %v728, 0
    %732 = vmatpush.bf16.msra.mxu0 0
    %733 = vmatpush.bf16.msra.mxu0 0
    %734 = vmatpush.bf16.msra.mxu0 0
    %735 = vmatpush.bf16.msra.mxu0 0
    %736 = vmatpush.bf16.msra.mxu0 0
    %737 = vmatpush.bf16.msra.mxu0 0
    %738 = vmatpush.bf16.msra.mxu0 0
    %739 = vmatpush.bf16.msra.mxu0 %v730
    %740 = vmatmul.bf16.gmra.mxu0 %v147
    %v741 = vpop.f32.mrf.mxu0
    %v742 = vadd.f32 0.0, %v741
    %v743 = vpop.f32.mrf.mxu0
    %v744 = vadd.f32 0.0, %v743
    %745 = vmatmul.bf16.gmra.mxu0 %v150
    %v746 = vpop.f32.mrf.mxu0
    %v747 = vadd.f32 0.0, %v746
    %v748 = vpop.f32.mrf.mxu0
    %749 = vdwg.mxu0
    %v750 = vadd.f32 %v720, %v742
    %v751 = vadd.f32 %v722, %v744
    %v752 = vadd.f32 %v725, %v747
    %v753 = vld [vmem:[%s17] sm:$0x1]
    %v755 = vperm.slane %v753, 0
    %v757 = vadd.f32 %v750, %v755
    %v758 = vadd.f32 %v751, %v755
    %v759 = vadd.f32 %v752, %v755
    %vm760 = vcmp.gt.f32.partialorder %v757, 0.0
    %vm761 = vcmp.gt.f32.partialorder %v758, 0.0
    %vm762 = vcmp.gt.f32.partialorder %v759, 0.0
    %v763 = vmul.f32 %v757, 0.1
    %v764 = vmul.f32 %v758, 0.1
    %v765 = vmul.f32 %v759, 0.1
    %v766 = vsel %vm760, %v757, %v763
    %v767 = vsel %vm761, %v758, %v764
    %v768 = vsel %vm762, %v759, %v765
    %769 = vst [vmem:[%s19] sm:$0xff] %v766
    %770 = vst [vmem:[%s19 + $0x8] sm:$0xff] %v767
    %771 = vst [vmem:[%s19 + $0x10] sm:$0xff] %v768
    %v772 = vadd.s32 %v436, 8
    %v773 = vperm.slane %v81, 0
    %vm774 = vcmp.eq.s32.totalorder %v773, %v436
    %vm775 = vcmp.eq.s32.totalorder %v773, %v772
    %v776 = vsel %vm774, 1, 0
    %v777 = vsel %vm775, 1, 0
    %v778 = vcvt.s32.f32 %v776
    %v779 = vcvt.s32.f32 %v777
    %v780 = vsel %vm527, %v778, 0.0
    %781 = vadd.xlane.f32.xlu0 %v780
    %v782 = vpop.xlane.xlu0 %781
    %v783 = vsel %vm527, %v779, 0.0
    %784 = vadd.xlane.f32.xlu0 %v783
    %v785 = vpop.xlane.xlu0 %784
    %v786 = vmax.f32 %v782, 1.0
    %v787 = vmax.f32 %v785, 1.0
    %v788 = vrcp.pop %v786
    %v789 = vmul.f32 %v786, %v788
    %v790 = vsub.f32 1.0, %v789
    %v791 = vmul.f32 %v788, %v790
    %v792 = vadd.f32 %v788, %v791
    %vm793 = vweird.f32 %v786
    %vm794 = vweird.f32 %v788
    %vm795 = vmor %vm793, %vm794
    %v796 = vsel %vm795, %v788, %v792
    %v797 = vand.u32 2147483647, %v786
    %vm798 = vcmp.eq.f32.partialorder %v797, 8.507059e+37
    %v799 = vand.u32 %v786, 2147483648
    %v800 = vor.u32 1.1754944e-38, %v799
    %v801 = vsel %vm798, %v800, %v796
    %v802 = vmul.f32 %v778, %v801
    %v803 = vrcp.pop %v787
    %v804 = vmul.f32 %v787, %v803
    %v805 = vsub.f32 1.0, %v804
    %v806 = vmul.f32 %v803, %v805
    %v807 = vadd.f32 %v803, %v806
    %vm808 = vweird.f32 %v787
    %vm809 = vweird.f32 %v803
    %vm810 = vmor %vm808, %vm809
    %v811 = vsel %vm810, %v803, %v807
    %v812 = vand.u32 2147483647, %v787
    %vm813 = vcmp.eq.f32.partialorder %v812, 8.507059e+37
    %v814 = vand.u32 %v787, 2147483648
    %v815 = vor.u32 1.1754944e-38, %v814
    %v816 = vsel %vm813, %v815, %v811
    %v817 = vmul.f32 %v779, %v816
    %v818 = vpack.c.bf16 %v817, %v802
    %v819 = vpack.c.bf16 %v767, %v766
    %v820 = vpack.c.bf16 %v768, %v768
    %v822 = vsel %vm527, %v818, 0
    %v825 = vsel %vm553, %v820, 0
    %827 = vmatpush.bf16.msra.mxu0 0
    %828 = vmatpush.bf16.msra.mxu0 0
    %829 = vmatpush.bf16.msra.mxu0 0
    %830 = vmatpush.bf16.msra.mxu0 0
    %831 = vmatpush.bf16.msra.mxu0 0
    %832 = vmatpush.bf16.msra.mxu0 0
    %833 = vmatpush.bf16.msra.mxu0 %v825
    %834 = vmatpush.bf16.msra.mxu0 %v819
    %835 = vmatmul.bf16.gmra.mxu0 %v822
    %v836 = vpop.f32.mrf.mxu0
    %v837 = vadd.f32 0.0, %v836
    %v838 = vpop.f32.mrf.mxu0
    %v839 = vadd.f32 0.0, %v838
    %840 = vdwg.mxu0
    %841 = vst [vmem:[%s18] sm:$0xff] %v837
    %842 = vst [vmem:[%s18 + $0x8] sm:$0xff] %v839
    // Predicated region
    $region78: #{hgnn_forward.3} parent=1 // pred_check
      _
    $region79: #{hgnn_forward.3} parent=1 // pred_check_branch
      %844 = sbr.rel (0) target = $region81
    $region80: #{hgnn_forward.3} parent=1 // pred_region
      _
    $region81: #{hgnn_forward.3} parent=1 // pred_fallthru
      _
    // Predicated region
    $region82: #{hgnn_forward.3} parent=1 // pred_check
      _
    $region83: #{hgnn_forward.3} parent=1 // pred_check_branch
      %846 = sbr.rel (0) target = $region85
    $region84: #{hgnn_forward.3} parent=1 // pred_region
      _
    $region85: #{hgnn_forward.3} parent=1 // pred_fallthru
      _
    // Predicated region
    $region86: #{hgnn_forward.3} parent=1 // pred_check
      _
    $region87: #{hgnn_forward.3} parent=1 // pred_check_branch
      %848 = sbr.rel (0) target = $region89
    $region88: #{hgnn_forward.3} parent=1 // pred_region
      _
    $region89: #{hgnn_forward.3} parent=1 // pred_fallthru
      _
    // Predicated region
    $region90: #{hgnn_forward.3} parent=1 // pred_check
      _
    $region91: #{hgnn_forward.3} parent=1 // pred_check_branch
      %850 = sbr.rel (0) target = $region93
    $region92: #{hgnn_forward.3} parent=1 // pred_region
      _
    $region93: #{hgnn_forward.3} parent=1 // pred_fallthru
      _
    %851 = vsyncpa [#allocation3], 1

</llo_original>
